<compile_context>
chip_gen: v7x
topology: tpu7x:2x2x1
jax: 0.10.0
libtpu: 0.0.40
codegen_flags: <defaults>
</compile_context>

<pallas_src>
import functools
import math

import jax
import jax.numpy as jnp
import numpy as np
from jax.experimental import pallas as pl
from jax.experimental.pallas import tpu as pltpu

GROUP = 4    # |P4|
AGENTS = 4


# --------------------------------------------------------------------------
# Fused kernel: conv1 + ReLU + conv2 + ReLU + per-image global max-pool.
# One program handles nb images; activations live in "2D NHWC" layout:
# row r holds [w_col * C + c] along the lane axis, so VALID convs become
# dense matmuls against Toeplitz-expanded weights built in the wrapper.
# --------------------------------------------------------------------------
def _fused_encoder_kernel(x_ref, w1_ref, w2_ref, o_ref, h1s_ref, h2s_ref,
                          *, nb, ho1, ho2, wo2, c2):
    # x_ref : (1, nb*ho1, KH1*W*Cin)   bf16   im2col'd conv1 lhs (KH folded in K)
    # w1_ref: (KH1*W*Cin, Wo1*C1)      bf16   folded Toeplitz conv1 weights
    # w2_ref: (KH2, Wo1*C1, Wo2*C2)    bf16   Toeplitz conv2 weights (no pad)
    # o_ref : (1, nb, C2)              f32    pooled features
    # h1s   : (nb*ho1 + KH2-1, Wo1*C1) bf16   VMEM stage of conv1 activation
    # h2s   : (nb*ho1, Wo2*C2)         f32    VMEM stage of conv2 activation
    kh2 = w2_ref.shape[0]
    rows = nb * ho1                                   # conv1 output rows here

    # ---- conv1 + ReLU: ONE fat matmul, M = rows, K = KH1*W*Cin, f32 acc.
    h1 = jnp.dot(x_ref[0], w1_ref[...],
                 preferred_element_type=jnp.float32)  # (rows, Wo1*C1)
    h1 = jnp.maximum(h1, 0.0).astype(jnp.bfloat16)
    h1s_ref[0:rows, :] = h1
    pad_rows = h1s_ref.shape[0] - rows                # zero the overhang rows
    if pad_rows > 0:
        h1s_ref[rows:, :] = jnp.zeros((pad_rows, h1s_ref.shape[1]),
                                      dtype=jnp.bfloat16)

    # ---- conv2 + ReLU: KH2 fat matmuls over row-shifted bands (M = rows).
    # Rows that straddle an image boundary produce garbage but are excluded
    # from the per-image pooling below.
    acc = jnp.dot(h1s_ref[0:rows, :], w2_ref[0],
                  preferred_element_type=jnp.float32)  # (rows, Wo2*C2)
    for dy in range(1, kh2):
        acc = acc + jnp.dot(h1s_ref[dy:dy + rows, :], w2_ref[dy],
                            preferred_element_type=jnp.float32)
    h2s_ref[...] = jnp.maximum(acc, 0.0)

    # ---- per-image global max-pool (valid rows: r = b*ho1 + i, i < ho2).
    for b in range(nb):
        band = h2s_ref[b * ho1: b * ho1 + ho2, :]      # (ho2, Wo2*C2)
        rowmax = jnp.max(band, axis=0, keepdims=True)  # (1, Wo2*C2)
        pooled = rowmax[:, 0:c2]
        for j in range(1, wo2):
            pooled = jnp.maximum(pooled, rowmax[:, j * c2:(j + 1) * c2])
        o_ref[0, pl.ds(b, 1), :] = pooled.astype(o_ref.dtype)   # (1, C2)


def _fused_encoder_call(x_fold, w1_fold, w2_big, *, nb, ho1, ho2, wo2, c2):
    g, rows, k1 = x_fold.shape
    k1f, n1 = w1_fold.shape
    kh2, k2, n2 = w2_big.shape
    assert k1f == k1 and k2 == n1 and n2 == wo2 * c2 and rows == nb * ho1
    r_pad = rows + kh2 - 1

    kernel = functools.partial(_fused_encoder_kernel,
                               nb=nb, ho1=ho1, ho2=ho2, wo2=wo2, c2=c2)

    flops = 2 * g * rows * (k1 * n1 + kh2 * k2 * n2)
    bytes_accessed = (x_fold.size * 2 + w1_fold.size * 2 + w2_big.size * 2
                      + g * nb * c2 * 4)

    return pl.pallas_call(
        kernel,
        out_shape=jax.ShapeDtypeStruct((g, nb, c2), jnp.float32),
        grid=(g,),
        in_specs=[
            pl.BlockSpec((1, rows, k1), lambda b: (b, 0, 0)),
            pl.BlockSpec((k1f, n1), lambda b: (0, 0)),        # resident weights
            pl.BlockSpec((kh2, k2, n2), lambda b: (0, 0, 0)),  # resident weights
        ],
        out_specs=pl.BlockSpec((1, nb, c2), lambda b: (b, 0, 0)),
        scratch_shapes=[
            pltpu.VMEM((r_pad, n1), jnp.bfloat16),   # staged conv1 activation
            pltpu.VMEM((rows, n2), jnp.float32),     # staged conv2 activation
        ],
        compiler_params=pltpu.CompilerParams(
            dimension_semantics=("parallel",)),      # v7x: 2 TensorCores
        cost_estimate=pl.CostEstimate(flops=flops, transcendentals=0,
                                      bytes_accessed=bytes_accessed),
    )(x_fold, w1_fold, w2_big)


# --------------------------------------------------------------------------
# Weight preprocessing, pure jnp (jit-safe, runs on device, params-only):
# expand an OIHW filter into KH banded block-Toeplitz matmul operands so a
# VALID stride-1 conv becomes KH dense matmuls over row bands:
#   big[dy, (j+dx)*Cin + c, j*Cout + n] = w[n, c, dy, dx]
# The selection mask depends only on static shapes (numpy), the data path is
# a single jnp.einsum.
# --------------------------------------------------------------------------
def _toeplitz_expand(w_oihw, out_w, dtype=jnp.bfloat16):
    cout, cin, kh, kw = w_oihw.shape
    in_w = out_w + kw - 1
    j = np.arange(out_w)[:, None, None]
    dx = np.arange(kw)[None, :, None]
    p = np.arange(in_w)[None, None, :]
    sel = jnp.asarray((p == j + dx).astype(np.float32))        # (out_w, kw, in_w)
    big = jnp.einsum('jdp,ncyd->ypcjn', sel, w_oihw.astype(jnp.float32))
    big = big.reshape(kh, in_w * cin, out_w * cout)
    return big.astype(dtype)


def prepare_encoder_operands(w1_oihw, w2_oihw, width):
    """Build the two matmul operands (call once per weight update; jit-safe)."""
    kw1 = w1_oihw.shape[3]
    kw2 = w2_oihw.shape[3]
    wo1 = width - kw1 + 1
    wo2 = wo1 - kw2 + 1
    w1_big = _toeplitz_expand(w1_oihw, wo1)            # (kh1, W*Cin, Wo1*C1)
    kh1, wcin, n1 = w1_big.shape
    w1_fold = w1_big.reshape(kh1 * wcin, n1)           # KH folded into K
    w2_big = _toeplitz_expand(w2_oihw, wo2)            # (kh2, Wo1*C1, Wo2*C2)
    return w1_fold, w2_big


# --------------------------------------------------------------------------
# Deterministic P4-equivariant parameters (mirrors BasisConv2d filter shapes).
# Channel ordering: index = channel * 4 + group_element (symmetrizer c2g).
# BasisConv2d is bias-free; no bias terms here.
# --------------------------------------------------------------------------
def make_p4_params(key, cin, channels=(16, 32), filters=(8, 5)):
    g = GROUP
    c1 = int(channels[0] / math.sqrt(g))     # 8
    c2 = int(channels[1] / math.sqrt(g))     # 16
    f1, f2 = filters
    k1, k2 = jax.random.split(key)

    # Lifting layer Z2 -> P4: rotate a base filter through the 4 rotations.
    fan_in1 = cin * f1 * f1
    v1 = jax.random.normal(k1, (c1, cin, f1, f1), jnp.float32)
    v1 = v1 * np.sqrt(2.0 / fan_in1)                      # 'he' gain
    w1 = jnp.stack([jnp.rot90(v1, k=r, axes=(2, 3)) for r in range(g)], axis=1)
    w1 = w1.reshape(c1 * g, cin, f1, f1)                  # OIHW, (32, cin, 8, 8)

    # P4 -> P4 layer: spatial rotation + cyclic shift of input-group axis.
    fan_in2 = c1 * g * f2 * f2
    v2 = jax.random.normal(k2, (c2, c1, g, f2, f2), jnp.float32)
    v2 = v2 * np.sqrt(2.0 / fan_in2)
    blocks = []
    for r in range(g):
        rolled = jnp.roll(v2, shift=r, axis=2)
        blocks.append(jnp.rot90(rolled, k=r, axes=(3, 4)))
    w2 = jnp.stack(blocks, axis=1)                        # (c2, g, c1, g, f2, f2)
    w2 = w2.reshape(c2 * g, c1 * g, f2, f2)               # OIHW, (64, 32, 5, 5)
    # TODO(synk): the original builds filters each forward from a learned basis
    # / coefficient product; here fixed equivariant OIHW filters stand in and
    # are turned into Toeplitz matmul operands by prepare_encoder_operands.
    return w1, w2


# --------------------------------------------------------------------------
# Full forward pass (jax.jit-able: wrapper = layout glue + one fused kernel).
# --------------------------------------------------------------------------
def basis_traffic_encoder_forward(states, w1_oihw, w2_oihw):
    """states: (bs, agents*ch, H, W) float32, PyTorch NCHW convention."""
    bs, ag_ch, h, w = states.shape
    ch = ag_ch // AGENTS
    n = bs * AGENTS

    c1_out, _, kh1, kw1 = w1_oihw.shape
    c2_out, _, kh2, kw2 = w2_oihw.shape
    ho1, wo1 = h - kh1 + 1, w - kw1 + 1
    ho2, wo2 = ho1 - kh2 + 1, wo1 - kw2 + 1

    # Weight operands (pure jnp; hoist/cache outside if weights are static).
    w1_fold, w2_big = prepare_encoder_operands(w1_oihw, w2_oihw, w)

    # Layout glue: NCHW -> "2D NHWC" (row r holds [w*ch + c]) + bf16 cast,
    # then H-direction im2col so conv1's KH taps sit in the K dimension.
    x = states.reshape(n, ch, h, w)
    x2d = jnp.transpose(x, (0, 2, 3, 1)).reshape(n, h, w * ch).astype(jnp.bfloat16)
    x_fold = jnp.concatenate([x2d[:, dy:dy + ho1, :] for dy in range(kh1)],
                             axis=-1)                     # (n, ho1, kh1*W*ch)

    g = 2 if n % 2 == 0 else 1                            # megacore on v7x
    nb = n // g
    x_fold = x_fold.reshape(g, nb * ho1, kh1 * w * ch)

    pooled = _fused_encoder_call(x_fold, w1_fold, w2_big,
                                 nb=nb, ho1=ho1, ho2=ho2, wo2=wo2, c2=c2_out)
    pooled = pooled.reshape(n, c2_out)

    # c2g(., 4) + squeeze + final reshape (glue).
    return pooled.reshape(bs, AGENTS, c2_out // GROUP, GROUP)


def _reference_forward(states, w1, w2):
    """Pure-JAX reference (XLA convs, f32) for the correctness check."""
    bs, ag_ch, h, w = states.shape
    ch = ag_ch // AGENTS
    x = states.reshape(bs * AGENTS, ch, h, w)
    dn = ("NCHW", "OIHW", "NCHW")
    y = jax.nn.relu(jax.lax.conv_general_dilated(
        x, w1, (1, 1), "VALID", dimension_numbers=dn))
    y = jax.nn.relu(jax.lax.conv_general_dilated(
        y, w2, (1, 1), "VALID", dimension_numbers=dn))
    pool = jnp.max(y, axis=(2, 3))                        # GlobalMaxPool + squeeze
    pool = pool.reshape(bs * AGENTS, -1, GROUP)           # c2g
    return pool.reshape(bs, AGENTS, -1, GROUP)


if __name__ == "__main__":
    key = jax.random.PRNGKey(0)
    k_x, k_w = jax.random.split(key)

    bs, ch_per_agent, hw = 2, 3, 16
    states = jax.random.normal(
        k_x, (bs, AGENTS * ch_per_agent, hw, hw), jnp.float32)

    w1, w2 = make_p4_params(k_w, ch_per_agent)

    fwd = jax.jit(basis_traffic_encoder_forward)          # whole forward is jit-able
    out = jax.block_until_ready(fwd(states, w1, w2))
    assert out.shape == (bs, AGENTS, 16, GROUP), out.shape

    ref = _reference_forward(states, w1, w2)
    # bf16 MXU operands with f32 accumulation vs. an f32 reference.
    np.testing.assert_allclose(np.asarray(out), np.asarray(ref),
                               rtol=2e-2, atol=2e-2)
    print("KERNEL_OK")
</pallas_src>

<mosaic_0001>
module attributes {stable_mosaic.version = 11 : i64} {
  func.func @_fused_encoder_kernel(%arg0: i32, %arg1: memref<1x36x384xbf16, #tpu.memory_space<vmem>>, %arg2: memref<384x288xbf16, #tpu.memory_space<vmem>>, %arg3: memref<5x288x320xbf16, #tpu.memory_space<vmem>>, %arg4: memref<1x4x64xf32, #tpu.memory_space<vmem>>, %arg5: memref<40x288xbf16, #tpu.memory_space<vmem>>, %arg6: memref<36x320xf32, #tpu.memory_space<vmem>>) attributes {dimension_semantics = [#tpu.dimension_semantics<parallel>], iteration_bounds = array<i64: 2>, scalar_prefetch = 0 : i64, scratch_operands = 2 : i64, tpu.core_type = #tpu.core_type<tc>, window_params = [{transform_indices = @transform_0, window_bounds = array<i64: 1, 36, 384>}, {pipeline_mode = #tpu.pipeline_mode<synchronous>, transform_indices = @transform_1, window_bounds = array<i64: 384, 288>}, {pipeline_mode = #tpu.pipeline_mode<synchronous>, transform_indices = @transform_2, window_bounds = array<i64: 5, 288, 320>}, {transform_indices = @transform_3, window_bounds = array<i64: 1, 4, 64>}]} {
    %c0 = arith.constant 0 : index
    %c0_0 = arith.constant 0 : index
    %c0_1 = arith.constant 0 : index
    %0 = vector.load %arg1[%c0, %c0_0, %c0_1] : memref<1x36x384xbf16, #tpu.memory_space<vmem>>, vector<1x36x384xbf16>
    %1 = vector.shape_cast %0 : vector<1x36x384xbf16> to vector<36x384xbf16>
    %c0_2 = arith.constant 0 : index
    %c0_3 = arith.constant 0 : index
    %2 = vector.load %arg2[%c0_2, %c0_3] : memref<384x288xbf16, #tpu.memory_space<vmem>>, vector<384x288xbf16>
    %cst = arith.constant dense<0.000000e+00> : vector<36x288xf32>
    %3 = tpu.matmul %1, %2, %cst {dimension_numbers = #tpu.dot_dimension_numbers<[1], [0], [0], [1], [0, 0, 1, 1], [], []>} : vector<36x384xbf16>, vector<384x288xbf16>, vector<36x288xf32> -> vector<36x288xf32>
    %cst_4 = arith.constant 0.000000e+00 : f32
    %4 = vector.broadcast %cst_4 : f32 to vector<36x288xf32>
    %5 = arith.maximumf %3, %4 : vector<36x288xf32>
    %6 = arith.truncf %5 : vector<36x288xf32> to vector<36x288xbf16>
    %c0_5 = arith.constant 0 : index
    %c0_6 = arith.constant 0 : index
    %7 = vector.load %arg5[%c0_5, %c0_6] : memref<40x288xbf16, #tpu.memory_space<vmem>>, vector<36x288xbf16>
    tpu.vector_store %arg5[%c0_5, %c0_6], %6 {strides = array<i32>} : memref<40x288xbf16, #tpu.memory_space<vmem>>, vector<36x288xbf16>,
    %cst_7 = arith.constant 0.000000e+00 : bf16
    %8 = vector.broadcast %cst_7 : bf16 to vector<4x288xbf16>
    %c36 = arith.constant 36 : index
    %c0_8 = arith.constant 0 : index
    %9 = vector.load %arg5[%c36, %c0_8] : memref<40x288xbf16, #tpu.memory_space<vmem>>, vector<4x288xbf16>
    tpu.vector_store %arg5[%c36, %c0_8], %8 {strides = array<i32>} : memref<40x288xbf16, #tpu.memory_space<vmem>>, vector<4x288xbf16>,
    %c0_9 = arith.constant 0 : index
    %c0_10 = arith.constant 0 : index
    %10 = vector.load %arg5[%c0_9, %c0_10] : memref<40x288xbf16, #tpu.memory_space<vmem>>, vector<36x288xbf16>
    %c0_11 = arith.constant 0 : index
    %c0_12 = arith.constant 0 : index
    %c0_13 = arith.constant 0 : index
    %11 = vector.load %arg3[%c0_11, %c0_12, %c0_13] : memref<5x288x320xbf16, #tpu.memory_space<vmem>>, vector<1x288x320xbf16>
    %12 = vector.shape_cast %11 : vector<1x288x320xbf16> to vector<288x320xbf16>
    %cst_14 = arith.constant dense<0.000000e+00> : vector<36x320xf32>
    %13 = tpu.matmul %10, %12, %cst_14 {dimension_numbers = #tpu.dot_dimension_numbers<[1], [0], [0], [1], [0, 0, 1, 1], [], []>} : vector<36x288xbf16>, vector<288x320xbf16>, vector<36x320xf32> -> vector<36x320xf32>
    %c1 = arith.constant 1 : index
    %c0_15 = arith.constant 0 : index
    %14 = vector.load %arg5[%c1, %c0_15] : memref<40x288xbf16, #tpu.memory_space<vmem>>, vector<36x288xbf16>
    %c1_16 = arith.constant 1 : index
    %c0_17 = arith.constant 0 : index
    %c0_18 = arith.constant 0 : index
    %15 = vector.load %arg3[%c1_16, %c0_17, %c0_18] : memref<5x288x320xbf16, #tpu.memory_space<vmem>>, vector<1x288x320xbf16>
    %16 = vector.shape_cast %15 : vector<1x288x320xbf16> to vector<288x320xbf16>
    %cst_19 = arith.constant dense<0.000000e+00> : vector<36x320xf32>
    %17 = tpu.matmul %14, %16, %cst_19 {dimension_numbers = #tpu.dot_dimension_numbers<[1], [0], [0], [1], [0, 0, 1, 1], [], []>} : vector<36x288xbf16>, vector<288x320xbf16>, vector<36x320xf32> -> vector<36x320xf32>
    %18 = arith.addf %13, %17 : vector<36x320xf32>
    %c2 = arith.constant 2 : index
    %c0_20 = arith.constant 0 : index
    %19 = vector.load %arg5[%c2, %c0_20] : memref<40x288xbf16, #tpu.memory_space<vmem>>, vector<36x288xbf16>
    %c2_21 = arith.constant 2 : index
    %c0_22 = arith.constant 0 : index
    %c0_23 = arith.constant 0 : index
    %20 = vector.load %arg3[%c2_21, %c0_22, %c0_23] : memref<5x288x320xbf16, #tpu.memory_space<vmem>>, vector<1x288x320xbf16>
    %21 = vector.shape_cast %20 : vector<1x288x320xbf16> to vector<288x320xbf16>
    %cst_24 = arith.constant dense<0.000000e+00> : vector<36x320xf32>
    %22 = tpu.matmul %19, %21, %cst_24 {dimension_numbers = #tpu.dot_dimension_numbers<[1], [0], [0], [1], [0, 0, 1, 1], [], []>} : vector<36x288xbf16>, vector<288x320xbf16>, vector<36x320xf32> -> vector<36x320xf32>
    %23 = arith.addf %18, %22 : vector<36x320xf32>
    %c3 = arith.constant 3 : index
    %c0_25 = arith.constant 0 : index
    %24 = vector.load %arg5[%c3, %c0_25] : memref<40x288xbf16, #tpu.memory_space<vmem>>, vector<36x288xbf16>
    %c3_26 = arith.constant 3 : index
    %c0_27 = arith.constant 0 : index
    %c0_28 = arith.constant 0 : index
    %25 = vector.load %arg3[%c3_26, %c0_27, %c0_28] : memref<5x288x320xbf16, #tpu.memory_space<vmem>>, vector<1x288x320xbf16>
    %26 = vector.shape_cast %25 : vector<1x288x320xbf16> to vector<288x320xbf16>
    %cst_29 = arith.constant dense<0.000000e+00> : vector<36x320xf32>
    %27 = tpu.matmul %24, %26, %cst_29 {dimension_numbers = #tpu.dot_dimension_numbers<[1], [0], [0], [1], [0, 0, 1, 1], [], []>} : vector<36x288xbf16>, vector<288x320xbf16>, vector<36x320xf32> -> vector<36x320xf32>
    %28 = arith.addf %23, %27 : vector<36x320xf32>
    %c4 = arith.constant 4 : index
    %c0_30 = arith.constant 0 : index
    %29 = vector.load %arg5[%c4, %c0_30] : memref<40x288xbf16, #tpu.memory_space<vmem>>, vector<36x288xbf16>
    %c4_31 = arith.constant 4 : index
    %c0_32 = arith.constant 0 : index
    %c0_33 = arith.constant 0 : index
    %30 = vector.load %arg3[%c4_31, %c0_32, %c0_33] : memref<5x288x320xbf16, #tpu.memory_space<vmem>>, vector<1x288x320xbf16>
    %31 = vector.shape_cast %30 : vector<1x288x320xbf16> to vector<288x320xbf16>
    %cst_34 = arith.constant dense<0.000000e+00> : vector<36x320xf32>
    %32 = tpu.matmul %29, %31, %cst_34 {dimension_numbers = #tpu.dot_dimension_numbers<[1], [0], [0], [1], [0, 0, 1, 1], [], []>} : vector<36x288xbf16>, vector<288x320xbf16>, vector<36x320xf32> -> vector<36x320xf32>
    %33 = arith.addf %28, %32 : vector<36x320xf32>
    %cst_35 = arith.constant 0.000000e+00 : f32
    %34 = vector.broadcast %cst_35 : f32 to vector<36x320xf32>
    %35 = arith.maximumf %33, %34 : vector<36x320xf32>
    %c0_36 = arith.constant 0 : index
    %c0_37 = arith.constant 0 : index
    %36 = vector.load %arg6[%c0_36, %c0_37] : memref<36x320xf32, #tpu.memory_space<vmem>>, vector<36x320xf32>
    tpu.vector_store %arg6[%c0_36, %c0_37], %35 {strides = array<i32>} : memref<36x320xf32, #tpu.memory_space<vmem>>, vector<36x320xf32>,
    %c0_38 = arith.constant 0 : index
    %c0_39 = arith.constant 0 : index
    %37 = vector.load %arg6[%c0_38, %c0_39] : memref<36x320xf32, #tpu.memory_space<vmem>>, vector<5x320xf32>
    %cst_40 = arith.constant dense<0xFF800000> : vector<320xf32>
    %38 = vector.multi_reduction <maximumf>, %37, %cst_40 [0] : vector<5x320xf32> to vector<320xf32>
    %39 = vector.shape_cast %38 : vector<320xf32> to vector<1x320xf32>
    %40 = vector.extract_strided_slice %39 {offsets = [0, 0], sizes = [1, 64], strides = [1, 1]} : vector<1x320xf32> to vector<1x64xf32>
    %41 = vector.extract_strided_slice %39 {offsets = [0, 64], sizes = [1, 64], strides = [1, 1]} : vector<1x320xf32> to vector<1x64xf32>
    %42 = arith.maximumf %40, %41 : vector<1x64xf32>
    %43 = vector.extract_strided_slice %39 {offsets = [0, 128], sizes = [1, 64], strides = [1, 1]} : vector<1x320xf32> to vector<1x64xf32>
    %44 = arith.maximumf %42, %43 : vector<1x64xf32>
    %45 = vector.extract_strided_slice %39 {offsets = [0, 192], sizes = [1, 64], strides = [1, 1]} : vector<1x320xf32> to vector<1x64xf32>
    %46 = arith.maximumf %44, %45 : vector<1x64xf32>
    %47 = vector.extract_strided_slice %39 {offsets = [0, 256], sizes = [1, 64], strides = [1, 1]} : vector<1x320xf32> to vector<1x64xf32>
    %48 = arith.maximumf %46, %47 : vector<1x64xf32>
    %c0_41 = arith.constant 0 : index
    %c0_42 = arith.constant 0 : index
    %c0_43 = arith.constant 0 : index
    %49 = vector.load %arg4[%c0_41, %c0_42, %c0_43] : memref<1x4x64xf32, #tpu.memory_space<vmem>>, vector<1x1x64xf32>
    %50 = vector.shape_cast %49 : vector<1x1x64xf32> to vector<1x64xf32>
    %51 = vector.shape_cast %48 : vector<1x64xf32> to vector<1x1x64xf32>
    tpu.vector_store %arg4[%c0_41, %c0_42, %c0_43], %51 {strides = array<i32>} : memref<1x4x64xf32, #tpu.memory_space<vmem>>, vector<1x1x64xf32>,
    %c9 = arith.constant 9 : index
    %c0_44 = arith.constant 0 : index
    %52 = vector.load %arg6[%c9, %c0_44] : memref<36x320xf32, #tpu.memory_space<vmem>>, vector<5x320xf32>
    %cst_45 = arith.constant dense<0xFF800000> : vector<320xf32>
    %53 = vector.multi_reduction <maximumf>, %52, %cst_45 [0] : vector<5x320xf32> to vector<320xf32>
    %54 = vector.shape_cast %53 : vector<320xf32> to vector<1x320xf32>
    %55 = vector.extract_strided_slice %54 {offsets = [0, 0], sizes = [1, 64], strides = [1, 1]} : vector<1x320xf32> to vector<1x64xf32>
    %56 = vector.extract_strided_slice %54 {offsets = [0, 64], sizes = [1, 64], strides = [1, 1]} : vector<1x320xf32> to vector<1x64xf32>
    %57 = arith.maximumf %55, %56 : vector<1x64xf32>
    %58 = vector.extract_strided_slice %54 {offsets = [0, 128], sizes = [1, 64], strides = [1, 1]} : vector<1x320xf32> to vector<1x64xf32>
    %59 = arith.maximumf %57, %58 : vector<1x64xf32>
    %60 = vector.extract_strided_slice %54 {offsets = [0, 192], sizes = [1, 64], strides = [1, 1]} : vector<1x320xf32> to vector<1x64xf32>
    %61 = arith.maximumf %59, %60 : vector<1x64xf32>
    %62 = vector.extract_strided_slice %54 {offsets = [0, 256], sizes = [1, 64], strides = [1, 1]} : vector<1x320xf32> to vector<1x64xf32>
    %63 = arith.maximumf %61, %62 : vector<1x64xf32>
    %c0_46 = arith.constant 0 : index
    %c1_47 = arith.constant 1 : index
    %c0_48 = arith.constant 0 : index
    %64 = vector.load %arg4[%c0_46, %c1_47, %c0_48] : memref<1x4x64xf32, #tpu.memory_space<vmem>>, vector<1x1x64xf32>
    %65 = vector.shape_cast %64 : vector<1x1x64xf32> to vector<1x64xf32>
    %66 = vector.shape_cast %63 : vector<1x64xf32> to vector<1x1x64xf32>
    tpu.vector_store %arg4[%c0_46, %c1_47, %c0_48], %66 {strides = array<i32>} : memref<1x4x64xf32, #tpu.memory_space<vmem>>, vector<1x1x64xf32>,
    %c18 = arith.constant 18 : index
    %c0_49 = arith.constant 0 : index
    %67 = vector.load %arg6[%c18, %c0_49] : memref<36x320xf32, #tpu.memory_space<vmem>>, vector<5x320xf32>
    %cst_50 = arith.constant dense<0xFF800000> : vector<320xf32>
    %68 = vector.multi_reduction <maximumf>, %67, %cst_50 [0] : vector<5x320xf32> to vector<320xf32>
    %69 = vector.shape_cast %68 : vector<320xf32> to vector<1x320xf32>
    %70 = vector.extract_strided_slice %69 {offsets = [0, 0], sizes = [1, 64], strides = [1, 1]} : vector<1x320xf32> to vector<1x64xf32>
    %71 = vector.extract_strided_slice %69 {offsets = [0, 64], sizes = [1, 64], strides = [1, 1]} : vector<1x320xf32> to vector<1x64xf32>
    %72 = arith.maximumf %70, %71 : vector<1x64xf32>
    %73 = vector.extract_strided_slice %69 {offsets = [0, 128], sizes = [1, 64], strides = [1, 1]} : vector<1x320xf32> to vector<1x64xf32>
    %74 = arith.maximumf %72, %73 : vector<1x64xf32>
    %75 = vector.extract_strided_slice %69 {offsets = [0, 192], sizes = [1, 64], strides = [1, 1]} : vector<1x320xf32> to vector<1x64xf32>
    %76 = arith.maximumf %74, %75 : vector<1x64xf32>
    %77 = vector.extract_strided_slice %69 {offsets = [0, 256], sizes = [1, 64], strides = [1, 1]} : vector<1x320xf32> to vector<1x64xf32>
    %78 = arith.maximumf %76, %77 : vector<1x64xf32>
    %c0_51 = arith.constant 0 : index
    %c2_52 = arith.constant 2 : index
    %c0_53 = arith.constant 0 : index
    %79 = vector.load %arg4[%c0_51, %c2_52, %c0_53] : memref<1x4x64xf32, #tpu.memory_space<vmem>>, vector<1x1x64xf32>
    %80 = vector.shape_cast %79 : vector<1x1x64xf32> to vector<1x64xf32>
    %81 = vector.shape_cast %78 : vector<1x64xf32> to vector<1x1x64xf32>
    tpu.vector_store %arg4[%c0_51, %c2_52, %c0_53], %81 {strides = array<i32>} : memref<1x4x64xf32, #tpu.memory_space<vmem>>, vector<1x1x64xf32>,
    %c27 = arith.constant 27 : index
    %c0_54 = arith.constant 0 : index
    %82 = vector.load %arg6[%c27, %c0_54] : memref<36x320xf32, #tpu.memory_space<vmem>>, vector<5x320xf32>
    %cst_55 = arith.constant dense<0xFF800000> : vector<320xf32>
    %83 = vector.multi_reduction <maximumf>, %82, %cst_55 [0] : vector<5x320xf32> to vector<320xf32>
    %84 = vector.shape_cast %83 : vector<320xf32> to vector<1x320xf32>
    %85 = vector.extract_strided_slice %84 {offsets = [0, 0], sizes = [1, 64], strides = [1, 1]} : vector<1x320xf32> to vector<1x64xf32>
    %86 = vector.extract_strided_slice %84 {offsets = [0, 64], sizes = [1, 64], strides = [1, 1]} : vector<1x320xf32> to vector<1x64xf32>
    %87 = arith.maximumf %85, %86 : vector<1x64xf32>
    %88 = vector.extract_strided_slice %84 {offsets = [0, 128], sizes = [1, 64], strides = [1, 1]} : vector<1x320xf32> to vector<1x64xf32>
    %89 = arith.maximumf %87, %88 : vector<1x64xf32>
    %90 = vector.extract_strided_slice %84 {offsets = [0, 192], sizes = [1, 64], strides = [1, 1]} : vector<1x320xf32> to vector<1x64xf32>
    %91 = arith.maximumf %89, %90 : vector<1x64xf32>
    %92 = vector.extract_strided_slice %84 {offsets = [0, 256], sizes = [1, 64], strides = [1, 1]} : vector<1x320xf32> to vector<1x64xf32>
    %93 = arith.maximumf %91, %92 : vector<1x64xf32>
    %c0_56 = arith.constant 0 : index
    %c3_57 = arith.constant 3 : index
    %c0_58 = arith.constant 0 : index
    %94 = vector.load %arg4[%c0_56, %c3_57, %c0_58] : memref<1x4x64xf32, #tpu.memory_space<vmem>>, vector<1x1x64xf32>
    %95 = vector.shape_cast %94 : vector<1x1x64xf32> to vector<1x64xf32>
    %96 = vector.shape_cast %93 : vector<1x64xf32> to vector<1x1x64xf32>
    tpu.vector_store %arg4[%c0_56, %c3_57, %c0_58], %96 {strides = array<i32>} : memref<1x4x64xf32, #tpu.memory_space<vmem>>, vector<1x1x64xf32>,
    return
  }
  func.func @transform_0(%arg0: i32) -> (i32, i32, i32) {
    %c0_i32 = arith.constant 0 : i32
    %c0_i32_0 = arith.constant 0 : i32
    %c0_i32_1 = arith.constant 0 : i32
    return %arg0, %c0_i32, %c0_i32_0 : i32, i32, i32
  }
  func.func @transform_1(%arg0: i32) -> (i32, i32) {
    %c0_i32 = arith.constant 0 : i32
    %c0_i32_0 = arith.constant 0 : i32
    %c0_i32_1 = arith.constant 0 : i32
    return %c0_i32, %c0_i32_0 : i32, i32
  }
  func.func @transform_2(%arg0: i32) -> (i32, i32, i32) {
    %c0_i32 = arith.constant 0 : i32
    %c0_i32_0 = arith.constant 0 : i32
    %c0_i32_1 = arith.constant 0 : i32
    %c0_i32_2 = arith.constant 0 : i32
    return %c0_i32, %c0_i32_0, %c0_i32_1 : i32, i32, i32
  }
  func.func @transform_3(%arg0: i32) -> (i32, i32, i32) {
    %c0_i32 = arith.constant 0 : i32
    %c0_i32_0 = arith.constant 0 : i32
    %c0_i32_1 = arith.constant 0 : i32
    return %arg0, %c0_i32, %c0_i32_0 : i32, i32, i32
  }
}

</mosaic_0001>

<llo_original>
// kernel: basis_traffic_encoder_forward.1
$region0: #{basis_traffic_encoder_forward.1}
  #allocation0 [shape = 'u32[]', space=smem, size = 0x4, offset = 0x4, fixed_abs, tag = 'smem constant byte address 0x4 - core index']
  #allocation1 [shape = 'u32[144,128]{1,0:T(1,128)}', space=vmem, size = 0x12000, scoped, tag = 'internal scratch']
  #allocation2 [shape = 'bf16[40,288]{1,0:T(8,128)(2,1)}', space=vmem, size = 0x7800, scoped, tag = 'scratch operand']
  #allocation3 [shape = 'f32[36,320]{1,0:T(8,128)}', space=vmem, size = 0xf000, scoped, tag = 'scratch operand']
  %s0 = inlined_call_operand.vmem [shape: bf16[2,36,384], index: 0, kind: input, shape index: {}]
  %s1 = inlined_call_operand.vmem [shape: bf16[384,288], index: 1, kind: input, shape index: {}]
  %s2 = inlined_call_operand.vmem [shape: bf16[5,288,320], index: 2, kind: input, shape index: {}]
  %s3 = inlined_call_operand.vmem [shape: f32[2,4,64], index: 3, kind: output, shape index: {}]
  %s4 = sld [smem:[#allocation0]]
  $region45: #{basis_traffic_encoder_forward.1} parent=0
    _
  %s6 = ssub.s32 1, %s4
  %s7 = scalar_select 0, %s6, %s4
  loop: start=0, step=1, limit=4
  $region2: #{basis_traffic_encoder_forward.1} parent=0 // loop_pre_header
    _
  $region3: #{basis_traffic_encoder_forward.1} parent=0 // loop_header
    %s9 = sphi 0, %s13
    %p10 = scmp.ge.s32.totalorder %s9, 4
    %s19 = sphi 0, %s21
    %s22 = sphi 0, %s19
    %s23 = sphi 0, %s22
    %s39 = sphi 0, %s23
    %s43 = sphi 0, %s43
    %s45 = sphi 0, %s43
    %s46 = sphi 0, %s45
    %s60 = sphi 0, %s46
    %s64 = sphi 0, %s64
    %s66 = sphi 0, %s64
    %s67 = sphi 0, %s66
    %s81 = sphi 0, %s67
    %s87 = sphi 0, %s89
    %s90 = sphi 0, %s87
    %s91 = sphi 0, %s90
    %s107 = sphi 0, %s91
  $region4: #{basis_traffic_encoder_forward.1} parent=0 // loop_header_branch
    %12 = sbr.rel (%p10) target = $region8
  $region5: #{basis_traffic_encoder_forward.1} parent=0 // loop_body
    %s14 = ssub.s32 %s9, 1
    %s15 = ssub.s32 %s9, 2
    %s16 = sadd.s32 %s9, 1
    %s17 = ssub.s32 %s9, %s16
    %p18 = scmp.eq.s32.totalorder %s17, 0
    %s20 = sadd.s32 %s19, 1
    %s21 = scalar_select %p18, %s19, %s20
    %p24 = pneg %p18
    %p25 = scmp.eq.s32.totalorder %s9, 1
    %p26 = por %p24, %p25
    %p27 = scmp.ne.s32.totalorder %s19, %s22
    %p28 = scmp.eq.s32.totalorder %s9, 0
    %p29 = por %p27, %p28
    %p30 = scmp.ne.s32.totalorder %s19, %s22
    %p31 = scmp.eq.s32.totalorder %s14, 1
    %p32 = por %p30, %p31
    %p33 = scmp.ne.s32.totalorder %s22, %s23
    %p34 = scmp.eq.s32.totalorder %s14, 0
    %p35 = por %p33, %p34
    %p36 = scmp.ne.s32.totalorder %s22, %s23
    %p37 = scmp.eq.s32.totalorder %s15, 1
    %p38 = por %p36, %p37
    %p40 = scmp.ne.s32.totalorder %s23, %s39
    %p41 = scmp.eq.s32.totalorder %s15, 0
    %p42 = por %p40, %p41
    %s44 = sadd.s32 %s43, 1
    %p47 = scmp.eq.s32.totalorder %s9, 1
    %p48 = scmp.ne.s32.totalorder %s43, %s45
    %p49 = scmp.eq.s32.totalorder %s9, 0
    %p50 = por %p48, %p49
    %p51 = scmp.ne.s32.totalorder %s43, %s45
    %p52 = scmp.eq.s32.totalorder %s14, 1
    %p53 = por %p51, %p52
    %p54 = scmp.ne.s32.totalorder %s45, %s46
    %p55 = scmp.eq.s32.totalorder %s14, 0
    %p56 = por %p54, %p55
    %p57 = scmp.ne.s32.totalorder %s45, %s46
    %p58 = scmp.eq.s32.totalorder %s15, 1
    %p59 = por %p57, %p58
    %p61 = scmp.ne.s32.totalorder %s46, %s60
    %p62 = scmp.eq.s32.totalorder %s15, 0
    %p63 = por %p61, %p62
    %s65 = sadd.s32 %s64, 1
    %p68 = scmp.eq.s32.totalorder %s9, 1
    %p69 = scmp.ne.s32.totalorder %s64, %s66
    %p70 = scmp.eq.s32.totalorder %s9, 0
    %p71 = por %p69, %p70
    %p72 = scmp.ne.s32.totalorder %s64, %s66
    %p73 = scmp.eq.s32.totalorder %s14, 1
    %p74 = por %p72, %p73
    %p75 = scmp.ne.s32.totalorder %s66, %s67
    %p76 = scmp.eq.s32.totalorder %s14, 0
    %p77 = por %p75, %p76
    %p78 = scmp.ne.s32.totalorder %s66, %s67
    %p79 = scmp.eq.s32.totalorder %s15, 1
    %p80 = por %p78, %p79
    %p82 = scmp.ne.s32.totalorder %s67, %s81
    %p83 = scmp.eq.s32.totalorder %s15, 0
    %p84 = por %p82, %p83
    %s85 = ssub.s32 %s9, %s16
    %p86 = scmp.eq.s32.totalorder %s85, 0
    %s88 = sadd.s32 %s87, 1
    %s89 = scalar_select %p86, %s87, %s88
    %p92 = pneg %p86
    %p93 = scmp.eq.s32.totalorder %s9, 1
    %p94 = por %p92, %p93
    %p95 = scmp.ne.s32.totalorder %s87, %s90
    %p96 = scmp.eq.s32.totalorder %s9, 0
    %p97 = por %p95, %p96
    %p98 = scmp.ne.s32.totalorder %s87, %s90
    %p99 = scmp.eq.s32.totalorder %s14, 1
    %p100 = por %p98, %p99
    %p101 = scmp.ne.s32.totalorder %s90, %s91
    %p102 = scmp.eq.s32.totalorder %s14, 0
    %p103 = por %p101, %p102
    %p104 = scmp.ne.s32.totalorder %s90, %s91
    %p105 = scmp.eq.s32.totalorder %s15, 1
    %p106 = por %p104, %p105
    %p108 = scmp.ne.s32.totalorder %s91, %s107
    %p109 = scmp.eq.s32.totalorder %s15, 0
    %p110 = por %p108, %p109
    %p111 = scmp.le.s32.totalorder 1, %s9
    %p112 = scmp.lt.s32.totalorder %s9, 3
    %p113 = pnand %p111, %p112
    %p114 = pneg %p113
    // Predicated region
    $region9: #{basis_traffic_encoder_forward.1} parent=5 // pred_check
      _
    $region10: #{basis_traffic_encoder_forward.1} parent=5 // pred_check_branch
      %116 = sbr.rel (%p113) target = $region12
    $region11: #{basis_traffic_encoder_forward.1} parent=5 // pred_region
      %s117 = ssub.s32 %s9, 1
      // Predicated region
      $region13: #{basis_traffic_encoder_forward.1} parent=11 // pred_check
        %p118 = pneg %p56
      $region14: #{basis_traffic_encoder_forward.1} parent=11 // pred_check_branch
        %120 = sbr.rel (%p118) target = $region16
      $region15: #{basis_traffic_encoder_forward.1} parent=11 // pred_region
        _
      $region16: #{basis_traffic_encoder_forward.1} parent=11 // pred_fallthru
        _
      // Predicated region
      $region17: #{basis_traffic_encoder_forward.1} parent=11 // pred_check
        %p121 = pneg %p77
      $region18: #{basis_traffic_encoder_forward.1} parent=11 // pred_check_branch
        %123 = sbr.rel (%p121) target = $region20
      $region19: #{basis_traffic_encoder_forward.1} parent=11 // pred_region
        _
      $region20: #{basis_traffic_encoder_forward.1} parent=11 // pred_fallthru
        _
    $region12: #{basis_traffic_encoder_forward.1} parent=5 // pred_fallthru
      _
    %p124 = scmp.lt.s32.totalorder %s9, 2
    // Predicated region
    $region21: #{basis_traffic_encoder_forward.1} parent=5 // pred_check
      %p125 = pneg %p124
    $region22: #{basis_traffic_encoder_forward.1} parent=5 // pred_check_branch
      %127 = sbr.rel (%p125) target = $region24
    $region23: #{basis_traffic_encoder_forward.1} parent=5 // pred_region
      // Predicated region
      $region25: #{basis_traffic_encoder_forward.1} parent=23 // pred_check
        %p128 = pneg %p29
      $region26: #{basis_traffic_encoder_forward.1} parent=23 // pred_check_branch
        %130 = sbr.rel (%p128) target = $region28
      $region27: #{basis_traffic_encoder_forward.1} parent=23 // pred_region
        %p131 = scmp.lt.s32.totalorder %s9, 1
        %s132 = scalar_select %p131, %s9, 1
        %s133 = smul.addr %s132, 15
        %s134 = smul.addr %s133, 4
        %s135 = scalar_lea.vmem %s0, %s134
      $region28: #{basis_traffic_encoder_forward.1} parent=23 // pred_fallthru
        _
    $region24: #{basis_traffic_encoder_forward.1} parent=5 // pred_fallthru
      _
    %p136 = scmp.le.s32.totalorder 1, %s9
    %p137 = scmp.lt.s32.totalorder %s9, 3
    %p138 = pnand %p136, %p137
    %p139 = pneg %p138
    // Predicated region
    $region29: #{basis_traffic_encoder_forward.1} parent=5 // pred_check
      _
    $region30: #{basis_traffic_encoder_forward.1} parent=5 // pred_check_branch
      %141 = sbr.rel (%p138) target = $region32
    $region31: #{basis_traffic_encoder_forward.1} parent=5 // pred_region
      %s142 = ssub.s32 %s9, 1
      %p143 = scmp.lt.s32.totalorder %s14, 1
      %s144 = scalar_select %p143, %s14, 1
      %s145 = smul.addr %s144, 15
      %s146 = smul.addr %s145, 4
      %s147 = scalar_lea.vmem %s0, %s146
      %p148 = pneg %p35
      %p149 = pneg %p32
      %p150 = pneg %p56
      %p151 = pneg %p53
      %p152 = pneg %p77
      %p153 = pneg %p74
      %p154 = pneg %p103
      %p155 = pneg %p100
      %p156 = scmp.lt.s32.totalorder %s14, 1
      %s157 = scalar_select %p156, %s14, 1
      %s158 = smul.addr %s157, 4
      %s159 = scalar_lea.vmem %s3, %s158
      %p160 = scmp.lt.s32.totalorder %s14, 1
      %s161 = scalar_select %p160, %s14, 1
      %s162 = smul.addr %s161, 15
      %s163 = smul.addr %s162, 4
      %s164 = scalar_lea.vmem %s0, %s163
      %p165 = scmp.lt.s32.totalorder %s14, 1
      %s166 = scalar_select %p165, %s14, 1
      %s167 = smul.addr %s166, 4
      %s168 = scalar_lea.vmem %s3, %s167
      %v170 = vld [vmem:[%s164] sm:$0xff]
      %v171 = vld [vmem:[%s164 + $0x8] sm:$0xf]
      %v172 = vld [vmem:[%s164 + $0xc] sm:$0xff]
      %v173 = vld [vmem:[%s164 + $0x14] sm:$0xf]
      %v174 = vld [vmem:[%s164 + $0x18] sm:$0xff]
      %v175 = vld [vmem:[%s164 + $0x20] sm:$0xf]
      %v176 = vld [vmem:[%s164 + $0x24] sm:$0xff]
      %v177 = vld [vmem:[%s164 + $0x2c] sm:$0xf]
      %v178 = vld [vmem:[%s164 + $0x30] sm:$0x33]
      %v179 = vld [vmem:[%s164 + $0x38] sm:$0x3]
      %v180 = vld [vmem:[%s1] sm:$0xff]
      %v181 = vld [vmem:[%s1 + $0x8] sm:$0xf]
      %v182 = vld [vmem:[%s1 + $0xc] sm:$0xff]
      %v183 = vld [vmem:[%s1 + $0x14] sm:$0xf]
      %v184 = vld [vmem:[%s1 + $0x18] sm:$0xff]
      %v185 = vld [vmem:[%s1 + $0x20] sm:$0xf]
      %v186 = vld [vmem:[%s1 + $0x24] sm:$0xff]
      %v187 = vld [vmem:[%s1 + $0x2c] sm:$0xf]
      %v188 = vld [vmem:[%s1 + $0x30] sm:$0xff]
      %v189 = vld [vmem:[%s1 + $0x38] sm:$0xf]
      %v190 = vld [vmem:[%s1 + $0x3c] sm:$0xff]
      %v191 = vld [vmem:[%s1 + $0x44] sm:$0xf]
      %v192 = vld [vmem:[%s1 + $0x48] sm:$0xff]
      %v193 = vld [vmem:[%s1 + $0x50] sm:$0xf]
      %v194 = vld [vmem:[%s1 + $0x54] sm:$0xff]
      %v195 = vld [vmem:[%s1 + $0x5c] sm:$0xf]
      %v196 = vld [vmem:[%s1 + $0x60] sm:$0xff]
      %v197 = vld [vmem:[%s1 + $0x68] sm:$0xf]
      %v198 = vld [vmem:[%s1 + $0x6c] sm:$0xff]
      %v199 = vld [vmem:[%s1 + $0x74] sm:$0xf]
      %v200 = vld [vmem:[%s1 + $0x78] sm:$0xff]
      %v201 = vld [vmem:[%s1 + $0x80] sm:$0xf]
      %v202 = vld [vmem:[%s1 + $0x84] sm:$0xff]
      %v203 = vld [vmem:[%s1 + $0x8c] sm:$0xf]
      %v204 = vld [vmem:[%s1 + $0x90] sm:$0xff]
      %v205 = vld [vmem:[%s1 + $0x98] sm:$0xf]
      %v206 = vld [vmem:[%s1 + $0x9c] sm:$0xff]
      %v207 = vld [vmem:[%s1 + $0xa4] sm:$0xf]
      %v208 = vld [vmem:[%s1 + $0xa8] sm:$0xff]
      %v209 = vld [vmem:[%s1 + $0xb0] sm:$0xf]
      %v210 = vld [vmem:[%s1 + $0xb4] sm:$0xff]
      %v211 = vld [vmem:[%s1 + $0xbc] sm:$0xf]
      %v212 = vld [vmem:[%s1 + $0xc0] sm:$0xff]
      %v213 = vld [vmem:[%s1 + $0xc8] sm:$0xf]
      %v214 = vld [vmem:[%s1 + $0xcc] sm:$0xff]
      %v215 = vld [vmem:[%s1 + $0xd4] sm:$0xf]
      %v216 = vld [vmem:[%s1 + $0xd8] sm:$0xff]
      %v217 = vld [vmem:[%s1 + $0xe0] sm:$0xf]
      %v218 = vld [vmem:[%s1 + $0xe4] sm:$0xff]
      %v219 = vld [vmem:[%s1 + $0xec] sm:$0xf]
      %v220 = vld [vmem:[%s1 + $0xf0] sm:$0xff]
      %v221 = vld [vmem:[%s1 + $0xf8] sm:$0xf]
      %v222 = vld [vmem:[%s1 + $0xfc] sm:$0xff]
      %v223 = vld [vmem:[%s1 + $0x104] sm:$0xf]
      %v224 = vld [vmem:[%s1 + $0x108] sm:$0xff]
      %v225 = vld [vmem:[%s1 + $0x110] sm:$0xf]
      %v226 = vld [vmem:[%s1 + $0x114] sm:$0xff]
      %v227 = vld [vmem:[%s1 + $0x11c] sm:$0xf]
      %v228 = vld [vmem:[%s1 + $0x120] sm:$0xff]
      %v229 = vld [vmem:[%s1 + $0x128] sm:$0xf]
      %v230 = vld [vmem:[%s1 + $0x12c] sm:$0xff]
      %v231 = vld [vmem:[%s1 + $0x134] sm:$0xf]
      %v232 = vld [vmem:[%s1 + $0x138] sm:$0xff]
      %v233 = vld [vmem:[%s1 + $0x140] sm:$0xf]
      %v234 = vld [vmem:[%s1 + $0x144] sm:$0xff]
      %v235 = vld [vmem:[%s1 + $0x14c] sm:$0xf]
      %v236 = vld [vmem:[%s1 + $0x150] sm:$0xff]
      %v237 = vld [vmem:[%s1 + $0x158] sm:$0xf]
      %v238 = vld [vmem:[%s1 + $0x15c] sm:$0xff]
      %v239 = vld [vmem:[%s1 + $0x164] sm:$0xf]
      %v240 = vld [vmem:[%s1 + $0x168] sm:$0xff]
      %v241 = vld [vmem:[%s1 + $0x170] sm:$0xf]
      %v242 = vld [vmem:[%s1 + $0x174] sm:$0xff]
      %v243 = vld [vmem:[%s1 + $0x17c] sm:$0xf]
      %v244 = vld [vmem:[%s1 + $0x180] sm:$0xff]
      %v245 = vld [vmem:[%s1 + $0x188] sm:$0xf]
      %v246 = vld [vmem:[%s1 + $0x18c] sm:$0xff]
      %v247 = vld [vmem:[%s1 + $0x194] sm:$0xf]
      %v248 = vld [vmem:[%s1 + $0x198] sm:$0xff]
      %v249 = vld [vmem:[%s1 + $0x1a0] sm:$0xf]
      %v250 = vld [vmem:[%s1 + $0x1a4] sm:$0xff]
      %v251 = vld [vmem:[%s1 + $0x1ac] sm:$0xf]
      %v252 = vld [vmem:[%s1 + $0x1b0] sm:$0xff]
      %v253 = vld [vmem:[%s1 + $0x1b8] sm:$0xf]
      %v254 = vld [vmem:[%s1 + $0x1bc] sm:$0xff]
      %v255 = vld [vmem:[%s1 + $0x1c4] sm:$0xf]
      %v256 = vld [vmem:[%s1 + $0x1c8] sm:$0xff]
      %v257 = vld [vmem:[%s1 + $0x1d0] sm:$0xf]
      %v258 = vld [vmem:[%s1 + $0x1d4] sm:$0xff]
      %v259 = vld [vmem:[%s1 + $0x1dc] sm:$0xf]
      %v260 = vld [vmem:[%s1 + $0x1e0] sm:$0xff]
      %v261 = vld [vmem:[%s1 + $0x1e8] sm:$0xf]
      %v262 = vld [vmem:[%s1 + $0x1ec] sm:$0xff]
      %v263 = vld [vmem:[%s1 + $0x1f4] sm:$0xf]
      %v264 = vld [vmem:[%s1 + $0x1f8] sm:$0xff]
      %v265 = vld [vmem:[%s1 + $0x200] sm:$0xf]
      %v266 = vld [vmem:[%s1 + $0x204] sm:$0xff]
      %v267 = vld [vmem:[%s1 + $0x20c] sm:$0xf]
      %v268 = vld [vmem:[%s1 + $0x210] sm:$0xff]
      %v269 = vld [vmem:[%s1 + $0x218] sm:$0xf]
      %v270 = vld [vmem:[%s1 + $0x21c] sm:$0xff]
      %v271 = vld [vmem:[%s1 + $0x224] sm:$0xf]
      %v272 = vld [vmem:[%s1 + $0x228] sm:$0xff]
      %v273 = vld [vmem:[%s1 + $0x230] sm:$0xf]
      %v274 = vld [vmem:[%s1 + $0x234] sm:$0xff]
      %v275 = vld [vmem:[%s1 + $0x23c] sm:$0xf]
      %v286 = vunpack.c.l.b16 %v170
      %v287 = vunpack.c.h.b16 %v170
      %v288 = vunpack.c.l.b16 %v171
      %v289 = vunpack.c.l.b16 %v172
      %v290 = vunpack.c.h.b16 %v172
      %v291 = vunpack.c.l.b16 %v173
      %v292 = vunpack.c.l.b16 %v174
      %v293 = vunpack.c.h.b16 %v174
      %v294 = vunpack.c.l.b16 %v175
      %v295 = vunpack.c.l.b16 %v176
      %v296 = vunpack.c.h.b16 %v176
      %v297 = vunpack.c.l.b16 %v177
      %v298 = vunpack.c.l.b16 %v178
      %v299 = vunpack.c.h.b16 %v178
      %v300 = vunpack.c.l.b16 %v179
      %v301 = vpack.c.b16 %v289, %v286
      %v302 = vpack.c.b16 %v290, %v287
      %v303 = vpack.c.b16 %v291, %v288
      %v304 = vpack.c.b16 %v295, %v292
      %v305 = vpack.c.b16 %v296, %v293
      %v306 = vpack.c.b16 %v297, %v294
      %v307 = vpack.c.b16 %v298, %v298
      %v308 = vpack.c.b16 %v299, %v299
      %v309 = vpack.c.b16 %v300, %v300
      %v415 = vunpack.c.l.b16 %v180
      %v416 = vunpack.c.h.b16 %v180
      %v417 = vunpack.c.l.b16 %v181
      %v418 = vunpack.c.l.b16 %v182
      %v419 = vunpack.c.h.b16 %v182
      %v420 = vunpack.c.l.b16 %v183
      %v421 = vunpack.c.l.b16 %v184
      %v422 = vunpack.c.h.b16 %v184
      %v423 = vunpack.c.l.b16 %v185
      %v424 = vunpack.c.l.b16 %v186
      %v425 = vunpack.c.h.b16 %v186
      %v426 = vunpack.c.l.b16 %v187
      %v427 = vunpack.c.l.b16 %v188
      %v428 = vunpack.c.h.b16 %v188
      %v429 = vunpack.c.l.b16 %v189
      %v430 = vunpack.c.l.b16 %v190
      %v431 = vunpack.c.h.b16 %v190
      %v432 = vunpack.c.l.b16 %v191
      %v433 = vunpack.c.l.b16 %v192
      %v434 = vunpack.c.h.b16 %v192
      %v435 = vunpack.c.l.b16 %v193
      %v436 = vunpack.c.l.b16 %v194
      %v437 = vunpack.c.h.b16 %v194
      %v438 = vunpack.c.l.b16 %v195
      %v439 = vunpack.c.l.b16 %v196
      %v440 = vunpack.c.h.b16 %v196
      %v441 = vunpack.c.l.b16 %v197
      %v442 = vunpack.c.l.b16 %v198
      %v443 = vunpack.c.h.b16 %v198
      %v444 = vunpack.c.l.b16 %v199
      %v445 = vunpack.c.l.b16 %v200
      %v446 = vunpack.c.h.b16 %v200
      %v447 = vunpack.c.l.b16 %v201
      %v448 = vunpack.c.l.b16 %v202
      %v449 = vunpack.c.h.b16 %v202
      %v450 = vunpack.c.l.b16 %v203
      %v451 = vunpack.c.l.b16 %v204
      %v452 = vunpack.c.h.b16 %v204
      %v453 = vunpack.c.l.b16 %v205
      %v454 = vunpack.c.l.b16 %v206
      %v455 = vunpack.c.h.b16 %v206
      %v456 = vunpack.c.l.b16 %v207
      %v457 = vunpack.c.l.b16 %v208
      %v458 = vunpack.c.h.b16 %v208
      %v459 = vunpack.c.l.b16 %v209
      %v460 = vunpack.c.l.b16 %v210
      %v461 = vunpack.c.h.b16 %v210
      %v462 = vunpack.c.l.b16 %v211
      %v463 = vunpack.c.l.b16 %v212
      %v464 = vunpack.c.h.b16 %v212
      %v465 = vunpack.c.l.b16 %v213
      %v466 = vunpack.c.l.b16 %v214
      %v467 = vunpack.c.h.b16 %v214
      %v468 = vunpack.c.l.b16 %v215
      %v469 = vunpack.c.l.b16 %v216
      %v470 = vunpack.c.h.b16 %v216
      %v471 = vunpack.c.l.b16 %v217
      %v472 = vunpack.c.l.b16 %v218
      %v473 = vunpack.c.h.b16 %v218
      %v474 = vunpack.c.l.b16 %v219
      %v475 = vunpack.c.l.b16 %v220
      %v476 = vunpack.c.h.b16 %v220
      %v477 = vunpack.c.l.b16 %v221
      %v478 = vunpack.c.l.b16 %v222
      %v479 = vunpack.c.h.b16 %v222
      %v480 = vunpack.c.l.b16 %v223
      %v481 = vunpack.c.l.b16 %v224
      %v482 = vunpack.c.h.b16 %v224
      %v483 = vunpack.c.l.b16 %v225
      %v484 = vunpack.c.l.b16 %v226
      %v485 = vunpack.c.h.b16 %v226
      %v486 = vunpack.c.l.b16 %v227
      %v487 = vunpack.c.l.b16 %v228
      %v488 = vunpack.c.h.b16 %v228
      %v489 = vunpack.c.l.b16 %v229
      %v490 = vunpack.c.l.b16 %v230
      %v491 = vunpack.c.h.b16 %v230
      %v492 = vunpack.c.l.b16 %v231
      %v493 = vunpack.c.l.b16 %v232
      %v494 = vunpack.c.h.b16 %v232
      %v495 = vunpack.c.l.b16 %v233
      %v496 = vunpack.c.l.b16 %v234
      %v497 = vunpack.c.h.b16 %v234
      %v498 = vunpack.c.l.b16 %v235
      %v499 = vunpack.c.l.b16 %v236
      %v500 = vunpack.c.h.b16 %v236
      %v501 = vunpack.c.l.b16 %v237
      %v502 = vunpack.c.l.b16 %v238
      %v503 = vunpack.c.h.b16 %v238
      %v504 = vunpack.c.l.b16 %v239
      %v505 = vunpack.c.l.b16 %v240
      %v506 = vunpack.c.h.b16 %v240
      %v507 = vunpack.c.l.b16 %v241
      %v508 = vunpack.c.l.b16 %v242
      %v509 = vunpack.c.h.b16 %v242
      %v510 = vunpack.c.l.b16 %v243
      %v511 = vunpack.c.l.b16 %v244
      %v512 = vunpack.c.h.b16 %v244
      %v513 = vunpack.c.l.b16 %v245
      %v514 = vunpack.c.l.b16 %v246
      %v515 = vunpack.c.h.b16 %v246
      %v516 = vunpack.c.l.b16 %v247
      %v517 = vunpack.c.l.b16 %v248
      %v518 = vunpack.c.h.b16 %v248
      %v519 = vunpack.c.l.b16 %v249
      %v520 = vunpack.c.l.b16 %v250
      %v521 = vunpack.c.h.b16 %v250
      %v522 = vunpack.c.l.b16 %v251
      %v523 = vunpack.c.l.b16 %v252
      %v524 = vunpack.c.h.b16 %v252
      %v525 = vunpack.c.l.b16 %v253
      %v526 = vunpack.c.l.b16 %v254
      %v527 = vunpack.c.h.b16 %v254
      %v528 = vunpack.c.l.b16 %v255
      %v529 = vunpack.c.l.b16 %v256
      %v530 = vunpack.c.h.b16 %v256
      %v531 = vunpack.c.l.b16 %v257
      %v532 = vunpack.c.l.b16 %v258
      %v533 = vunpack.c.h.b16 %v258
      %v534 = vunpack.c.l.b16 %v259
      %v535 = vunpack.c.l.b16 %v260
      %v536 = vunpack.c.h.b16 %v260
      %v537 = vunpack.c.l.b16 %v261
      %v538 = vunpack.c.l.b16 %v262
      %v539 = vunpack.c.h.b16 %v262
      %v540 = vunpack.c.l.b16 %v263
      %v541 = vunpack.c.l.b16 %v264
      %v542 = vunpack.c.h.b16 %v264
      %v543 = vunpack.c.l.b16 %v265
      %v544 = vunpack.c.l.b16 %v266
      %v545 = vunpack.c.h.b16 %v266
      %v546 = vunpack.c.l.b16 %v267
      %v547 = vunpack.c.l.b16 %v268
      %v548 = vunpack.c.h.b16 %v268
      %v549 = vunpack.c.l.b16 %v269
      %v550 = vunpack.c.l.b16 %v270
      %v551 = vunpack.c.h.b16 %v270
      %v552 = vunpack.c.l.b16 %v271
      %v553 = vunpack.c.l.b16 %v272
      %v554 = vunpack.c.h.b16 %v272
      %v555 = vunpack.c.l.b16 %v273
      %v556 = vunpack.c.l.b16 %v274
      %v557 = vunpack.c.h.b16 %v274
      %v558 = vunpack.c.l.b16 %v275
      %v559 = vpack.c.b16 %v418, %v415
      %v560 = vpack.c.b16 %v419, %v416
      %v561 = vpack.c.b16 %v420, %v417
      %v562 = vpack.c.b16 %v424, %v421
      %v563 = vpack.c.b16 %v425, %v422
      %v564 = vpack.c.b16 %v426, %v423
      %v565 = vpack.c.b16 %v430, %v427
      %v566 = vpack.c.b16 %v431, %v428
      %v567 = vpack.c.b16 %v432, %v429
      %v568 = vpack.c.b16 %v436, %v433
      %v569 = vpack.c.b16 %v437, %v434
      %v570 = vpack.c.b16 %v438, %v435
      %v571 = vpack.c.b16 %v442, %v439
      %v572 = vpack.c.b16 %v443, %v440
      %v573 = vpack.c.b16 %v444, %v441
      %v574 = vpack.c.b16 %v448, %v445
      %v575 = vpack.c.b16 %v449, %v446
      %v576 = vpack.c.b16 %v450, %v447
      %v577 = vpack.c.b16 %v454, %v451
      %v578 = vpack.c.b16 %v455, %v452
      %v579 = vpack.c.b16 %v456, %v453
      %v580 = vpack.c.b16 %v460, %v457
      %v581 = vpack.c.b16 %v461, %v458
      %v582 = vpack.c.b16 %v462, %v459
      %v583 = vpack.c.b16 %v466, %v463
      %v584 = vpack.c.b16 %v467, %v464
      %v585 = vpack.c.b16 %v468, %v465
      %v586 = vpack.c.b16 %v472, %v469
      %v587 = vpack.c.b16 %v473, %v470
      %v588 = vpack.c.b16 %v474, %v471
      %v589 = vpack.c.b16 %v478, %v475
      %v590 = vpack.c.b16 %v479, %v476
      %v591 = vpack.c.b16 %v480, %v477
      %v592 = vpack.c.b16 %v484, %v481
      %v593 = vpack.c.b16 %v485, %v482
      %v594 = vpack.c.b16 %v486, %v483
      %v595 = vpack.c.b16 %v490, %v487
      %v596 = vpack.c.b16 %v491, %v488
      %v597 = vpack.c.b16 %v492, %v489
      %v598 = vpack.c.b16 %v496, %v493
      %v599 = vpack.c.b16 %v497, %v494
      %v600 = vpack.c.b16 %v498, %v495
      %v601 = vpack.c.b16 %v502, %v499
      %v602 = vpack.c.b16 %v503, %v500
      %v603 = vpack.c.b16 %v504, %v501
      %v604 = vpack.c.b16 %v508, %v505
      %v605 = vpack.c.b16 %v509, %v506
      %v606 = vpack.c.b16 %v510, %v507
      %v607 = vpack.c.b16 %v514, %v511
      %v608 = vpack.c.b16 %v515, %v512
      %v609 = vpack.c.b16 %v516, %v513
      %v610 = vpack.c.b16 %v520, %v517
      %v611 = vpack.c.b16 %v521, %v518
      %v612 = vpack.c.b16 %v522, %v519
      %v613 = vpack.c.b16 %v526, %v523
      %v614 = vpack.c.b16 %v527, %v524
      %v615 = vpack.c.b16 %v528, %v525
      %v616 = vpack.c.b16 %v532, %v529
      %v617 = vpack.c.b16 %v533, %v530
      %v618 = vpack.c.b16 %v534, %v531
      %v619 = vpack.c.b16 %v538, %v535
      %v620 = vpack.c.b16 %v539, %v536
      %v621 = vpack.c.b16 %v540, %v537
      %v622 = vpack.c.b16 %v544, %v541
      %v623 = vpack.c.b16 %v545, %v542
      %v624 = vpack.c.b16 %v546, %v543
      %v625 = vpack.c.b16 %v550, %v547
      %v626 = vpack.c.b16 %v551, %v548
      %v627 = vpack.c.b16 %v552, %v549
      %v628 = vpack.c.b16 %v556, %v553
      %v629 = vpack.c.b16 %v557, %v554
      %v630 = vpack.c.b16 %v558, %v555
      %703 = vmatprep.subr.bf16.mxu0 %v560
      %704 = vmatpush1.bf16.msra.mxu0 %v559
      %705 = vmatprep.subr.bf16.mxu0 %v563
      %706 = vmatpush1.bf16.msra.mxu0 %v562
      %707 = vmatprep.subr.bf16.mxu0 %v566
      %708 = vmatpush1.bf16.msra.mxu0 %v565
      %709 = vmatprep.subr.bf16.mxu0 %v569
      %710 = vmatpush1.bf16.msra.mxu0 %v568
      %711 = vmatprep.subr.bf16.mxu0 %v572
      %712 = vmatpush1.bf16.msra.mxu0 %v571
      %713 = vmatprep.subr.bf16.mxu0 %v575
      %714 = vmatpush1.bf16.msra.mxu0 %v574
      %715 = vmatprep.subr.bf16.mxu0 %v578
      %716 = vmatpush1.bf16.msra.mxu0 %v577
      %717 = vmatprep.subr.bf16.mxu0 %v581
      %718 = vmatpush1.bf16.msra.mxu0 %v580
      %719 = vmatprep.subr.bf16.mxu0 %v584
      %720 = vmatpush1.bf16.msra.mxu0 %v583
      %721 = vmatprep.subr.bf16.mxu0 %v587
      %722 = vmatpush1.bf16.msra.mxu0 %v586
      %723 = vmatprep.subr.bf16.mxu0 %v590
      %724 = vmatpush1.bf16.msra.mxu0 %v589
      %725 = vmatprep.subr.bf16.mxu0 %v593
      %726 = vmatpush1.bf16.msra.mxu0 %v592
      %727 = vmatprep.subr.bf16.mxu0 %v596
      %728 = vmatpush1.bf16.msra.mxu0 %v595
      %729 = vmatprep.subr.bf16.mxu0 %v599
      %730 = vmatpush1.bf16.msra.mxu0 %v598
      %731 = vmatprep.subr.bf16.mxu0 %v602
      %732 = vmatpush1.bf16.msra.mxu0 %v601
      %733 = vmatprep.subr.bf16.mxu0 %v605
      %734 = vmatpush1.bf16.msra.mxu0 %v604
      %735 = vmatprep.mubr.bf16.mxu0 %v302
      %736 = vmatmul.mubr.bf16.gmra.mrb[0].mxu0 %v301
      %v737 = vpop.f32.mrb[0].mxu0
      %v738 = vadd.f32 0.0, %v737
      %v739 = vpop.f32.mrb[0].mxu0
      %v740 = vadd.f32 0.0, %v739
      %v741 = vpop.f32.mrb[0].mxu0
      %v742 = vadd.f32 0.0, %v741
      %v743 = vpop.f32.mrb[0].mxu0
      %v744 = vadd.f32 0.0, %v743
      %745 = vmatprep.mubr.bf16.mxu0 %v305
      %746 = vmatmul.mubr.bf16.gmra.mrb[0].mxu0 %v304
      %v747 = vpop.f32.mrb[0].mxu0
      %v748 = vadd.f32 0.0, %v747
      %v749 = vpop.f32.mrb[0].mxu0
      %v750 = vadd.f32 0.0, %v749
      %v751 = vpop.f32.mrb[0].mxu0
      %v752 = vadd.f32 0.0, %v751
      %v753 = vpop.f32.mrb[0].mxu0
      %v754 = vadd.f32 0.0, %v753
      %755 = vmatprep.mubr.bf16.mxu0 %v308
      %756 = vmatmul.mubr.bf16.gmra.mrb[0].mxu0 %v307
      %v757 = vpop.f32.mrb[0].mxu0
      %v758 = vadd.f32 0.0, %v757
      %v759 = vpop.f32.mrb[0].mxu0
      %v760 = vadd.f32 0.0, %v759
      %v761 = vpop.f32.mrb[0].mxu0
      %v762 = vpop.f32.mrb[0].mxu0
      %763 = vdwg.mxu0
      %764 = vmatprep.subr.bf16.mxu0 %v608
      %765 = vmatpush1.bf16.msra.mxu0 %v607
      %766 = vmatprep.subr.bf16.mxu0 %v611
      %767 = vmatpush1.bf16.msra.mxu0 %v610
      %768 = vmatprep.subr.bf16.mxu0 %v614
      %769 = vmatpush1.bf16.msra.mxu0 %v613
      %770 = vmatprep.subr.bf16.mxu0 %v617
      %771 = vmatpush1.bf16.msra.mxu0 %v616
      %772 = vmatprep.subr.bf16.mxu0 %v620
      %773 = vmatpush1.bf16.msra.mxu0 %v619
      %774 = vmatprep.subr.bf16.mxu0 %v623
      %775 = vmatpush1.bf16.msra.mxu0 %v622
      %776 = vmatprep.subr.bf16.mxu0 %v626
      %777 = vmatpush1.bf16.msra.mxu0 %v625
      %778 = vmatprep.subr.bf16.mxu0 %v629
      %779 = vmatpush1.bf16.msra.mxu0 %v628
      %780 = vmatprep.subr.bf16.mxu0 0
      %781 = vmatpush1.bf16.msra.mxu0 0
      %782 = vmatprep.subr.bf16.mxu0 0
      %783 = vmatpush1.bf16.msra.mxu0 0
      %784 = vmatprep.subr.bf16.mxu0 0
      %785 = vmatpush1.bf16.msra.mxu0 0
      %786 = vmatprep.subr.bf16.mxu0 0
      %787 = vmatpush1.bf16.msra.mxu0 0
      %788 = vmatprep.subr.bf16.mxu0 0
      %789 = vmatpush1.bf16.msra.mxu0 0
      %790 = vmatprep.subr.bf16.mxu0 0
      %791 = vmatpush1.bf16.msra.mxu0 0
      %792 = vmatprep.subr.bf16.mxu0 0
      %793 = vmatpush1.bf16.msra.mxu0 0
      %794 = vmatprep.subr.bf16.mxu0 0
      %795 = vmatpush1.bf16.msra.mxu0 0
      %796 = vmatprep.mubr.bf16.mxu0 0
      %797 = vmatmul.mubr.bf16.gmra.mrb[0].mxu0 %v303
      %v798 = vpop.f32.mrb[0].mxu0
      %v799 = vadd.f32 %v738, %v798
      %v800 = vpop.f32.mrb[0].mxu0
      %v801 = vadd.f32 %v740, %v800
      %v802 = vpop.f32.mrb[0].mxu0
      %v803 = vadd.f32 %v742, %v802
      %v804 = vpop.f32.mrb[0].mxu0
      %v805 = vadd.f32 %v744, %v804
      %806 = vmatprep.mubr.bf16.mxu0 0
      %807 = vmatmul.mubr.bf16.gmra.mrb[0].mxu0 %v306
      %v808 = vpop.f32.mrb[0].mxu0
      %v809 = vadd.f32 %v748, %v808
      %v810 = vpop.f32.mrb[0].mxu0
      %v811 = vadd.f32 %v750, %v810
      %v812 = vpop.f32.mrb[0].mxu0
      %v813 = vadd.f32 %v752, %v812
      %v814 = vpop.f32.mrb[0].mxu0
      %v815 = vadd.f32 %v754, %v814
      %816 = vmatprep.mubr.bf16.mxu0 0
      %817 = vmatmul.mubr.bf16.gmra.mrb[0].mxu0 %v309
      %v818 = vpop.f32.mrb[0].mxu0
      %v819 = vadd.f32 %v758, %v818
      %v820 = vpop.f32.mrb[0].mxu0
      %v821 = vadd.f32 %v760, %v820
      %v822 = vpop.f32.mrb[0].mxu0
      %v823 = vpop.f32.mrb[0].mxu0
      %824 = vdwg.mxu0
      %825 = vmatprep.subr.bf16.mxu0 0
      %826 = vmatpush1.bf16.msra.mxu0 %v561
      %827 = vmatprep.subr.bf16.mxu0 0
      %828 = vmatpush1.bf16.msra.mxu0 %v564
      %829 = vmatprep.subr.bf16.mxu0 0
      %830 = vmatpush1.bf16.msra.mxu0 %v567
      %831 = vmatprep.subr.bf16.mxu0 0
      %832 = vmatpush1.bf16.msra.mxu0 %v570
      %833 = vmatprep.subr.bf16.mxu0 0
      %834 = vmatpush1.bf16.msra.mxu0 %v573
      %835 = vmatprep.subr.bf16.mxu0 0
      %836 = vmatpush1.bf16.msra.mxu0 %v576
      %837 = vmatprep.subr.bf16.mxu0 0
      %838 = vmatpush1.bf16.msra.mxu0 %v579
      %839 = vmatprep.subr.bf16.mxu0 0
      %840 = vmatpush1.bf16.msra.mxu0 %v582
      %841 = vmatprep.subr.bf16.mxu0 0
      %842 = vmatpush1.bf16.msra.mxu0 %v585
      %843 = vmatprep.subr.bf16.mxu0 0
      %844 = vmatpush1.bf16.msra.mxu0 %v588
      %845 = vmatprep.subr.bf16.mxu0 0
      %846 = vmatpush1.bf16.msra.mxu0 %v591
      %847 = vmatprep.subr.bf16.mxu0 0
      %848 = vmatpush1.bf16.msra.mxu0 %v594
      %849 = vmatprep.subr.bf16.mxu0 0
      %850 = vmatpush1.bf16.msra.mxu0 %v597
      %851 = vmatprep.subr.bf16.mxu0 0
      %852 = vmatpush1.bf16.msra.mxu0 %v600
      %853 = vmatprep.subr.bf16.mxu0 0
      %854 = vmatpush1.bf16.msra.mxu0 %v603
      %855 = vmatprep.subr.bf16.mxu0 0
      %856 = vmatpush1.bf16.msra.mxu0 %v606
      %857 = vmatprep.mubr.bf16.mxu0 %v302
      %858 = vmatmul.mubr.bf16.gmra.mrb[0].mxu0 %v301
      %v859 = vpop.f32.mrb[0].mxu0
      %v860 = vadd.f32 0.0, %v859
      %v861 = vpop.f32.mrb[0].mxu0
      %v862 = vpop.f32.mrb[0].mxu0
      %v863 = vadd.f32 0.0, %v862
      %v864 = vpop.f32.mrb[0].mxu0
      %865 = vmatprep.mubr.bf16.mxu0 %v305
      %866 = vmatmul.mubr.bf16.gmra.mrb[0].mxu0 %v304
      %v867 = vpop.f32.mrb[0].mxu0
      %v868 = vadd.f32 0.0, %v867
      %v869 = vpop.f32.mrb[0].mxu0
      %v870 = vpop.f32.mrb[0].mxu0
      %v871 = vadd.f32 0.0, %v870
      %v872 = vpop.f32.mrb[0].mxu0
      %873 = vmatprep.mubr.bf16.mxu0 %v308
      %874 = vmatmul.mubr.bf16.gmra.mrb[0].mxu0 %v307
      %v875 = vpop.f32.mrb[0].mxu0
      %v876 = vadd.f32 0.0, %v875
      %v877 = vpop.f32.mrb[0].mxu0
      %v878 = vpop.f32.mrb[0].mxu0
      %v879 = vpop.f32.mrb[0].mxu0
      %880 = vdwg.mxu0
      %881 = vmatprep.subr.bf16.mxu0 0
      %882 = vmatpush1.bf16.msra.mxu0 %v609
      %883 = vmatprep.subr.bf16.mxu0 0
      %884 = vmatpush1.bf16.msra.mxu0 %v612
      %885 = vmatprep.subr.bf16.mxu0 0
      %886 = vmatpush1.bf16.msra.mxu0 %v615
      %887 = vmatprep.subr.bf16.mxu0 0
      %888 = vmatpush1.bf16.msra.mxu0 %v618
      %889 = vmatprep.subr.bf16.mxu0 0
      %890 = vmatpush1.bf16.msra.mxu0 %v621
      %891 = vmatprep.subr.bf16.mxu0 0
      %892 = vmatpush1.bf16.msra.mxu0 %v624
      %893 = vmatprep.subr.bf16.mxu0 0
      %894 = vmatpush1.bf16.msra.mxu0 %v627
      %895 = vmatprep.subr.bf16.mxu0 0
      %896 = vmatpush1.bf16.msra.mxu0 %v630
      %897 = vmatprep.subr.bf16.mxu0 0
      %898 = vmatpush1.bf16.msra.mxu0 0
      %899 = vmatprep.subr.bf16.mxu0 0
      %900 = vmatpush1.bf16.msra.mxu0 0
      %901 = vmatprep.subr.bf16.mxu0 0
      %902 = vmatpush1.bf16.msra.mxu0 0
      %903 = vmatprep.subr.bf16.mxu0 0
      %904 = vmatpush1.bf16.msra.mxu0 0
      %905 = vmatprep.subr.bf16.mxu0 0
      %906 = vmatpush1.bf16.msra.mxu0 0
      %907 = vmatprep.subr.bf16.mxu0 0
      %908 = vmatpush1.bf16.msra.mxu0 0
      %909 = vmatprep.subr.bf16.mxu0 0
      %910 = vmatpush1.bf16.msra.mxu0 0
      %911 = vmatprep.subr.bf16.mxu0 0
      %912 = vmatpush1.bf16.msra.mxu0 0
      %913 = vmatprep.mubr.bf16.mxu0 0
      %914 = vmatmul.mubr.bf16.gmra.mrb[0].mxu0 %v303
      %v915 = vpop.f32.mrb[0].mxu0
      %v916 = vadd.f32 %v860, %v915
      %v917 = vpop.f32.mrb[0].mxu0
      %v918 = vpop.f32.mrb[0].mxu0
      %v919 = vadd.f32 %v863, %v918
      %v920 = vpop.f32.mrb[0].mxu0
      %921 = vmatprep.mubr.bf16.mxu0 0
      %922 = vmatmul.mubr.bf16.gmra.mrb[0].mxu0 %v306
      %v923 = vpop.f32.mrb[0].mxu0
      %v924 = vadd.f32 %v868, %v923
      %v925 = vpop.f32.mrb[0].mxu0
      %v926 = vpop.f32.mrb[0].mxu0
      %v927 = vadd.f32 %v871, %v926
      %v928 = vpop.f32.mrb[0].mxu0
      %929 = vmatprep.mubr.bf16.mxu0 0
      %930 = vmatmul.mubr.bf16.gmra.mrb[0].mxu0 %v309
      %v931 = vpop.f32.mrb[0].mxu0
      %v932 = vadd.f32 %v876, %v931
      %v933 = vpop.f32.mrb[0].mxu0
      %v934 = vpop.f32.mrb[0].mxu0
      %v935 = vpop.f32.mrb[0].mxu0
      %936 = vdwg.mxu0
      %v937 = vmax.f32 %v799, 0.0
      %v938 = vmax.f32 %v801, 0.0
      %v939 = vmax.f32 %v916, 0.0
      %v940 = vmax.f32 %v803, 0.0
      %v941 = vmax.f32 %v805, 0.0
      %v942 = vmax.f32 %v919, 0.0
      %v943 = vmax.f32 %v809, 0.0
      %v944 = vmax.f32 %v811, 0.0
      %v945 = vmax.f32 %v924, 0.0
      %v946 = vmax.f32 %v813, 0.0
      %v947 = vmax.f32 %v815, 0.0
      %v948 = vmax.f32 %v927, 0.0
      %v949 = vmax.f32 %v819, 0.0
      %v950 = vmax.f32 %v821, 0.0
      %v951 = vmax.f32 %v932, 0.0
      %v952 = vpack.c.bf16 %v940, %v937
      %v953 = vpack.c.bf16 %v941, %v938
      %v954 = vpack.c.bf16 %v942, %v939
      %v955 = vpack.c.bf16 %v946, %v943
      %v956 = vpack.c.bf16 %v947, %v944
      %v957 = vpack.c.bf16 %v948, %v945
      %v958 = vpack.c.bf16 %v949, %v949
      %v959 = vpack.c.bf16 %v950, %v950
      %v960 = vpack.c.bf16 %v951, %v951
      %v970 = vunpack.c.l.b16 %v952
      %v971 = vunpack.c.l.b16 %v953
      %v972 = vunpack.c.l.b16 %v954
      %v973 = vunpack.c.h.b16 %v952
      %v974 = vunpack.c.h.b16 %v953
      %v975 = vunpack.c.h.b16 %v954
      %v976 = vunpack.c.l.b16 %v955
      %v977 = vunpack.c.l.b16 %v956
      %v978 = vunpack.c.l.b16 %v957
      %v979 = vunpack.c.h.b16 %v955
      %v980 = vunpack.c.h.b16 %v956
      %v981 = vunpack.c.h.b16 %v957
      %v982 = vunpack.c.l.b16 %v958
      %v983 = vunpack.c.l.b16 %v959
      %v984 = vunpack.c.l.b16 %v960
      %v985 = vpack.c.b16 %v971, %v970
      %v986 = vpack.c.b16 %v972, %v972
      %v987 = vpack.c.b16 %v974, %v973
      %v988 = vpack.c.b16 %v975, %v975
      %v989 = vpack.c.b16 %v977, %v976
      %v990 = vpack.c.b16 %v978, %v978
      %v991 = vpack.c.b16 %v980, %v979
      %v992 = vpack.c.b16 %v981, %v981
      %v993 = vpack.c.b16 %v983, %v982
      %v994 = vpack.c.b16 %v984, %v984
      %1005 = vst [vmem:[#allocation2] sm:$0xff] %v985
      %vm1006 = vcmask 257024
      %1007 = vst.msk [vmem:[#allocation2 + $0x8] sm:$0xf] %vm1006, %v986
      %1008 = vst [vmem:[#allocation2 + $0xc] sm:$0xff] %v987
      %1009 = vst.msk [vmem:[#allocation2 + $0x14] sm:$0xf] %vm1006, %v988
      %1010 = vst [vmem:[#allocation2 + $0x18] sm:$0xff] %v989
      %1011 = vst.msk [vmem:[#allocation2 + $0x20] sm:$0xf] %vm1006, %v990
      %1012 = vst [vmem:[#allocation2 + $0x24] sm:$0xff] %v991
      %1013 = vst.msk [vmem:[#allocation2 + $0x2c] sm:$0xf] %vm1006, %v992
      %1014 = vst [vmem:[#allocation2 + $0x30] sm:$0x33] %v993
      %vm1015 = vcmask 254976
      %1016 = vst.msk [vmem:[#allocation2 + $0x38] sm:$0x3] %vm1015, %v994
      %1017 = vst [vmem:[#allocation2 + $0x30] sm:$0xcc] 0
      %vm1018 = vcmask 257026
      %1019 = vst.msk [vmem:[#allocation2 + $0x38] sm:$0xc] %vm1018, 0
      %v1020 = vld [vmem:[#allocation2] sm:$0xff]
      %v1021 = vld [vmem:[#allocation2 + $0x8] sm:$0xf]
      %v1022 = vld [vmem:[#allocation2 + $0xc] sm:$0xff]
      %v1023 = vld [vmem:[#allocation2 + $0x14] sm:$0xf]
      %v1024 = vld [vmem:[#allocation2 + $0x18] sm:$0xff]
      %v1025 = vld [vmem:[#allocation2 + $0x20] sm:$0xf]
      %v1026 = vld [vmem:[#allocation2 + $0x24] sm:$0xff]
      %v1027 = vld [vmem:[#allocation2 + $0x2c] sm:$0xf]
      %v1028 = vld [vmem:[#allocation2 + $0x30] sm:$0x33]
      %v1029 = vld [vmem:[#allocation2 + $0x38] sm:$0x3]
      %v1030 = vld [vmem:[%s2] sm:$0xff]
      %v1031 = vld [vmem:[%s2 + $0x8] sm:$0xf]
      %v1032 = vld [vmem:[%s2 + $0xc] sm:$0xff]
      %v1033 = vld [vmem:[%s2 + $0x14] sm:$0xf]
      %v1034 = vld [vmem:[%s2 + $0x18] sm:$0xff]
      %v1035 = vld [vmem:[%s2 + $0x20] sm:$0xf]
      %v1036 = vld [vmem:[%s2 + $0x24] sm:$0xff]
      %v1037 = vld [vmem:[%s2 + $0x2c] sm:$0xf]
      %v1038 = vld [vmem:[%s2 + $0x30] sm:$0xff]
      %v1039 = vld [vmem:[%s2 + $0x38] sm:$0xf]
      %v1040 = vld [vmem:[%s2 + $0x3c] sm:$0xff]
      %v1041 = vld [vmem:[%s2 + $0x44] sm:$0xf]
      %v1042 = vld [vmem:[%s2 + $0x48] sm:$0xff]
      %v1043 = vld [vmem:[%s2 + $0x50] sm:$0xf]
      %v1044 = vld [vmem:[%s2 + $0x54] sm:$0xff]
      %v1045 = vld [vmem:[%s2 + $0x5c] sm:$0xf]
      %v1046 = vld [vmem:[%s2 + $0x60] sm:$0xff]
      %v1047 = vld [vmem:[%s2 + $0x68] sm:$0xf]
      %v1048 = vld [vmem:[%s2 + $0x6c] sm:$0xff]
      %v1049 = vld [vmem:[%s2 + $0x74] sm:$0xf]
      %v1050 = vld [vmem:[%s2 + $0x78] sm:$0xff]
      %v1051 = vld [vmem:[%s2 + $0x80] sm:$0xf]
      %v1052 = vld [vmem:[%s2 + $0x84] sm:$0xff]
      %v1053 = vld [vmem:[%s2 + $0x8c] sm:$0xf]
      %v1054 = vld [vmem:[%s2 + $0x90] sm:$0xff]
      %v1055 = vld [vmem:[%s2 + $0x98] sm:$0xf]
      %v1056 = vld [vmem:[%s2 + $0x9c] sm:$0xff]
      %v1057 = vld [vmem:[%s2 + $0xa4] sm:$0xf]
      %v1058 = vld [vmem:[%s2 + $0xa8] sm:$0xff]
      %v1059 = vld [vmem:[%s2 + $0xb0] sm:$0xf]
      %v1060 = vld [vmem:[%s2 + $0xb4] sm:$0xff]
      %v1061 = vld [vmem:[%s2 + $0xbc] sm:$0xf]
      %v1062 = vld [vmem:[%s2 + $0xc0] sm:$0xff]
      %v1063 = vld [vmem:[%s2 + $0xc8] sm:$0xf]
      %v1064 = vld [vmem:[%s2 + $0xcc] sm:$0xff]
      %v1065 = vld [vmem:[%s2 + $0xd4] sm:$0xf]
      %v1066 = vld [vmem:[%s2 + $0xd8] sm:$0xff]
      %v1067 = vld [vmem:[%s2 + $0xe0] sm:$0xf]
      %v1068 = vld [vmem:[%s2 + $0xe4] sm:$0xff]
      %v1069 = vld [vmem:[%s2 + $0xec] sm:$0xf]
      %v1070 = vld [vmem:[%s2 + $0xf0] sm:$0xff]
      %v1071 = vld [vmem:[%s2 + $0xf8] sm:$0xf]
      %v1072 = vld [vmem:[%s2 + $0xfc] sm:$0xff]
      %v1073 = vld [vmem:[%s2 + $0x104] sm:$0xf]
      %v1074 = vld [vmem:[%s2 + $0x108] sm:$0xff]
      %v1075 = vld [vmem:[%s2 + $0x110] sm:$0xf]
      %v1076 = vld [vmem:[%s2 + $0x114] sm:$0xff]
      %v1077 = vld [vmem:[%s2 + $0x11c] sm:$0xf]
      %v1078 = vld [vmem:[%s2 + $0x120] sm:$0xff]
      %v1079 = vld [vmem:[%s2 + $0x128] sm:$0xf]
      %v1080 = vld [vmem:[%s2 + $0x12c] sm:$0xff]
      %v1081 = vld [vmem:[%s2 + $0x134] sm:$0xf]
      %v1082 = vld [vmem:[%s2 + $0x138] sm:$0xff]
      %v1083 = vld [vmem:[%s2 + $0x140] sm:$0xf]
      %v1084 = vld [vmem:[%s2 + $0x144] sm:$0xff]
      %v1085 = vld [vmem:[%s2 + $0x14c] sm:$0xf]
      %v1086 = vld [vmem:[%s2 + $0x150] sm:$0xff]
      %v1087 = vld [vmem:[%s2 + $0x158] sm:$0xf]
      %v1088 = vld [vmem:[%s2 + $0x15c] sm:$0xff]
      %v1089 = vld [vmem:[%s2 + $0x164] sm:$0xf]
      %v1090 = vld [vmem:[%s2 + $0x168] sm:$0xff]
      %v1091 = vld [vmem:[%s2 + $0x170] sm:$0xf]
      %v1092 = vld [vmem:[%s2 + $0x174] sm:$0xff]
      %v1093 = vld [vmem:[%s2 + $0x17c] sm:$0xf]
      %v1094 = vld [vmem:[%s2 + $0x180] sm:$0xff]
      %v1095 = vld [vmem:[%s2 + $0x188] sm:$0xf]
      %v1096 = vld [vmem:[%s2 + $0x18c] sm:$0xff]
      %v1097 = vld [vmem:[%s2 + $0x194] sm:$0xf]
      %v1098 = vld [vmem:[%s2 + $0x198] sm:$0xff]
      %v1099 = vld [vmem:[%s2 + $0x1a0] sm:$0xf]
      %v1100 = vld [vmem:[%s2 + $0x1a4] sm:$0xff]
      %v1101 = vld [vmem:[%s2 + $0x1ac] sm:$0xf]
      %v1102 = vld [vmem:[#allocation2 + $0x30] sm:$0x77]
      %v1103 = vld [vmem:[#allocation2 + $0x38] sm:$0x7]
      %s1104 = scalar_lea.vmem %s2, 432
      %v1105 = vld [vmem:[%s1104] sm:$0xff]
      %v1106 = vld [vmem:[%s1104 + $0x8] sm:$0xf]
      %v1107 = vld [vmem:[%s1104 + $0xc] sm:$0xff]
      %v1108 = vld [vmem:[%s1104 + $0x14] sm:$0xf]
      %v1109 = vld [vmem:[%s1104 + $0x18] sm:$0xff]
      %v1110 = vld [vmem:[%s1104 + $0x20] sm:$0xf]
      %v1111 = vld [vmem:[%s1104 + $0x24] sm:$0xff]
      %v1112 = vld [vmem:[%s1104 + $0x2c] sm:$0xf]
      %v1113 = vld [vmem:[%s1104 + $0x30] sm:$0xff]
      %v1114 = vld [vmem:[%s1104 + $0x38] sm:$0xf]
      %v1115 = vld [vmem:[%s1104 + $0x3c] sm:$0xff]
      %v1116 = vld [vmem:[%s1104 + $0x44] sm:$0xf]
      %v1117 = vld [vmem:[%s1104 + $0x48] sm:$0xff]
      %v1118 = vld [vmem:[%s1104 + $0x50] sm:$0xf]
      %v1119 = vld [vmem:[%s1104 + $0x54] sm:$0xff]
      %v1120 = vld [vmem:[%s1104 + $0x5c] sm:$0xf]
      %v1121 = vld [vmem:[%s1104 + $0x60] sm:$0xff]
      %v1122 = vld [vmem:[%s1104 + $0x68] sm:$0xf]
      %v1123 = vld [vmem:[%s1104 + $0x6c] sm:$0xff]
      %v1124 = vld [vmem:[%s1104 + $0x74] sm:$0xf]
      %v1125 = vld [vmem:[%s1104 + $0x78] sm:$0xff]
      %v1126 = vld [vmem:[%s1104 + $0x80] sm:$0xf]
      %v1127 = vld [vmem:[%s1104 + $0x84] sm:$0xff]
      %v1128 = vld [vmem:[%s1104 + $0x8c] sm:$0xf]
      %v1129 = vld [vmem:[%s1104 + $0x90] sm:$0xff]
      %v1130 = vld [vmem:[%s1104 + $0x98] sm:$0xf]
      %v1131 = vld [vmem:[%s1104 + $0x9c] sm:$0xff]
      %v1132 = vld [vmem:[%s1104 + $0xa4] sm:$0xf]
      %v1133 = vld [vmem:[%s1104 + $0xa8] sm:$0xff]
      %v1134 = vld [vmem:[%s1104 + $0xb0] sm:$0xf]
      %v1135 = vld [vmem:[%s1104 + $0xb4] sm:$0xff]
      %v1136 = vld [vmem:[%s1104 + $0xbc] sm:$0xf]
      %v1137 = vld [vmem:[%s1104 + $0xc0] sm:$0xff]
      %v1138 = vld [vmem:[%s1104 + $0xc8] sm:$0xf]
      %v1139 = vld [vmem:[%s1104 + $0xcc] sm:$0xff]
      %v1140 = vld [vmem:[%s1104 + $0xd4] sm:$0xf]
      %v1141 = vld [vmem:[%s1104 + $0xd8] sm:$0xff]
      %v1142 = vld [vmem:[%s1104 + $0xe0] sm:$0xf]
      %v1143 = vld [vmem:[%s1104 + $0xe4] sm:$0xff]
      %v1144 = vld [vmem:[%s1104 + $0xec] sm:$0xf]
      %v1145 = vld [vmem:[%s1104 + $0xf0] sm:$0xff]
      %v1146 = vld [vmem:[%s1104 + $0xf8] sm:$0xf]
      %v1147 = vld [vmem:[%s1104 + $0xfc] sm:$0xff]
      %v1148 = vld [vmem:[%s1104 + $0x104] sm:$0xf]
      %v1149 = vld [vmem:[%s1104 + $0x108] sm:$0xff]
      %v1150 = vld [vmem:[%s1104 + $0x110] sm:$0xf]
      %v1151 = vld [vmem:[%s1104 + $0x114] sm:$0xff]
      %v1152 = vld [vmem:[%s1104 + $0x11c] sm:$0xf]
      %v1153 = vld [vmem:[%s1104 + $0x120] sm:$0xff]
      %v1154 = vld [vmem:[%s1104 + $0x128] sm:$0xf]
      %v1155 = vld [vmem:[%s1104 + $0x12c] sm:$0xff]
      %v1156 = vld [vmem:[%s1104 + $0x134] sm:$0xf]
      %v1157 = vld [vmem:[%s1104 + $0x138] sm:$0xff]
      %v1158 = vld [vmem:[%s1104 + $0x140] sm:$0xf]
      %v1159 = vld [vmem:[%s1104 + $0x144] sm:$0xff]
      %v1160 = vld [vmem:[%s1104 + $0x14c] sm:$0xf]
      %v1161 = vld [vmem:[%s1104 + $0x150] sm:$0xff]
      %v1162 = vld [vmem:[%s1104 + $0x158] sm:$0xf]
      %v1163 = vld [vmem:[%s1104 + $0x15c] sm:$0xff]
      %v1164 = vld [vmem:[%s1104 + $0x164] sm:$0xf]
      %v1165 = vld [vmem:[%s1104 + $0x168] sm:$0xff]
      %v1166 = vld [vmem:[%s1104 + $0x170] sm:$0xf]
      %v1167 = vld [vmem:[%s1104 + $0x174] sm:$0xff]
      %v1168 = vld [vmem:[%s1104 + $0x17c] sm:$0xf]
      %v1169 = vld [vmem:[%s1104 + $0x180] sm:$0xff]
      %v1170 = vld [vmem:[%s1104 + $0x188] sm:$0xf]
      %v1171 = vld [vmem:[%s1104 + $0x18c] sm:$0xff]
      %v1172 = vld [vmem:[%s1104 + $0x194] sm:$0xf]
      %v1173 = vld [vmem:[%s1104 + $0x198] sm:$0xff]
      %v1174 = vld [vmem:[%s1104 + $0x1a0] sm:$0xf]
      %v1175 = vld [vmem:[%s1104 + $0x1a4] sm:$0xff]
      %v1176 = vld [vmem:[%s1104 + $0x1ac] sm:$0xf]
      %v1187 = vunpack.c.l.b16 %v1020
      %v1188 = vunpack.c.h.b16 %v1020
      %v1189 = vunpack.c.l.b16 %v1021
      %v1190 = vunpack.c.l.b16 %v1022
      %v1191 = vunpack.c.h.b16 %v1022
      %v1192 = vunpack.c.l.b16 %v1023
      %v1193 = vunpack.c.l.b16 %v1024
      %v1194 = vunpack.c.h.b16 %v1024
      %v1195 = vunpack.c.l.b16 %v1025
      %v1196 = vunpack.c.l.b16 %v1026
      %v1197 = vunpack.c.h.b16 %v1026
      %v1198 = vunpack.c.l.b16 %v1027
      %v1199 = vunpack.c.l.b16 %v1102
      %v1200 = vunpack.c.h.b16 %v1102
      %v1201 = vunpack.c.l.b16 %v1103
      %v1202 = vpack.c.b16 %v1190, %v1187
      %v1203 = vpack.c.b16 %v1191, %v1188
      %v1204 = vpack.c.b16 %v1192, %v1189
      %v1205 = vpack.c.b16 %v1196, %v1193
      %v1206 = vpack.c.b16 %v1197, %v1194
      %v1207 = vpack.c.b16 %v1198, %v1195
      %v1208 = vpack.c.b16 %v1199, %v1199
      %v1209 = vpack.c.b16 %v1200, %v1200
      %v1210 = vpack.c.b16 %v1201, %v1201
      %vm1211 = vsmask.f32 7424
      %v1213 = vshrl.u32 %v1202, 16
      %v1215 = vshll.u32 %v1202, 16
      %v1217 = vrot.slane %v1215, 1
      %v1218 = vor.u32 %v1213, %v1217
      %v1220 = vshll.u32 %v1205, 16
      %v1222 = vrot.slane %v1220, 1
      %v1223 = vsel %vm1211, %v1218, %v1222
      %v1225 = vshrl.u32 %v1203, 16
      %v1227 = vshll.u32 %v1203, 16
      %v1229 = vrot.slane %v1227, 1
      %v1230 = vor.u32 %v1225, %v1229
      %v1232 = vshll.u32 %v1206, 16
      %v1234 = vrot.slane %v1232, 1
      %v1235 = vsel %vm1211, %v1230, %v1234
      %v1237 = vshrl.u32 %v1204, 16
      %v1239 = vshll.u32 %v1204, 16
      %v1241 = vrot.slane %v1239, 1
      %v1242 = vor.u32 %v1237, %v1241
      %v1244 = vshll.u32 %v1207, 16
      %v1246 = vrot.slane %v1244, 1
      %v1247 = vsel %vm1211, %v1242, %v1246
      %v1248 = vshrl.u32 %v1205, 16
      %v1250 = vor.u32 %v1248, %v1222
      %v1252 = vshll.u32 %v1208, 16
      %v1254 = vrot.slane %v1252, 1
      %v1255 = vsel %vm1211, %v1250, %v1254
      %v1256 = vshrl.u32 %v1206, 16
      %v1258 = vor.u32 %v1256, %v1234
      %v1260 = vshll.u32 %v1209, 16
      %v1262 = vrot.slane %v1260, 1
      %v1263 = vsel %vm1211, %v1258, %v1262
      %v1264 = vshrl.u32 %v1207, 16
      %v1266 = vor.u32 %v1264, %v1246
      %v1268 = vshll.u32 %v1210, 16
      %v1270 = vrot.slane %v1268, 1
      %v1271 = vsel %vm1211, %v1266, %v1270
      %v1272 = vshrl.u32 %v1208, 16
      %v1274 = vor.u32 %v1272, %v1254
      %v1275 = vshrl.u32 %v1209, 16
      %v1277 = vor.u32 %v1275, %v1262
      %v1278 = vshrl.u32 %v1210, 16
      %v1280 = vor.u32 %v1278, %v1270
      %v1359 = vunpack.c.l.b16 %v1105
      %v1360 = vunpack.c.h.b16 %v1105
      %v1361 = vunpack.c.l.b16 %v1106
      %v1362 = vunpack.c.l.b16 %v1107
      %v1363 = vunpack.c.h.b16 %v1107
      %v1364 = vunpack.c.l.b16 %v1108
      %v1365 = vunpack.c.l.b16 %v1109
      %v1366 = vunpack.c.h.b16 %v1109
      %v1367 = vunpack.c.l.b16 %v1110
      %v1368 = vunpack.c.l.b16 %v1111
      %v1369 = vunpack.c.h.b16 %v1111
      %v1370 = vunpack.c.l.b16 %v1112
      %v1371 = vunpack.c.l.b16 %v1113
      %v1372 = vunpack.c.h.b16 %v1113
      %v1373 = vunpack.c.l.b16 %v1114
      %v1374 = vunpack.c.l.b16 %v1115
      %v1375 = vunpack.c.h.b16 %v1115
      %v1376 = vunpack.c.l.b16 %v1116
      %v1377 = vunpack.c.l.b16 %v1117
      %v1378 = vunpack.c.h.b16 %v1117
      %v1379 = vunpack.c.l.b16 %v1118
      %v1380 = vunpack.c.l.b16 %v1119
      %v1381 = vunpack.c.h.b16 %v1119
      %v1382 = vunpack.c.l.b16 %v1120
      %v1383 = vunpack.c.l.b16 %v1121
      %v1384 = vunpack.c.h.b16 %v1121
      %v1385 = vunpack.c.l.b16 %v1122
      %v1386 = vunpack.c.l.b16 %v1123
      %v1387 = vunpack.c.h.b16 %v1123
      %v1388 = vunpack.c.l.b16 %v1124
      %v1389 = vunpack.c.l.b16 %v1125
      %v1390 = vunpack.c.h.b16 %v1125
      %v1391 = vunpack.c.l.b16 %v1126
      %v1392 = vunpack.c.l.b16 %v1127
      %v1393 = vunpack.c.h.b16 %v1127
      %v1394 = vunpack.c.l.b16 %v1128
      %v1395 = vunpack.c.l.b16 %v1129
      %v1396 = vunpack.c.h.b16 %v1129
      %v1397 = vunpack.c.l.b16 %v1130
      %v1398 = vunpack.c.l.b16 %v1131
      %v1399 = vunpack.c.h.b16 %v1131
      %v1400 = vunpack.c.l.b16 %v1132
      %v1401 = vunpack.c.l.b16 %v1133
      %v1402 = vunpack.c.h.b16 %v1133
      %v1403 = vunpack.c.l.b16 %v1134
      %v1404 = vunpack.c.l.b16 %v1135
      %v1405 = vunpack.c.h.b16 %v1135
      %v1406 = vunpack.c.l.b16 %v1136
      %v1407 = vunpack.c.l.b16 %v1137
      %v1408 = vunpack.c.h.b16 %v1137
      %v1409 = vunpack.c.l.b16 %v1138
      %v1410 = vunpack.c.l.b16 %v1139
      %v1411 = vunpack.c.h.b16 %v1139
      %v1412 = vunpack.c.l.b16 %v1140
      %v1413 = vunpack.c.l.b16 %v1141
      %v1414 = vunpack.c.h.b16 %v1141
      %v1415 = vunpack.c.l.b16 %v1142
      %v1416 = vunpack.c.l.b16 %v1143
      %v1417 = vunpack.c.h.b16 %v1143
      %v1418 = vunpack.c.l.b16 %v1144
      %v1419 = vunpack.c.l.b16 %v1145
      %v1420 = vunpack.c.h.b16 %v1145
      %v1421 = vunpack.c.l.b16 %v1146
      %v1422 = vunpack.c.l.b16 %v1147
      %v1423 = vunpack.c.h.b16 %v1147
      %v1424 = vunpack.c.l.b16 %v1148
      %v1425 = vunpack.c.l.b16 %v1149
      %v1426 = vunpack.c.h.b16 %v1149
      %v1427 = vunpack.c.l.b16 %v1150
      %v1428 = vunpack.c.l.b16 %v1151
      %v1429 = vunpack.c.h.b16 %v1151
      %v1430 = vunpack.c.l.b16 %v1152
      %v1431 = vunpack.c.l.b16 %v1153
      %v1432 = vunpack.c.h.b16 %v1153
      %v1433 = vunpack.c.l.b16 %v1154
      %v1434 = vunpack.c.l.b16 %v1155
      %v1435 = vunpack.c.h.b16 %v1155
      %v1436 = vunpack.c.l.b16 %v1156
      %v1437 = vunpack.c.l.b16 %v1157
      %v1438 = vunpack.c.h.b16 %v1157
      %v1439 = vunpack.c.l.b16 %v1158
      %v1440 = vunpack.c.l.b16 %v1159
      %v1441 = vunpack.c.h.b16 %v1159
      %v1442 = vunpack.c.l.b16 %v1160
      %v1443 = vunpack.c.l.b16 %v1161
      %v1444 = vunpack.c.h.b16 %v1161
      %v1445 = vunpack.c.l.b16 %v1162
      %v1446 = vunpack.c.l.b16 %v1163
      %v1447 = vunpack.c.h.b16 %v1163
      %v1448 = vunpack.c.l.b16 %v1164
      %v1449 = vunpack.c.l.b16 %v1165
      %v1450 = vunpack.c.h.b16 %v1165
      %v1451 = vunpack.c.l.b16 %v1166
      %v1452 = vunpack.c.l.b16 %v1167
      %v1453 = vunpack.c.h.b16 %v1167
      %v1454 = vunpack.c.l.b16 %v1168
      %v1455 = vunpack.c.l.b16 %v1169
      %v1456 = vunpack.c.h.b16 %v1169
      %v1457 = vunpack.c.l.b16 %v1170
      %v1458 = vunpack.c.l.b16 %v1171
      %v1459 = vunpack.c.h.b16 %v1171
      %v1460 = vunpack.c.l.b16 %v1172
      %v1461 = vunpack.c.l.b16 %v1173
      %v1462 = vunpack.c.h.b16 %v1173
      %v1463 = vunpack.c.l.b16 %v1174
      %v1464 = vunpack.c.l.b16 %v1175
      %v1465 = vunpack.c.h.b16 %v1175
      %v1466 = vunpack.c.l.b16 %v1176
      %v1467 = vpack.c.b16 %v1362, %v1359
      %v1468 = vpack.c.b16 %v1363, %v1360
      %v1469 = vpack.c.b16 %v1364, %v1361
      %v1470 = vpack.c.b16 %v1368, %v1365
      %v1471 = vpack.c.b16 %v1369, %v1366
      %v1472 = vpack.c.b16 %v1370, %v1367
      %v1473 = vpack.c.b16 %v1374, %v1371
      %v1474 = vpack.c.b16 %v1375, %v1372
      %v1475 = vpack.c.b16 %v1376, %v1373
      %v1476 = vpack.c.b16 %v1380, %v1377
      %v1477 = vpack.c.b16 %v1381, %v1378
      %v1478 = vpack.c.b16 %v1382, %v1379
      %v1479 = vpack.c.b16 %v1386, %v1383
      %v1480 = vpack.c.b16 %v1387, %v1384
      %v1481 = vpack.c.b16 %v1388, %v1385
      %v1482 = vpack.c.b16 %v1392, %v1389
      %v1483 = vpack.c.b16 %v1393, %v1390
      %v1484 = vpack.c.b16 %v1394, %v1391
      %v1485 = vpack.c.b16 %v1398, %v1395
      %v1486 = vpack.c.b16 %v1399, %v1396
      %v1487 = vpack.c.b16 %v1400, %v1397
      %v1488 = vpack.c.b16 %v1404, %v1401
      %v1489 = vpack.c.b16 %v1405, %v1402
      %v1490 = vpack.c.b16 %v1406, %v1403
      %v1491 = vpack.c.b16 %v1410, %v1407
      %v1492 = vpack.c.b16 %v1411, %v1408
      %v1493 = vpack.c.b16 %v1412, %v1409
      %v1494 = vpack.c.b16 %v1416, %v1413
      %v1495 = vpack.c.b16 %v1417, %v1414
      %v1496 = vpack.c.b16 %v1418, %v1415
      %v1497 = vpack.c.b16 %v1422, %v1419
      %v1498 = vpack.c.b16 %v1423, %v1420
      %v1499 = vpack.c.b16 %v1424, %v1421
      %v1500 = vpack.c.b16 %v1428, %v1425
      %v1501 = vpack.c.b16 %v1429, %v1426
      %v1502 = vpack.c.b16 %v1430, %v1427
      %v1503 = vpack.c.b16 %v1434, %v1431
      %v1504 = vpack.c.b16 %v1435, %v1432
      %v1505 = vpack.c.b16 %v1436, %v1433
      %v1506 = vpack.c.b16 %v1440, %v1437
      %v1507 = vpack.c.b16 %v1441, %v1438
      %v1508 = vpack.c.b16 %v1442, %v1439
      %v1509 = vpack.c.b16 %v1446, %v1443
      %v1510 = vpack.c.b16 %v1447, %v1444
      %v1511 = vpack.c.b16 %v1448, %v1445
      %v1512 = vpack.c.b16 %v1452, %v1449
      %v1513 = vpack.c.b16 %v1453, %v1450
      %v1514 = vpack.c.b16 %v1454, %v1451
      %v1515 = vpack.c.b16 %v1458, %v1455
      %v1516 = vpack.c.b16 %v1459, %v1456
      %v1517 = vpack.c.b16 %v1460, %v1457
      %v1518 = vpack.c.b16 %v1464, %v1461
      %v1519 = vpack.c.b16 %v1465, %v1462
      %v1520 = vpack.c.b16 %v1466, %v1463
      %vm1575 = vcmask 261120
      %v1577 = vsel %vm1575, %v1247, 0
      %v1580 = vsel %vm1575, %v1271, 0
      %v1583 = vsel %vm1575, %v1280, 0
      %1585 = vmatprep.subr.bf16.mxu0 %v1468
      %1586 = vmatpush1.bf16.msra.mxu0 %v1467
      %1587 = vmatprep.subr.bf16.mxu0 %v1471
      %1588 = vmatpush1.bf16.msra.mxu0 %v1470
      %1589 = vmatprep.subr.bf16.mxu0 %v1474
      %1590 = vmatpush1.bf16.msra.mxu0 %v1473
      %1591 = vmatprep.subr.bf16.mxu0 %v1477
      %1592 = vmatpush1.bf16.msra.mxu0 %v1476
      %1593 = vmatprep.subr.bf16.mxu0 %v1480
      %1594 = vmatpush1.bf16.msra.mxu0 %v1479
      %1595 = vmatprep.subr.bf16.mxu0 %v1483
      %1596 = vmatpush1.bf16.msra.mxu0 %v1482
      %1597 = vmatprep.subr.bf16.mxu0 %v1486
      %1598 = vmatpush1.bf16.msra.mxu0 %v1485
      %1599 = vmatprep.subr.bf16.mxu0 %v1489
      %1600 = vmatpush1.bf16.msra.mxu0 %v1488
      %1601 = vmatprep.subr.bf16.mxu0 %v1492
      %1602 = vmatpush1.bf16.msra.mxu0 %v1491
      %1603 = vmatprep.subr.bf16.mxu0 %v1495
      %1604 = vmatpush1.bf16.msra.mxu0 %v1494
      %1605 = vmatprep.subr.bf16.mxu0 %v1498
      %1606 = vmatpush1.bf16.msra.mxu0 %v1497
      %1607 = vmatprep.subr.bf16.mxu0 %v1501
      %1608 = vmatpush1.bf16.msra.mxu0 %v1500
      %1609 = vmatprep.subr.bf16.mxu0 %v1504
      %1610 = vmatpush1.bf16.msra.mxu0 %v1503
      %1611 = vmatprep.subr.bf16.mxu0 %v1507
      %1612 = vmatpush1.bf16.msra.mxu0 %v1506
      %1613 = vmatprep.subr.bf16.mxu0 %v1510
      %1614 = vmatpush1.bf16.msra.mxu0 %v1509
      %1615 = vmatprep.subr.bf16.mxu0 %v1513
      %1616 = vmatpush1.bf16.msra.mxu0 %v1512
      %1617 = vmatprep.mubr.bf16.mxu0 %v1235
      %1618 = vmatmul.mubr.bf16.gmra.mrb[0].mxu0 %v1223
      %v1619 = vpop.f32.mrb[0].mxu0
      %v1620 = vadd.f32 0.0, %v1619
      %v1621 = vpop.f32.mrb[0].mxu0
      %v1622 = vadd.f32 0.0, %v1621
      %v1623 = vpop.f32.mrb[0].mxu0
      %v1624 = vadd.f32 0.0, %v1623
      %v1625 = vpop.f32.mrb[0].mxu0
      %v1626 = vadd.f32 0.0, %v1625
      %1627 = vmatprep.mubr.bf16.mxu0 %v1263
      %1628 = vmatmul.mubr.bf16.gmra.mrb[0].mxu0 %v1255
      %v1629 = vpop.f32.mrb[0].mxu0
      %v1630 = vadd.f32 0.0, %v1629
      %v1631 = vpop.f32.mrb[0].mxu0
      %v1632 = vadd.f32 0.0, %v1631
      %v1633 = vpop.f32.mrb[0].mxu0
      %v1634 = vadd.f32 0.0, %v1633
      %v1635 = vpop.f32.mrb[0].mxu0
      %v1636 = vadd.f32 0.0, %v1635
      %1637 = vmatprep.mubr.bf16.mxu0 %v1277
      %1638 = vmatmul.mubr.bf16.gmra.mrb[0].mxu0 %v1274
      %v1639 = vpop.f32.mrb[0].mxu0
      %v1640 = vadd.f32 0.0, %v1639
      %v1641 = vpop.f32.mrb[0].mxu0
      %v1642 = vadd.f32 0.0, %v1641
      %v1643 = vpop.f32.mrb[0].mxu0
      %v1644 = vpop.f32.mrb[0].mxu0
      %1645 = vdwg.mxu0
      %1646 = vmatprep.subr.bf16.mxu0 %v1516
      %1647 = vmatpush1.bf16.msra.mxu0 %v1515
      %1648 = vmatprep.subr.bf16.mxu0 %v1519
      %1649 = vmatpush1.bf16.msra.mxu0 %v1518
      %1650 = vmatprep.subr.bf16.mxu0 0
      %1651 = vmatpush1.bf16.msra.mxu0 0
      %1652 = vmatprep.subr.bf16.mxu0 0
      %1653 = vmatpush1.bf16.msra.mxu0 0
      %1654 = vmatprep.subr.bf16.mxu0 0
      %1655 = vmatpush1.bf16.msra.mxu0 0
      %1656 = vmatprep.subr.bf16.mxu0 0
      %1657 = vmatpush1.bf16.msra.mxu0 0
      %1658 = vmatprep.subr.bf16.mxu0 0
      %1659 = vmatpush1.bf16.msra.mxu0 0
      %1660 = vmatprep.subr.bf16.mxu0 0
      %1661 = vmatpush1.bf16.msra.mxu0 0
      %1662 = vmatprep.subr.bf16.mxu0 0
      %1663 = vmatpush1.bf16.msra.mxu0 0
      %1664 = vmatprep.subr.bf16.mxu0 0
      %1665 = vmatpush1.bf16.msra.mxu0 0
      %1666 = vmatprep.subr.bf16.mxu0 0
      %1667 = vmatpush1.bf16.msra.mxu0 0
      %1668 = vmatprep.subr.bf16.mxu0 0
      %1669 = vmatpush1.bf16.msra.mxu0 0
      %1670 = vmatprep.subr.bf16.mxu0 0
      %1671 = vmatpush1.bf16.msra.mxu0 0
      %1672 = vmatprep.subr.bf16.mxu0 0
      %1673 = vmatpush1.bf16.msra.mxu0 0
      %1674 = vmatprep.subr.bf16.mxu0 0
      %1675 = vmatpush1.bf16.msra.mxu0 0
      %1676 = vmatprep.subr.bf16.mxu0 0
      %1677 = vmatpush1.bf16.msra.mxu0 0
      %1678 = vmatprep.mubr.bf16.mxu0 0
      %1679 = vmatmul.mubr.bf16.gmra.mrb[0].mxu0 %v1577
      %v1680 = vpop.f32.mrb[0].mxu0
      %v1681 = vadd.f32 %v1620, %v1680
      %v1682 = vpop.f32.mrb[0].mxu0
      %v1683 = vadd.f32 %v1622, %v1682
      %v1684 = vpop.f32.mrb[0].mxu0
      %v1685 = vadd.f32 %v1624, %v1684
      %v1686 = vpop.f32.mrb[0].mxu0
      %v1687 = vadd.f32 %v1626, %v1686
      %1688 = vmatprep.mubr.bf16.mxu0 0
      %1689 = vmatmul.mubr.bf16.gmra.mrb[0].mxu0 %v1580
      %v1690 = vpop.f32.mrb[0].mxu0
      %v1691 = vadd.f32 %v1630, %v1690
      %v1692 = vpop.f32.mrb[0].mxu0
      %v1693 = vadd.f32 %v1632, %v1692
      %v1694 = vpop.f32.mrb[0].mxu0
      %v1695 = vadd.f32 %v1634, %v1694
      %v1696 = vpop.f32.mrb[0].mxu0
      %v1697 = vadd.f32 %v1636, %v1696
      %1698 = vmatprep.mubr.bf16.mxu0 0
      %1699 = vmatmul.mubr.bf16.gmra.mrb[0].mxu0 %v1583
      %v1700 = vpop.f32.mrb[0].mxu0
      %v1701 = vadd.f32 %v1640, %v1700
      %v1702 = vpop.f32.mrb[0].mxu0
      %v1703 = vadd.f32 %v1642, %v1702
      %v1704 = vpop.f32.mrb[0].mxu0
      %v1705 = vpop.f32.mrb[0].mxu0
      %1706 = vdwg.mxu0
      %1707 = vmatprep.subr.bf16.mxu0 0
      %1708 = vmatpush1.bf16.msra.mxu0 %v1469
      %1709 = vmatprep.subr.bf16.mxu0 0
      %1710 = vmatpush1.bf16.msra.mxu0 %v1472
      %1711 = vmatprep.subr.bf16.mxu0 0
      %1712 = vmatpush1.bf16.msra.mxu0 %v1475
      %1713 = vmatprep.subr.bf16.mxu0 0
      %1714 = vmatpush1.bf16.msra.mxu0 %v1478
      %1715 = vmatprep.subr.bf16.mxu0 0
      %1716 = vmatpush1.bf16.msra.mxu0 %v1481
      %1717 = vmatprep.subr.bf16.mxu0 0
      %1718 = vmatpush1.bf16.msra.mxu0 %v1484
      %1719 = vmatprep.subr.bf16.mxu0 0
      %1720 = vmatpush1.bf16.msra.mxu0 %v1487
      %1721 = vmatprep.subr.bf16.mxu0 0
      %1722 = vmatpush1.bf16.msra.mxu0 %v1490
      %1723 = vmatprep.subr.bf16.mxu0 0
      %1724 = vmatpush1.bf16.msra.mxu0 %v1493
      %1725 = vmatprep.subr.bf16.mxu0 0
      %1726 = vmatpush1.bf16.msra.mxu0 %v1496
      %1727 = vmatprep.subr.bf16.mxu0 0
      %1728 = vmatpush1.bf16.msra.mxu0 %v1499
      %1729 = vmatprep.subr.bf16.mxu0 0
      %1730 = vmatpush1.bf16.msra.mxu0 %v1502
      %1731 = vmatprep.subr.bf16.mxu0 0
      %1732 = vmatpush1.bf16.msra.mxu0 %v1505
      %1733 = vmatprep.subr.bf16.mxu0 0
      %1734 = vmatpush1.bf16.msra.mxu0 %v1508
      %1735 = vmatprep.subr.bf16.mxu0 0
      %1736 = vmatpush1.bf16.msra.mxu0 %v1511
      %1737 = vmatprep.subr.bf16.mxu0 0
      %1738 = vmatpush1.bf16.msra.mxu0 %v1514
      %1739 = vmatprep.mubr.bf16.mxu0 %v1235
      %1740 = vmatmul.mubr.bf16.gmra.mrb[0].mxu0 %v1223
      %v1741 = vpop.f32.mrb[0].mxu0
      %v1742 = vadd.f32 0.0, %v1741
      %v1743 = vpop.f32.mrb[0].mxu0
      %v1744 = vpop.f32.mrb[0].mxu0
      %v1745 = vadd.f32 0.0, %v1744
      %v1746 = vpop.f32.mrb[0].mxu0
      %1747 = vmatprep.mubr.bf16.mxu0 %v1263
      %1748 = vmatmul.mubr.bf16.gmra.mrb[0].mxu0 %v1255
      %v1749 = vpop.f32.mrb[0].mxu0
      %v1750 = vadd.f32 0.0, %v1749
      %v1751 = vpop.f32.mrb[0].mxu0
      %v1752 = vpop.f32.mrb[0].mxu0
      %v1753 = vadd.f32 0.0, %v1752
      %v1754 = vpop.f32.mrb[0].mxu0
      %1755 = vmatprep.mubr.bf16.mxu0 %v1277
      %1756 = vmatmul.mubr.bf16.gmra.mrb[0].mxu0 %v1274
      %v1757 = vpop.f32.mrb[0].mxu0
      %v1758 = vadd.f32 0.0, %v1757
      %v1759 = vpop.f32.mrb[0].mxu0
      %v1760 = vpop.f32.mrb[0].mxu0
      %v1761 = vpop.f32.mrb[0].mxu0
      %1762 = vdwg.mxu0
      %1763 = vmatprep.subr.bf16.mxu0 0
      %1764 = vmatpush1.bf16.msra.mxu0 %v1517
      %1765 = vmatprep.subr.bf16.mxu0 0
      %1766 = vmatpush1.bf16.msra.mxu0 %v1520
      %1767 = vmatprep.subr.bf16.mxu0 0
      %1768 = vmatpush1.bf16.msra.mxu0 0
      %1769 = vmatprep.subr.bf16.mxu0 0
      %1770 = vmatpush1.bf16.msra.mxu0 0
      %1771 = vmatprep.subr.bf16.mxu0 0
      %1772 = vmatpush1.bf16.msra.mxu0 0
      %1773 = vmatprep.subr.bf16.mxu0 0
      %1774 = vmatpush1.bf16.msra.mxu0 0
      %1775 = vmatprep.subr.bf16.mxu0 0
      %1776 = vmatpush1.bf16.msra.mxu0 0
      %1777 = vmatprep.subr.bf16.mxu0 0
      %1778 = vmatpush1.bf16.msra.mxu0 0
      %1779 = vmatprep.subr.bf16.mxu0 0
      %1780 = vmatpush1.bf16.msra.mxu0 0
      %1781 = vmatprep.subr.bf16.mxu0 0
      %1782 = vmatpush1.bf16.msra.mxu0 0
      %1783 = vmatprep.subr.bf16.mxu0 0
      %1784 = vmatpush1.bf16.msra.mxu0 0
      %1785 = vmatprep.subr.bf16.mxu0 0
      %1786 = vmatpush1.bf16.msra.mxu0 0
      %1787 = vmatprep.subr.bf16.mxu0 0
      %1788 = vmatpush1.bf16.msra.mxu0 0
      %1789 = vmatprep.subr.bf16.mxu0 0
      %1790 = vmatpush1.bf16.msra.mxu0 0
      %1791 = vmatprep.subr.bf16.mxu0 0
      %1792 = vmatpush1.bf16.msra.mxu0 0
      %1793 = vmatprep.subr.bf16.mxu0 0
      %1794 = vmatpush1.bf16.msra.mxu0 0
      %1795 = vmatprep.mubr.bf16.mxu0 0
      %1796 = vmatmul.mubr.bf16.gmra.mrb[0].mxu0 %v1577
      %v1797 = vpop.f32.mrb[0].mxu0
      %v1798 = vadd.f32 %v1742, %v1797
      %v1799 = vpop.f32.mrb[0].mxu0
      %v1800 = vpop.f32.mrb[0].mxu0
      %v1801 = vadd.f32 %v1745, %v1800
      %v1802 = vpop.f32.mrb[0].mxu0
      %1803 = vmatprep.mubr.bf16.mxu0 0
      %1804 = vmatmul.mubr.bf16.gmra.mrb[0].mxu0 %v1580
      %v1805 = vpop.f32.mrb[0].mxu0
      %v1806 = vadd.f32 %v1750, %v1805
      %v1807 = vpop.f32.mrb[0].mxu0
      %v1808 = vpop.f32.mrb[0].mxu0
      %v1809 = vadd.f32 %v1753, %v1808
      %v1810 = vpop.f32.mrb[0].mxu0
      %1811 = vmatprep.mubr.bf16.mxu0 0
      %1812 = vmatmul.mubr.bf16.gmra.mrb[0].mxu0 %v1583
      %v1813 = vpop.f32.mrb[0].mxu0
      %v1814 = vadd.f32 %v1758, %v1813
      %v1815 = vpop.f32.mrb[0].mxu0
      %v1816 = vpop.f32.mrb[0].mxu0
      %v1817 = vpop.f32.mrb[0].mxu0
      %1818 = vdwg.mxu0
      %v1821 = vunpack.c.l.b16 %v1028
      %v1822 = vunpack.c.h.b16 %v1028
      %v1823 = vunpack.c.l.b16 %v1029
      %v1824 = vpack.c.b16 %v1821, %v1821
      %v1825 = vpack.c.b16 %v1822, %v1822
      %v1826 = vpack.c.b16 %v1823, %v1823
      %v1905 = vunpack.c.l.b16 %v1030
      %v1906 = vunpack.c.h.b16 %v1030
      %v1907 = vunpack.c.l.b16 %v1031
      %v1908 = vunpack.c.l.b16 %v1032
      %v1909 = vunpack.c.h.b16 %v1032
      %v1910 = vunpack.c.l.b16 %v1033
      %v1911 = vunpack.c.l.b16 %v1034
      %v1912 = vunpack.c.h.b16 %v1034
      %v1913 = vunpack.c.l.b16 %v1035
      %v1914 = vunpack.c.l.b16 %v1036
      %v1915 = vunpack.c.h.b16 %v1036
      %v1916 = vunpack.c.l.b16 %v1037
      %v1917 = vunpack.c.l.b16 %v1038
      %v1918 = vunpack.c.h.b16 %v1038
      %v1919 = vunpack.c.l.b16 %v1039
      %v1920 = vunpack.c.l.b16 %v1040
      %v1921 = vunpack.c.h.b16 %v1040
      %v1922 = vunpack.c.l.b16 %v1041
      %v1923 = vunpack.c.l.b16 %v1042
      %v1924 = vunpack.c.h.b16 %v1042
      %v1925 = vunpack.c.l.b16 %v1043
      %v1926 = vunpack.c.l.b16 %v1044
      %v1927 = vunpack.c.h.b16 %v1044
      %v1928 = vunpack.c.l.b16 %v1045
      %v1929 = vunpack.c.l.b16 %v1046
      %v1930 = vunpack.c.h.b16 %v1046
      %v1931 = vunpack.c.l.b16 %v1047
      %v1932 = vunpack.c.l.b16 %v1048
      %v1933 = vunpack.c.h.b16 %v1048
      %v1934 = vunpack.c.l.b16 %v1049
      %v1935 = vunpack.c.l.b16 %v1050
      %v1936 = vunpack.c.h.b16 %v1050
      %v1937 = vunpack.c.l.b16 %v1051
      %v1938 = vunpack.c.l.b16 %v1052
      %v1939 = vunpack.c.h.b16 %v1052
      %v1940 = vunpack.c.l.b16 %v1053
      %v1941 = vunpack.c.l.b16 %v1054
      %v1942 = vunpack.c.h.b16 %v1054
      %v1943 = vunpack.c.l.b16 %v1055
      %v1944 = vunpack.c.l.b16 %v1056
      %v1945 = vunpack.c.h.b16 %v1056
      %v1946 = vunpack.c.l.b16 %v1057
      %v1947 = vunpack.c.l.b16 %v1058
      %v1948 = vunpack.c.h.b16 %v1058
      %v1949 = vunpack.c.l.b16 %v1059
      %v1950 = vunpack.c.l.b16 %v1060
      %v1951 = vunpack.c.h.b16 %v1060
      %v1952 = vunpack.c.l.b16 %v1061
      %v1953 = vunpack.c.l.b16 %v1062
      %v1954 = vunpack.c.h.b16 %v1062
      %v1955 = vunpack.c.l.b16 %v1063
      %v1956 = vunpack.c.l.b16 %v1064
      %v1957 = vunpack.c.h.b16 %v1064
      %v1958 = vunpack.c.l.b16 %v1065
      %v1959 = vunpack.c.l.b16 %v1066
      %v1960 = vunpack.c.h.b16 %v1066
      %v1961 = vunpack.c.l.b16 %v1067
      %v1962 = vunpack.c.l.b16 %v1068
      %v1963 = vunpack.c.h.b16 %v1068
      %v1964 = vunpack.c.l.b16 %v1069
      %v1965 = vunpack.c.l.b16 %v1070
      %v1966 = vunpack.c.h.b16 %v1070
      %v1967 = vunpack.c.l.b16 %v1071
      %v1968 = vunpack.c.l.b16 %v1072
      %v1969 = vunpack.c.h.b16 %v1072
      %v1970 = vunpack.c.l.b16 %v1073
      %v1971 = vunpack.c.l.b16 %v1074
      %v1972 = vunpack.c.h.b16 %v1074
      %v1973 = vunpack.c.l.b16 %v1075
      %v1974 = vunpack.c.l.b16 %v1076
      %v1975 = vunpack.c.h.b16 %v1076
      %v1976 = vunpack.c.l.b16 %v1077
      %v1977 = vunpack.c.l.b16 %v1078
      %v1978 = vunpack.c.h.b16 %v1078
      %v1979 = vunpack.c.l.b16 %v1079
      %v1980 = vunpack.c.l.b16 %v1080
      %v1981 = vunpack.c.h.b16 %v1080
      %v1982 = vunpack.c.l.b16 %v1081
      %v1983 = vunpack.c.l.b16 %v1082
      %v1984 = vunpack.c.h.b16 %v1082
      %v1985 = vunpack.c.l.b16 %v1083
      %v1986 = vunpack.c.l.b16 %v1084
      %v1987 = vunpack.c.h.b16 %v1084
      %v1988 = vunpack.c.l.b16 %v1085
      %v1989 = vunpack.c.l.b16 %v1086
      %v1990 = vunpack.c.h.b16 %v1086
      %v1991 = vunpack.c.l.b16 %v1087
      %v1992 = vunpack.c.l.b16 %v1088
      %v1993 = vunpack.c.h.b16 %v1088
      %v1994 = vunpack.c.l.b16 %v1089
      %v1995 = vunpack.c.l.b16 %v1090
      %v1996 = vunpack.c.h.b16 %v1090
      %v1997 = vunpack.c.l.b16 %v1091
      %v1998 = vunpack.c.l.b16 %v1092
      %v1999 = vunpack.c.h.b16 %v1092
      %v2000 = vunpack.c.l.b16 %v1093
      %v2001 = vunpack.c.l.b16 %v1094
      %v2002 = vunpack.c.h.b16 %v1094
      %v2003 = vunpack.c.l.b16 %v1095
      %v2004 = vunpack.c.l.b16 %v1096
      %v2005 = vunpack.c.h.b16 %v1096
      %v2006 = vunpack.c.l.b16 %v1097
      %v2007 = vunpack.c.l.b16 %v1098
      %v2008 = vunpack.c.h.b16 %v1098
      %v2009 = vunpack.c.l.b16 %v1099
      %v2010 = vunpack.c.l.b16 %v1100
      %v2011 = vunpack.c.h.b16 %v1100
      %v2012 = vunpack.c.l.b16 %v1101
      %v2013 = vpack.c.b16 %v1908, %v1905
      %v2014 = vpack.c.b16 %v1909, %v1906
      %v2015 = vpack.c.b16 %v1910, %v1907
      %v2016 = vpack.c.b16 %v1914, %v1911
      %v2017 = vpack.c.b16 %v1915, %v1912
      %v2018 = vpack.c.b16 %v1916, %v1913
      %v2019 = vpack.c.b16 %v1920, %v1917
      %v2020 = vpack.c.b16 %v1921, %v1918
      %v2021 = vpack.c.b16 %v1922, %v1919
      %v2022 = vpack.c.b16 %v1926, %v1923
      %v2023 = vpack.c.b16 %v1927, %v1924
      %v2024 = vpack.c.b16 %v1928, %v1925
      %v2025 = vpack.c.b16 %v1932, %v1929
      %v2026 = vpack.c.b16 %v1933, %v1930
      %v2027 = vpack.c.b16 %v1934, %v1931
      %v2028 = vpack.c.b16 %v1938, %v1935
      %v2029 = vpack.c.b16 %v1939, %v1936
      %v2030 = vpack.c.b16 %v1940, %v1937
      %v2031 = vpack.c.b16 %v1944, %v1941
      %v2032 = vpack.c.b16 %v1945, %v1942
      %v2033 = vpack.c.b16 %v1946, %v1943
      %v2034 = vpack.c.b16 %v1950, %v1947
      %v2035 = vpack.c.b16 %v1951, %v1948
      %v2036 = vpack.c.b16 %v1952, %v1949
      %v2037 = vpack.c.b16 %v1956, %v1953
      %v2038 = vpack.c.b16 %v1957, %v1954
      %v2039 = vpack.c.b16 %v1958, %v1955
      %v2040 = vpack.c.b16 %v1962, %v1959
      %v2041 = vpack.c.b16 %v1963, %v1960
      %v2042 = vpack.c.b16 %v1964, %v1961
      %v2043 = vpack.c.b16 %v1968, %v1965
      %v2044 = vpack.c.b16 %v1969, %v1966
      %v2045 = vpack.c.b16 %v1970, %v1967
      %v2046 = vpack.c.b16 %v1974, %v1971
      %v2047 = vpack.c.b16 %v1975, %v1972
      %v2048 = vpack.c.b16 %v1976, %v1973
      %v2049 = vpack.c.b16 %v1980, %v1977
      %v2050 = vpack.c.b16 %v1981, %v1978
      %v2051 = vpack.c.b16 %v1982, %v1979
      %v2052 = vpack.c.b16 %v1986, %v1983
      %v2053 = vpack.c.b16 %v1987, %v1984
      %v2054 = vpack.c.b16 %v1988, %v1985
      %v2055 = vpack.c.b16 %v1992, %v1989
      %v2056 = vpack.c.b16 %v1993, %v1990
      %v2057 = vpack.c.b16 %v1994, %v1991
      %v2058 = vpack.c.b16 %v1998, %v1995
      %v2059 = vpack.c.b16 %v1999, %v1996
      %v2060 = vpack.c.b16 %v2000, %v1997
      %v2061 = vpack.c.b16 %v2004, %v2001
      %v2062 = vpack.c.b16 %v2005, %v2002
      %v2063 = vpack.c.b16 %v2006, %v2003
      %v2064 = vpack.c.b16 %v2010, %v2007
      %v2065 = vpack.c.b16 %v2011, %v2008
      %v2066 = vpack.c.b16 %v2012, %v2009
      %v2121 = vsel %vm1575, %v1204, 0
      %v2123 = vsel %vm1575, %v1207, 0
      %v2126 = vsel %vm1575, %v1826, 0
      %2128 = vmatprep.subr.bf16.mxu0 %v2014
      %2129 = vmatpush1.bf16.msra.mxu0 %v2013
      %2130 = vmatprep.subr.bf16.mxu0 %v2017
      %2131 = vmatpush1.bf16.msra.mxu0 %v2016
      %2132 = vmatprep.subr.bf16.mxu0 %v2020
      %2133 = vmatpush1.bf16.msra.mxu0 %v2019
      %2134 = vmatprep.subr.bf16.mxu0 %v2023
      %2135 = vmatpush1.bf16.msra.mxu0 %v2022
      %2136 = vmatprep.subr.bf16.mxu0 %v2026
      %2137 = vmatpush1.bf16.msra.mxu0 %v2025
      %2138 = vmatprep.subr.bf16.mxu0 %v2029
      %2139 = vmatpush1.bf16.msra.mxu0 %v2028
      %2140 = vmatprep.subr.bf16.mxu0 %v2032
      %2141 = vmatpush1.bf16.msra.mxu0 %v2031
      %2142 = vmatprep.subr.bf16.mxu0 %v2035
      %2143 = vmatpush1.bf16.msra.mxu0 %v2034
      %2144 = vmatprep.subr.bf16.mxu0 %v2038
      %2145 = vmatpush1.bf16.msra.mxu0 %v2037
      %2146 = vmatprep.subr.bf16.mxu0 %v2041
      %2147 = vmatpush1.bf16.msra.mxu0 %v2040
      %2148 = vmatprep.subr.bf16.mxu0 %v2044
      %2149 = vmatpush1.bf16.msra.mxu0 %v2043
      %2150 = vmatprep.subr.bf16.mxu0 %v2047
      %2151 = vmatpush1.bf16.msra.mxu0 %v2046
      %2152 = vmatprep.subr.bf16.mxu0 %v2050
      %2153 = vmatpush1.bf16.msra.mxu0 %v2049
      %2154 = vmatprep.subr.bf16.mxu0 %v2053
      %2155 = vmatpush1.bf16.msra.mxu0 %v2052
      %2156 = vmatprep.subr.bf16.mxu0 %v2056
      %2157 = vmatpush1.bf16.msra.mxu0 %v2055
      %2158 = vmatprep.subr.bf16.mxu0 %v2059
      %2159 = vmatpush1.bf16.msra.mxu0 %v2058
      %2160 = vmatprep.mubr.bf16.mxu0 %v1203
      %2161 = vmatmul.mubr.bf16.gmra.mrb[0].mxu0 %v1202
      %v2162 = vpop.f32.mrb[0].mxu0
      %v2163 = vadd.f32 %v1681, %v2162
      %v2164 = vpop.f32.mrb[0].mxu0
      %v2165 = vadd.f32 %v1683, %v2164
      %v2166 = vpop.f32.mrb[0].mxu0
      %v2167 = vadd.f32 %v1685, %v2166
      %v2168 = vpop.f32.mrb[0].mxu0
      %v2169 = vadd.f32 %v1687, %v2168
      %2170 = vmatprep.mubr.bf16.mxu0 %v1206
      %2171 = vmatmul.mubr.bf16.gmra.mrb[0].mxu0 %v1205
      %v2172 = vpop.f32.mrb[0].mxu0
      %v2173 = vadd.f32 %v1691, %v2172
      %v2174 = vpop.f32.mrb[0].mxu0
      %v2175 = vadd.f32 %v1693, %v2174
      %v2176 = vpop.f32.mrb[0].mxu0
      %v2177 = vadd.f32 %v1695, %v2176
      %v2178 = vpop.f32.mrb[0].mxu0
      %v2179 = vadd.f32 %v1697, %v2178
      %2180 = vmatprep.mubr.bf16.mxu0 %v1825
      %2181 = vmatmul.mubr.bf16.gmra.mrb[0].mxu0 %v1824
      %v2182 = vpop.f32.mrb[0].mxu0
      %v2183 = vadd.f32 %v1701, %v2182
      %v2184 = vpop.f32.mrb[0].mxu0
      %v2185 = vadd.f32 %v1703, %v2184
      %v2186 = vpop.f32.mrb[0].mxu0
      %v2187 = vpop.f32.mrb[0].mxu0
      %2188 = vdwg.mxu0
      %2189 = vmatprep.subr.bf16.mxu0 %v2062
      %2190 = vmatpush1.bf16.msra.mxu0 %v2061
      %2191 = vmatprep.subr.bf16.mxu0 %v2065
      %2192 = vmatpush1.bf16.msra.mxu0 %v2064
      %2193 = vmatprep.subr.bf16.mxu0 0
      %2194 = vmatpush1.bf16.msra.mxu0 0
      %2195 = vmatprep.subr.bf16.mxu0 0
      %2196 = vmatpush1.bf16.msra.mxu0 0
      %2197 = vmatprep.subr.bf16.mxu0 0
      %2198 = vmatpush1.bf16.msra.mxu0 0
      %2199 = vmatprep.subr.bf16.mxu0 0
      %2200 = vmatpush1.bf16.msra.mxu0 0
      %2201 = vmatprep.subr.bf16.mxu0 0
      %2202 = vmatpush1.bf16.msra.mxu0 0
      %2203 = vmatprep.subr.bf16.mxu0 0
      %2204 = vmatpush1.bf16.msra.mxu0 0
      %2205 = vmatprep.subr.bf16.mxu0 0
      %2206 = vmatpush1.bf16.msra.mxu0 0
      %2207 = vmatprep.subr.bf16.mxu0 0
      %2208 = vmatpush1.bf16.msra.mxu0 0
      %2209 = vmatprep.subr.bf16.mxu0 0
      %2210 = vmatpush1.bf16.msra.mxu0 0
      %2211 = vmatprep.subr.bf16.mxu0 0
      %2212 = vmatpush1.bf16.msra.mxu0 0
      %2213 = vmatprep.subr.bf16.mxu0 0
      %2214 = vmatpush1.bf16.msra.mxu0 0
      %2215 = vmatprep.subr.bf16.mxu0 0
      %2216 = vmatpush1.bf16.msra.mxu0 0
      %2217 = vmatprep.subr.bf16.mxu0 0
      %2218 = vmatpush1.bf16.msra.mxu0 0
      %2219 = vmatprep.subr.bf16.mxu0 0
      %2220 = vmatpush1.bf16.msra.mxu0 0
      %2221 = vmatprep.mubr.bf16.mxu0 0
      %2222 = vmatmul.mubr.bf16.gmra.mrb[0].mxu0 %v2121
      %v2223 = vpop.f32.mrb[0].mxu0
      %v2224 = vadd.f32 %v2163, %v2223
      %v2225 = vpop.f32.mrb[0].mxu0
      %v2226 = vadd.f32 %v2165, %v2225
      %v2227 = vpop.f32.mrb[0].mxu0
      %v2228 = vadd.f32 %v2167, %v2227
      %v2229 = vpop.f32.mrb[0].mxu0
      %v2230 = vadd.f32 %v2169, %v2229
      %2231 = vmatprep.mubr.bf16.mxu0 0
      %2232 = vmatmul.mubr.bf16.gmra.mrb[0].mxu0 %v2123
      %v2233 = vpop.f32.mrb[0].mxu0
      %v2234 = vadd.f32 %v2173, %v2233
      %v2235 = vpop.f32.mrb[0].mxu0
      %v2236 = vadd.f32 %v2175, %v2235
      %v2237 = vpop.f32.mrb[0].mxu0
      %v2238 = vadd.f32 %v2177, %v2237
      %v2239 = vpop.f32.mrb[0].mxu0
      %v2240 = vadd.f32 %v2179, %v2239
      %2241 = vmatprep.mubr.bf16.mxu0 0
      %2242 = vmatmul.mubr.bf16.gmra.mrb[0].mxu0 %v2126
      %v2243 = vpop.f32.mrb[0].mxu0
      %v2244 = vadd.f32 %v2183, %v2243
      %v2245 = vpop.f32.mrb[0].mxu0
      %v2246 = vadd.f32 %v2185, %v2245
      %v2247 = vpop.f32.mrb[0].mxu0
      %v2248 = vpop.f32.mrb[0].mxu0
      %2249 = vdwg.mxu0
      %2250 = vmatprep.subr.bf16.mxu0 0
      %2251 = vmatpush1.bf16.msra.mxu0 %v2015
      %2252 = vmatprep.subr.bf16.mxu0 0
      %2253 = vmatpush1.bf16.msra.mxu0 %v2018
      %2254 = vmatprep.subr.bf16.mxu0 0
      %2255 = vmatpush1.bf16.msra.mxu0 %v2021
      %2256 = vmatprep.subr.bf16.mxu0 0
      %2257 = vmatpush1.bf16.msra.mxu0 %v2024
      %2258 = vmatprep.subr.bf16.mxu0 0
      %2259 = vmatpush1.bf16.msra.mxu0 %v2027
      %2260 = vmatprep.subr.bf16.mxu0 0
      %2261 = vmatpush1.bf16.msra.mxu0 %v2030
      %2262 = vmatprep.subr.bf16.mxu0 0
      %2263 = vmatpush1.bf16.msra.mxu0 %v2033
      %2264 = vmatprep.subr.bf16.mxu0 0
      %2265 = vmatpush1.bf16.msra.mxu0 %v2036
      %2266 = vmatprep.subr.bf16.mxu0 0
      %2267 = vmatpush1.bf16.msra.mxu0 %v2039
      %2268 = vmatprep.subr.bf16.mxu0 0
      %2269 = vmatpush1.bf16.msra.mxu0 %v2042
      %2270 = vmatprep.subr.bf16.mxu0 0
      %2271 = vmatpush1.bf16.msra.mxu0 %v2045
      %2272 = vmatprep.subr.bf16.mxu0 0
      %2273 = vmatpush1.bf16.msra.mxu0 %v2048
      %2274 = vmatprep.subr.bf16.mxu0 0
      %2275 = vmatpush1.bf16.msra.mxu0 %v2051
      %2276 = vmatprep.subr.bf16.mxu0 0
      %2277 = vmatpush1.bf16.msra.mxu0 %v2054
      %2278 = vmatprep.subr.bf16.mxu0 0
      %2279 = vmatpush1.bf16.msra.mxu0 %v2057
      %2280 = vmatprep.subr.bf16.mxu0 0
      %2281 = vmatpush1.bf16.msra.mxu0 %v2060
      %2282 = vmatprep.mubr.bf16.mxu0 %v1203
      %2283 = vmatmul.mubr.bf16.gmra.mrb[0].mxu0 %v1202
      %v2284 = vpop.f32.mrb[0].mxu0
      %v2285 = vadd.f32 %v1798, %v2284
      %v2286 = vpop.f32.mrb[0].mxu0
      %v2287 = vpop.f32.mrb[0].mxu0
      %v2288 = vadd.f32 %v1801, %v2287
      %v2289 = vpop.f32.mrb[0].mxu0
      %2290 = vmatprep.mubr.bf16.mxu0 %v1206
      %2291 = vmatmul.mubr.bf16.gmra.mrb[0].mxu0 %v1205
      %v2292 = vpop.f32.mrb[0].mxu0
      %v2293 = vadd.f32 %v1806, %v2292
      %v2294 = vpop.f32.mrb[0].mxu0
      %v2295 = vpop.f32.mrb[0].mxu0
      %v2296 = vadd.f32 %v1809, %v2295
      %v2297 = vpop.f32.mrb[0].mxu0
      %2298 = vmatprep.mubr.bf16.mxu0 %v1825
      %2299 = vmatmul.mubr.bf16.gmra.mrb[0].mxu0 %v1824
      %v2300 = vpop.f32.mrb[0].mxu0
      %v2301 = vadd.f32 %v1814, %v2300
      %v2302 = vpop.f32.mrb[0].mxu0
      %v2303 = vpop.f32.mrb[0].mxu0
      %v2304 = vpop.f32.mrb[0].mxu0
      %2305 = vdwg.mxu0
      %2306 = vmatprep.subr.bf16.mxu0 0
      %2307 = vmatpush1.bf16.msra.mxu0 %v2063
      %2308 = vmatprep.subr.bf16.mxu0 0
      %2309 = vmatpush1.bf16.msra.mxu0 %v2066
      %2310 = vmatprep.subr.bf16.mxu0 0
      %2311 = vmatpush1.bf16.msra.mxu0 0
      %2312 = vmatprep.subr.bf16.mxu0 0
      %2313 = vmatpush1.bf16.msra.mxu0 0
      %2314 = vmatprep.subr.bf16.mxu0 0
      %2315 = vmatpush1.bf16.msra.mxu0 0
      %2316 = vmatprep.subr.bf16.mxu0 0
      %2317 = vmatpush1.bf16.msra.mxu0 0
      %2318 = vmatprep.subr.bf16.mxu0 0
      %2319 = vmatpush1.bf16.msra.mxu0 0
      %2320 = vmatprep.subr.bf16.mxu0 0
      %2321 = vmatpush1.bf16.msra.mxu0 0
      %2322 = vmatprep.subr.bf16.mxu0 0
      %2323 = vmatpush1.bf16.msra.mxu0 0
      %2324 = vmatprep.subr.bf16.mxu0 0
      %2325 = vmatpush1.bf16.msra.mxu0 0
      %2326 = vmatprep.subr.bf16.mxu0 0
      %2327 = vmatpush1.bf16.msra.mxu0 0
      %2328 = vmatprep.subr.bf16.mxu0 0
      %2329 = vmatpush1.bf16.msra.mxu0 0
      %2330 = vmatprep.subr.bf16.mxu0 0
      %2331 = vmatpush1.bf16.msra.mxu0 0
      %2332 = vmatprep.subr.bf16.mxu0 0
      %2333 = vmatpush1.bf16.msra.mxu0 0
      %2334 = vmatprep.subr.bf16.mxu0 0
      %2335 = vmatpush1.bf16.msra.mxu0 0
      %2336 = vmatprep.subr.bf16.mxu0 0
      %2337 = vmatpush1.bf16.msra.mxu0 0
      %2338 = vmatprep.mubr.bf16.mxu0 0
      %2339 = vmatmul.mubr.bf16.gmra.mrb[0].mxu0 %v2121
      %v2340 = vpop.f32.mrb[0].mxu0
      %v2341 = vadd.f32 %v2285, %v2340
      %v2342 = vpop.f32.mrb[0].mxu0
      %v2343 = vpop.f32.mrb[0].mxu0
      %v2344 = vadd.f32 %v2288, %v2343
      %v2345 = vpop.f32.mrb[0].mxu0
      %2346 = vmatprep.mubr.bf16.mxu0 0
      %2347 = vmatmul.mubr.bf16.gmra.mrb[0].mxu0 %v2123
      %v2348 = vpop.f32.mrb[0].mxu0
      %v2349 = vadd.f32 %v2293, %v2348
      %v2350 = vpop.f32.mrb[0].mxu0
      %v2351 = vpop.f32.mrb[0].mxu0
      %v2352 = vadd.f32 %v2296, %v2351
      %v2353 = vpop.f32.mrb[0].mxu0
      %2354 = vmatprep.mubr.bf16.mxu0 0
      %2355 = vmatmul.mubr.bf16.gmra.mrb[0].mxu0 %v2126
      %v2356 = vpop.f32.mrb[0].mxu0
      %v2357 = vadd.f32 %v2301, %v2356
      %v2358 = vpop.f32.mrb[0].mxu0
      %v2359 = vpop.f32.mrb[0].mxu0
      %v2360 = vpop.f32.mrb[0].mxu0
      %2361 = vdwg.mxu0
      %v2362 = vld [vmem:[#allocation2] sm:$0xee]
      %v2363 = vld [vmem:[#allocation2 + $0x8] sm:$0xe]
      %s2364 = scalar_lea.vmem %s2, 864
      %v2365 = vld [vmem:[%s2364] sm:$0xff]
      %v2366 = vld [vmem:[%s2364 + $0x8] sm:$0xf]
      %v2367 = vld [vmem:[%s2364 + $0xc] sm:$0xff]
      %v2368 = vld [vmem:[%s2364 + $0x14] sm:$0xf]
      %v2369 = vld [vmem:[%s2364 + $0x18] sm:$0xff]
      %v2370 = vld [vmem:[%s2364 + $0x20] sm:$0xf]
      %v2371 = vld [vmem:[%s2364 + $0x24] sm:$0xff]
      %v2372 = vld [vmem:[%s2364 + $0x2c] sm:$0xf]
      %v2373 = vld [vmem:[%s2364 + $0x30] sm:$0xff]
      %v2374 = vld [vmem:[%s2364 + $0x38] sm:$0xf]
      %v2375 = vld [vmem:[%s2364 + $0x3c] sm:$0xff]
      %v2376 = vld [vmem:[%s2364 + $0x44] sm:$0xf]
      %v2377 = vld [vmem:[%s2364 + $0x48] sm:$0xff]
      %v2378 = vld [vmem:[%s2364 + $0x50] sm:$0xf]
      %v2379 = vld [vmem:[%s2364 + $0x54] sm:$0xff]
      %v2380 = vld [vmem:[%s2364 + $0x5c] sm:$0xf]
      %v2381 = vld [vmem:[%s2364 + $0x60] sm:$0xff]
      %v2382 = vld [vmem:[%s2364 + $0x68] sm:$0xf]
      %v2383 = vld [vmem:[%s2364 + $0x6c] sm:$0xff]
      %v2384 = vld [vmem:[%s2364 + $0x74] sm:$0xf]
      %v2385 = vld [vmem:[%s2364 + $0x78] sm:$0xff]
      %v2386 = vld [vmem:[%s2364 + $0x80] sm:$0xf]
      %v2387 = vld [vmem:[%s2364 + $0x84] sm:$0xff]
      %v2388 = vld [vmem:[%s2364 + $0x8c] sm:$0xf]
      %v2389 = vld [vmem:[%s2364 + $0x90] sm:$0xff]
      %v2390 = vld [vmem:[%s2364 + $0x98] sm:$0xf]
      %v2391 = vld [vmem:[%s2364 + $0x9c] sm:$0xff]
      %v2392 = vld [vmem:[%s2364 + $0xa4] sm:$0xf]
      %v2393 = vld [vmem:[%s2364 + $0xa8] sm:$0xff]
      %v2394 = vld [vmem:[%s2364 + $0xb0] sm:$0xf]
      %v2395 = vld [vmem:[%s2364 + $0xb4] sm:$0xff]
      %v2396 = vld [vmem:[%s2364 + $0xbc] sm:$0xf]
      %v2397 = vld [vmem:[%s2364 + $0xc0] sm:$0xff]
      %v2398 = vld [vmem:[%s2364 + $0xc8] sm:$0xf]
      %v2399 = vld [vmem:[%s2364 + $0xcc] sm:$0xff]
      %v2400 = vld [vmem:[%s2364 + $0xd4] sm:$0xf]
      %v2401 = vld [vmem:[%s2364 + $0xd8] sm:$0xff]
      %v2402 = vld [vmem:[%s2364 + $0xe0] sm:$0xf]
      %v2403 = vld [vmem:[%s2364 + $0xe4] sm:$0xff]
      %v2404 = vld [vmem:[%s2364 + $0xec] sm:$0xf]
      %v2405 = vld [vmem:[%s2364 + $0xf0] sm:$0xff]
      %v2406 = vld [vmem:[%s2364 + $0xf8] sm:$0xf]
      %v2407 = vld [vmem:[%s2364 + $0xfc] sm:$0xff]
      %v2408 = vld [vmem:[%s2364 + $0x104] sm:$0xf]
      %v2409 = vld [vmem:[%s2364 + $0x108] sm:$0xff]
      %v2410 = vld [vmem:[%s2364 + $0x110] sm:$0xf]
      %v2411 = vld [vmem:[%s2364 + $0x114] sm:$0xff]
      %v2412 = vld [vmem:[%s2364 + $0x11c] sm:$0xf]
      %v2413 = vld [vmem:[%s2364 + $0x120] sm:$0xff]
      %v2414 = vld [vmem:[%s2364 + $0x128] sm:$0xf]
      %v2415 = vld [vmem:[%s2364 + $0x12c] sm:$0xff]
      %v2416 = vld [vmem:[%s2364 + $0x134] sm:$0xf]
      %v2417 = vld [vmem:[%s2364 + $0x138] sm:$0xff]
      %v2418 = vld [vmem:[%s2364 + $0x140] sm:$0xf]
      %v2419 = vld [vmem:[%s2364 + $0x144] sm:$0xff]
      %v2420 = vld [vmem:[%s2364 + $0x14c] sm:$0xf]
      %v2421 = vld [vmem:[%s2364 + $0x150] sm:$0xff]
      %v2422 = vld [vmem:[%s2364 + $0x158] sm:$0xf]
      %v2423 = vld [vmem:[%s2364 + $0x15c] sm:$0xff]
      %v2424 = vld [vmem:[%s2364 + $0x164] sm:$0xf]
      %v2425 = vld [vmem:[%s2364 + $0x168] sm:$0xff]
      %v2426 = vld [vmem:[%s2364 + $0x170] sm:$0xf]
      %v2427 = vld [vmem:[%s2364 + $0x174] sm:$0xff]
      %v2428 = vld [vmem:[%s2364 + $0x17c] sm:$0xf]
      %v2429 = vld [vmem:[%s2364 + $0x180] sm:$0xff]
      %v2430 = vld [vmem:[%s2364 + $0x188] sm:$0xf]
      %v2431 = vld [vmem:[%s2364 + $0x18c] sm:$0xff]
      %v2432 = vld [vmem:[%s2364 + $0x194] sm:$0xf]
      %v2433 = vld [vmem:[%s2364 + $0x198] sm:$0xff]
      %v2434 = vld [vmem:[%s2364 + $0x1a0] sm:$0xf]
      %v2435 = vld [vmem:[%s2364 + $0x1a4] sm:$0xff]
      %v2436 = vld [vmem:[%s2364 + $0x1ac] sm:$0xf]
      %v2439 = vunpack.c.l.b16 %v2362
      %v2440 = vunpack.c.h.b16 %v2362
      %v2441 = vunpack.c.l.b16 %v2363
      %v2442 = vpack.c.b16 %v1190, %v2439
      %v2443 = vpack.c.b16 %v1191, %v2440
      %v2444 = vpack.c.b16 %v1192, %v2441
      %vm2445 = vcmask 1046528
      %v2446 = vrot.slane %v2442, 1
      %v2447 = vrot.slane %v1205, 1
      %v2448 = vsel %vm2445, %v2446, %v2447
      %v2449 = vrot.slane %v2443, 1
      %v2450 = vrot.slane %v1206, 1
      %v2451 = vsel %vm2445, %v2449, %v2450
      %v2452 = vrot.slane %v2444, 1
      %v2453 = vrot.slane %v1207, 1
      %v2454 = vsel %vm2445, %v2452, %v2453
      %v2455 = vrot.slane %v1208, 1
      %v2456 = vsel %vm2445, %v2447, %v2455
      %v2457 = vrot.slane %v1209, 1
      %v2458 = vsel %vm2445, %v2450, %v2457
      %v2459 = vrot.slane %v1210, 1
      %v2460 = vsel %vm2445, %v2453, %v2459
      %v2539 = vunpack.c.l.b16 %v2365
      %v2540 = vunpack.c.h.b16 %v2365
      %v2541 = vunpack.c.l.b16 %v2366
      %v2542 = vunpack.c.l.b16 %v2367
      %v2543 = vunpack.c.h.b16 %v2367
      %v2544 = vunpack.c.l.b16 %v2368
      %v2545 = vunpack.c.l.b16 %v2369
      %v2546 = vunpack.c.h.b16 %v2369
      %v2547 = vunpack.c.l.b16 %v2370
      %v2548 = vunpack.c.l.b16 %v2371
      %v2549 = vunpack.c.h.b16 %v2371
      %v2550 = vunpack.c.l.b16 %v2372
      %v2551 = vunpack.c.l.b16 %v2373
      %v2552 = vunpack.c.h.b16 %v2373
      %v2553 = vunpack.c.l.b16 %v2374
      %v2554 = vunpack.c.l.b16 %v2375
      %v2555 = vunpack.c.h.b16 %v2375
      %v2556 = vunpack.c.l.b16 %v2376
      %v2557 = vunpack.c.l.b16 %v2377
      %v2558 = vunpack.c.h.b16 %v2377
      %v2559 = vunpack.c.l.b16 %v2378
      %v2560 = vunpack.c.l.b16 %v2379
      %v2561 = vunpack.c.h.b16 %v2379
      %v2562 = vunpack.c.l.b16 %v2380
      %v2563 = vunpack.c.l.b16 %v2381
      %v2564 = vunpack.c.h.b16 %v2381
      %v2565 = vunpack.c.l.b16 %v2382
      %v2566 = vunpack.c.l.b16 %v2383
      %v2567 = vunpack.c.h.b16 %v2383
      %v2568 = vunpack.c.l.b16 %v2384
      %v2569 = vunpack.c.l.b16 %v2385
      %v2570 = vunpack.c.h.b16 %v2385
      %v2571 = vunpack.c.l.b16 %v2386
      %v2572 = vunpack.c.l.b16 %v2387
      %v2573 = vunpack.c.h.b16 %v2387
      %v2574 = vunpack.c.l.b16 %v2388
      %v2575 = vunpack.c.l.b16 %v2389
      %v2576 = vunpack.c.h.b16 %v2389
      %v2577 = vunpack.c.l.b16 %v2390
      %v2578 = vunpack.c.l.b16 %v2391
      %v2579 = vunpack.c.h.b16 %v2391
      %v2580 = vunpack.c.l.b16 %v2392
      %v2581 = vunpack.c.l.b16 %v2393
      %v2582 = vunpack.c.h.b16 %v2393
      %v2583 = vunpack.c.l.b16 %v2394
      %v2584 = vunpack.c.l.b16 %v2395
      %v2585 = vunpack.c.h.b16 %v2395
      %v2586 = vunpack.c.l.b16 %v2396
      %v2587 = vunpack.c.l.b16 %v2397
      %v2588 = vunpack.c.h.b16 %v2397
      %v2589 = vunpack.c.l.b16 %v2398
      %v2590 = vunpack.c.l.b16 %v2399
      %v2591 = vunpack.c.h.b16 %v2399
      %v2592 = vunpack.c.l.b16 %v2400
      %v2593 = vunpack.c.l.b16 %v2401
      %v2594 = vunpack.c.h.b16 %v2401
      %v2595 = vunpack.c.l.b16 %v2402
      %v2596 = vunpack.c.l.b16 %v2403
      %v2597 = vunpack.c.h.b16 %v2403
      %v2598 = vunpack.c.l.b16 %v2404
      %v2599 = vunpack.c.l.b16 %v2405
      %v2600 = vunpack.c.h.b16 %v2405
      %v2601 = vunpack.c.l.b16 %v2406
      %v2602 = vunpack.c.l.b16 %v2407
      %v2603 = vunpack.c.h.b16 %v2407
      %v2604 = vunpack.c.l.b16 %v2408
      %v2605 = vunpack.c.l.b16 %v2409
      %v2606 = vunpack.c.h.b16 %v2409
      %v2607 = vunpack.c.l.b16 %v2410
      %v2608 = vunpack.c.l.b16 %v2411
      %v2609 = vunpack.c.h.b16 %v2411
      %v2610 = vunpack.c.l.b16 %v2412
      %v2611 = vunpack.c.l.b16 %v2413
      %v2612 = vunpack.c.h.b16 %v2413
      %v2613 = vunpack.c.l.b16 %v2414
      %v2614 = vunpack.c.l.b16 %v2415
      %v2615 = vunpack.c.h.b16 %v2415
      %v2616 = vunpack.c.l.b16 %v2416
      %v2617 = vunpack.c.l.b16 %v2417
      %v2618 = vunpack.c.h.b16 %v2417
      %v2619 = vunpack.c.l.b16 %v2418
      %v2620 = vunpack.c.l.b16 %v2419
      %v2621 = vunpack.c.h.b16 %v2419
      %v2622 = vunpack.c.l.b16 %v2420
      %v2623 = vunpack.c.l.b16 %v2421
      %v2624 = vunpack.c.h.b16 %v2421
      %v2625 = vunpack.c.l.b16 %v2422
      %v2626 = vunpack.c.l.b16 %v2423
      %v2627 = vunpack.c.h.b16 %v2423
      %v2628 = vunpack.c.l.b16 %v2424
      %v2629 = vunpack.c.l.b16 %v2425
      %v2630 = vunpack.c.h.b16 %v2425
      %v2631 = vunpack.c.l.b16 %v2426
      %v2632 = vunpack.c.l.b16 %v2427
      %v2633 = vunpack.c.h.b16 %v2427
      %v2634 = vunpack.c.l.b16 %v2428
      %v2635 = vunpack.c.l.b16 %v2429
      %v2636 = vunpack.c.h.b16 %v2429
      %v2637 = vunpack.c.l.b16 %v2430
      %v2638 = vunpack.c.l.b16 %v2431
      %v2639 = vunpack.c.h.b16 %v2431
      %v2640 = vunpack.c.l.b16 %v2432
      %v2641 = vunpack.c.l.b16 %v2433
      %v2642 = vunpack.c.h.b16 %v2433
      %v2643 = vunpack.c.l.b16 %v2434
      %v2644 = vunpack.c.l.b16 %v2435
      %v2645 = vunpack.c.h.b16 %v2435
      %v2646 = vunpack.c.l.b16 %v2436
      %v2647 = vpack.c.b16 %v2542, %v2539
      %v2648 = vpack.c.b16 %v2543, %v2540
      %v2649 = vpack.c.b16 %v2544, %v2541
      %v2650 = vpack.c.b16 %v2548, %v2545
      %v2651 = vpack.c.b16 %v2549, %v2546
      %v2652 = vpack.c.b16 %v2550, %v2547
      %v2653 = vpack.c.b16 %v2554, %v2551
      %v2654 = vpack.c.b16 %v2555, %v2552
      %v2655 = vpack.c.b16 %v2556, %v2553
      %v2656 = vpack.c.b16 %v2560, %v2557
      %v2657 = vpack.c.b16 %v2561, %v2558
      %v2658 = vpack.c.b16 %v2562, %v2559
      %v2659 = vpack.c.b16 %v2566, %v2563
      %v2660 = vpack.c.b16 %v2567, %v2564
      %v2661 = vpack.c.b16 %v2568, %v2565
      %v2662 = vpack.c.b16 %v2572, %v2569
      %v2663 = vpack.c.b16 %v2573, %v2570
      %v2664 = vpack.c.b16 %v2574, %v2571
      %v2665 = vpack.c.b16 %v2578, %v2575
      %v2666 = vpack.c.b16 %v2579, %v2576
      %v2667 = vpack.c.b16 %v2580, %v2577
      %v2668 = vpack.c.b16 %v2584, %v2581
      %v2669 = vpack.c.b16 %v2585, %v2582
      %v2670 = vpack.c.b16 %v2586, %v2583
      %v2671 = vpack.c.b16 %v2590, %v2587
      %v2672 = vpack.c.b16 %v2591, %v2588
      %v2673 = vpack.c.b16 %v2592, %v2589
      %v2674 = vpack.c.b16 %v2596, %v2593
      %v2675 = vpack.c.b16 %v2597, %v2594
      %v2676 = vpack.c.b16 %v2598, %v2595
      %v2677 = vpack.c.b16 %v2602, %v2599
      %v2678 = vpack.c.b16 %v2603, %v2600
      %v2679 = vpack.c.b16 %v2604, %v2601
      %v2680 = vpack.c.b16 %v2608, %v2605
      %v2681 = vpack.c.b16 %v2609, %v2606
      %v2682 = vpack.c.b16 %v2610, %v2607
      %v2683 = vpack.c.b16 %v2614, %v2611
      %v2684 = vpack.c.b16 %v2615, %v2612
      %v2685 = vpack.c.b16 %v2616, %v2613
      %v2686 = vpack.c.b16 %v2620, %v2617
      %v2687 = vpack.c.b16 %v2621, %v2618
      %v2688 = vpack.c.b16 %v2622, %v2619
      %v2689 = vpack.c.b16 %v2626, %v2623
      %v2690 = vpack.c.b16 %v2627, %v2624
      %v2691 = vpack.c.b16 %v2628, %v2625
      %v2692 = vpack.c.b16 %v2632, %v2629
      %v2693 = vpack.c.b16 %v2633, %v2630
      %v2694 = vpack.c.b16 %v2634, %v2631
      %v2695 = vpack.c.b16 %v2638, %v2635
      %v2696 = vpack.c.b16 %v2639, %v2636
      %v2697 = vpack.c.b16 %v2640, %v2637
      %v2698 = vpack.c.b16 %v2644, %v2641
      %v2699 = vpack.c.b16 %v2645, %v2642
      %v2700 = vpack.c.b16 %v2646, %v2643
      %v2756 = vsel %vm1575, %v2454, 0
      %v2759 = vsel %vm1575, %v2460, 0
      %v2762 = vsel %vm1575, %v2459, 0
      %2764 = vmatprep.subr.bf16.mxu0 %v2648
      %2765 = vmatpush1.bf16.msra.mxu0 %v2647
      %2766 = vmatprep.subr.bf16.mxu0 %v2651
      %2767 = vmatpush1.bf16.msra.mxu0 %v2650
      %2768 = vmatprep.subr.bf16.mxu0 %v2654
      %2769 = vmatpush1.bf16.msra.mxu0 %v2653
      %2770 = vmatprep.subr.bf16.mxu0 %v2657
      %2771 = vmatpush1.bf16.msra.mxu0 %v2656
      %2772 = vmatprep.subr.bf16.mxu0 %v2660
      %2773 = vmatpush1.bf16.msra.mxu0 %v2659
      %2774 = vmatprep.subr.bf16.mxu0 %v2663
      %2775 = vmatpush1.bf16.msra.mxu0 %v2662
      %2776 = vmatprep.subr.bf16.mxu0 %v2666
      %2777 = vmatpush1.bf16.msra.mxu0 %v2665
      %2778 = vmatprep.subr.bf16.mxu0 %v2669
      %2779 = vmatpush1.bf16.msra.mxu0 %v2668
      %2780 = vmatprep.subr.bf16.mxu0 %v2672
      %2781 = vmatpush1.bf16.msra.mxu0 %v2671
      %2782 = vmatprep.subr.bf16.mxu0 %v2675
      %2783 = vmatpush1.bf16.msra.mxu0 %v2674
      %2784 = vmatprep.subr.bf16.mxu0 %v2678
      %2785 = vmatpush1.bf16.msra.mxu0 %v2677
      %2786 = vmatprep.subr.bf16.mxu0 %v2681
      %2787 = vmatpush1.bf16.msra.mxu0 %v2680
      %2788 = vmatprep.subr.bf16.mxu0 %v2684
      %2789 = vmatpush1.bf16.msra.mxu0 %v2683
      %2790 = vmatprep.subr.bf16.mxu0 %v2687
      %2791 = vmatpush1.bf16.msra.mxu0 %v2686
      %2792 = vmatprep.subr.bf16.mxu0 %v2690
      %2793 = vmatpush1.bf16.msra.mxu0 %v2689
      %2794 = vmatprep.subr.bf16.mxu0 %v2693
      %2795 = vmatpush1.bf16.msra.mxu0 %v2692
      %2796 = vmatprep.mubr.bf16.mxu0 %v2451
      %2797 = vmatmul.mubr.bf16.gmra.mrb[0].mxu0 %v2448
      %v2798 = vpop.f32.mrb[0].mxu0
      %v2799 = vadd.f32 0.0, %v2798
      %v2800 = vpop.f32.mrb[0].mxu0
      %v2801 = vadd.f32 0.0, %v2800
      %v2802 = vpop.f32.mrb[0].mxu0
      %v2803 = vadd.f32 0.0, %v2802
      %v2804 = vpop.f32.mrb[0].mxu0
      %v2805 = vadd.f32 0.0, %v2804
      %2806 = vmatprep.mubr.bf16.mxu0 %v2458
      %2807 = vmatmul.mubr.bf16.gmra.mrb[0].mxu0 %v2456
      %v2808 = vpop.f32.mrb[0].mxu0
      %v2809 = vadd.f32 0.0, %v2808
      %v2810 = vpop.f32.mrb[0].mxu0
      %v2811 = vadd.f32 0.0, %v2810
      %v2812 = vpop.f32.mrb[0].mxu0
      %v2813 = vadd.f32 0.0, %v2812
      %v2814 = vpop.f32.mrb[0].mxu0
      %v2815 = vadd.f32 0.0, %v2814
      %2816 = vmatprep.mubr.bf16.mxu0 %v2457
      %2817 = vmatmul.mubr.bf16.gmra.mrb[0].mxu0 %v2455
      %v2818 = vpop.f32.mrb[0].mxu0
      %v2819 = vadd.f32 0.0, %v2818
      %v2820 = vpop.f32.mrb[0].mxu0
      %v2821 = vadd.f32 0.0, %v2820
      %v2822 = vpop.f32.mrb[0].mxu0
      %v2823 = vpop.f32.mrb[0].mxu0
      %2824 = vdwg.mxu0
      %2825 = vmatprep.subr.bf16.mxu0 %v2696
      %2826 = vmatpush1.bf16.msra.mxu0 %v2695
      %2827 = vmatprep.subr.bf16.mxu0 %v2699
      %2828 = vmatpush1.bf16.msra.mxu0 %v2698
      %2829 = vmatprep.subr.bf16.mxu0 0
      %2830 = vmatpush1.bf16.msra.mxu0 0
      %2831 = vmatprep.subr.bf16.mxu0 0
      %2832 = vmatpush1.bf16.msra.mxu0 0
      %2833 = vmatprep.subr.bf16.mxu0 0
      %2834 = vmatpush1.bf16.msra.mxu0 0
      %2835 = vmatprep.subr.bf16.mxu0 0
      %2836 = vmatpush1.bf16.msra.mxu0 0
      %2837 = vmatprep.subr.bf16.mxu0 0
      %2838 = vmatpush1.bf16.msra.mxu0 0
      %2839 = vmatprep.subr.bf16.mxu0 0
      %2840 = vmatpush1.bf16.msra.mxu0 0
      %2841 = vmatprep.subr.bf16.mxu0 0
      %2842 = vmatpush1.bf16.msra.mxu0 0
      %2843 = vmatprep.subr.bf16.mxu0 0
      %2844 = vmatpush1.bf16.msra.mxu0 0
      %2845 = vmatprep.subr.bf16.mxu0 0
      %2846 = vmatpush1.bf16.msra.mxu0 0
      %2847 = vmatprep.subr.bf16.mxu0 0
      %2848 = vmatpush1.bf16.msra.mxu0 0
      %2849 = vmatprep.subr.bf16.mxu0 0
      %2850 = vmatpush1.bf16.msra.mxu0 0
      %2851 = vmatprep.subr.bf16.mxu0 0
      %2852 = vmatpush1.bf16.msra.mxu0 0
      %2853 = vmatprep.subr.bf16.mxu0 0
      %2854 = vmatpush1.bf16.msra.mxu0 0
      %2855 = vmatprep.subr.bf16.mxu0 0
      %2856 = vmatpush1.bf16.msra.mxu0 0
      %2857 = vmatprep.mubr.bf16.mxu0 0
      %2858 = vmatmul.mubr.bf16.gmra.mrb[0].mxu0 %v2756
      %v2859 = vpop.f32.mrb[0].mxu0
      %v2860 = vadd.f32 %v2799, %v2859
      %v2861 = vpop.f32.mrb[0].mxu0
      %v2862 = vadd.f32 %v2801, %v2861
      %v2863 = vpop.f32.mrb[0].mxu0
      %v2864 = vadd.f32 %v2803, %v2863
      %v2865 = vpop.f32.mrb[0].mxu0
      %v2866 = vadd.f32 %v2805, %v2865
      %2867 = vmatprep.mubr.bf16.mxu0 0
      %2868 = vmatmul.mubr.bf16.gmra.mrb[0].mxu0 %v2759
      %v2869 = vpop.f32.mrb[0].mxu0
      %v2870 = vadd.f32 %v2809, %v2869
      %v2871 = vpop.f32.mrb[0].mxu0
      %v2872 = vadd.f32 %v2811, %v2871
      %v2873 = vpop.f32.mrb[0].mxu0
      %v2874 = vadd.f32 %v2813, %v2873
      %v2875 = vpop.f32.mrb[0].mxu0
      %v2876 = vadd.f32 %v2815, %v2875
      %2877 = vmatprep.mubr.bf16.mxu0 0
      %2878 = vmatmul.mubr.bf16.gmra.mrb[0].mxu0 %v2762
      %v2879 = vpop.f32.mrb[0].mxu0
      %v2880 = vadd.f32 %v2819, %v2879
      %v2881 = vpop.f32.mrb[0].mxu0
      %v2882 = vadd.f32 %v2821, %v2881
      %v2883 = vpop.f32.mrb[0].mxu0
      %v2884 = vpop.f32.mrb[0].mxu0
      %2885 = vdwg.mxu0
      %2886 = vmatprep.subr.bf16.mxu0 0
      %2887 = vmatpush1.bf16.msra.mxu0 %v2649
      %2888 = vmatprep.subr.bf16.mxu0 0
      %2889 = vmatpush1.bf16.msra.mxu0 %v2652
      %2890 = vmatprep.subr.bf16.mxu0 0
      %2891 = vmatpush1.bf16.msra.mxu0 %v2655
      %2892 = vmatprep.subr.bf16.mxu0 0
      %2893 = vmatpush1.bf16.msra.mxu0 %v2658
      %2894 = vmatprep.subr.bf16.mxu0 0
      %2895 = vmatpush1.bf16.msra.mxu0 %v2661
      %2896 = vmatprep.subr.bf16.mxu0 0
      %2897 = vmatpush1.bf16.msra.mxu0 %v2664
      %2898 = vmatprep.subr.bf16.mxu0 0
      %2899 = vmatpush1.bf16.msra.mxu0 %v2667
      %2900 = vmatprep.subr.bf16.mxu0 0
      %2901 = vmatpush1.bf16.msra.mxu0 %v2670
      %2902 = vmatprep.subr.bf16.mxu0 0
      %2903 = vmatpush1.bf16.msra.mxu0 %v2673
      %2904 = vmatprep.subr.bf16.mxu0 0
      %2905 = vmatpush1.bf16.msra.mxu0 %v2676
      %2906 = vmatprep.subr.bf16.mxu0 0
      %2907 = vmatpush1.bf16.msra.mxu0 %v2679
      %2908 = vmatprep.subr.bf16.mxu0 0
      %2909 = vmatpush1.bf16.msra.mxu0 %v2682
      %2910 = vmatprep.subr.bf16.mxu0 0
      %2911 = vmatpush1.bf16.msra.mxu0 %v2685
      %2912 = vmatprep.subr.bf16.mxu0 0
      %2913 = vmatpush1.bf16.msra.mxu0 %v2688
      %2914 = vmatprep.subr.bf16.mxu0 0
      %2915 = vmatpush1.bf16.msra.mxu0 %v2691
      %2916 = vmatprep.subr.bf16.mxu0 0
      %2917 = vmatpush1.bf16.msra.mxu0 %v2694
      %2918 = vmatprep.mubr.bf16.mxu0 %v2451
      %2919 = vmatmul.mubr.bf16.gmra.mrb[0].mxu0 %v2448
      %v2920 = vpop.f32.mrb[0].mxu0
      %v2921 = vadd.f32 0.0, %v2920
      %v2922 = vpop.f32.mrb[0].mxu0
      %v2923 = vpop.f32.mrb[0].mxu0
      %v2924 = vadd.f32 0.0, %v2923
      %v2925 = vpop.f32.mrb[0].mxu0
      %2926 = vmatprep.mubr.bf16.mxu0 %v2458
      %2927 = vmatmul.mubr.bf16.gmra.mrb[0].mxu0 %v2456
      %v2928 = vpop.f32.mrb[0].mxu0
      %v2929 = vadd.f32 0.0, %v2928
      %v2930 = vpop.f32.mrb[0].mxu0
      %v2931 = vpop.f32.mrb[0].mxu0
      %v2932 = vadd.f32 0.0, %v2931
      %v2933 = vpop.f32.mrb[0].mxu0
      %2934 = vmatprep.mubr.bf16.mxu0 %v2457
      %2935 = vmatmul.mubr.bf16.gmra.mrb[0].mxu0 %v2455
      %v2936 = vpop.f32.mrb[0].mxu0
      %v2937 = vadd.f32 0.0, %v2936
      %v2938 = vpop.f32.mrb[0].mxu0
      %v2939 = vpop.f32.mrb[0].mxu0
      %v2940 = vpop.f32.mrb[0].mxu0
      %2941 = vdwg.mxu0
      %2942 = vmatprep.subr.bf16.mxu0 0
      %2943 = vmatpush1.bf16.msra.mxu0 %v2697
      %2944 = vmatprep.subr.bf16.mxu0 0
      %2945 = vmatpush1.bf16.msra.mxu0 %v2700
      %2946 = vmatprep.subr.bf16.mxu0 0
      %2947 = vmatpush1.bf16.msra.mxu0 0
      %2948 = vmatprep.subr.bf16.mxu0 0
      %2949 = vmatpush1.bf16.msra.mxu0 0
      %2950 = vmatprep.subr.bf16.mxu0 0
      %2951 = vmatpush1.bf16.msra.mxu0 0
      %2952 = vmatprep.subr.bf16.mxu0 0
      %2953 = vmatpush1.bf16.msra.mxu0 0
      %2954 = vmatprep.subr.bf16.mxu0 0
      %2955 = vmatpush1.bf16.msra.mxu0 0
      %2956 = vmatprep.subr.bf16.mxu0 0
      %2957 = vmatpush1.bf16.msra.mxu0 0
      %2958 = vmatprep.subr.bf16.mxu0 0
      %2959 = vmatpush1.bf16.msra.mxu0 0
      %2960 = vmatprep.subr.bf16.mxu0 0
      %2961 = vmatpush1.bf16.msra.mxu0 0
      %2962 = vmatprep.subr.bf16.mxu0 0
      %2963 = vmatpush1.bf16.msra.mxu0 0
      %2964 = vmatprep.subr.bf16.mxu0 0
      %2965 = vmatpush1.bf16.msra.mxu0 0
      %2966 = vmatprep.subr.bf16.mxu0 0
      %2967 = vmatpush1.bf16.msra.mxu0 0
      %2968 = vmatprep.subr.bf16.mxu0 0
      %2969 = vmatpush1.bf16.msra.mxu0 0
      %2970 = vmatprep.subr.bf16.mxu0 0
      %2971 = vmatpush1.bf16.msra.mxu0 0
      %2972 = vmatprep.subr.bf16.mxu0 0
      %2973 = vmatpush1.bf16.msra.mxu0 0
      %2974 = vmatprep.mubr.bf16.mxu0 0
      %2975 = vmatmul.mubr.bf16.gmra.mrb[0].mxu0 %v2756
      %v2976 = vpop.f32.mrb[0].mxu0
      %v2977 = vadd.f32 %v2921, %v2976
      %v2978 = vpop.f32.mrb[0].mxu0
      %v2979 = vpop.f32.mrb[0].mxu0
      %v2980 = vadd.f32 %v2924, %v2979
      %v2981 = vpop.f32.mrb[0].mxu0
      %2982 = vmatprep.mubr.bf16.mxu0 0
      %2983 = vmatmul.mubr.bf16.gmra.mrb[0].mxu0 %v2759
      %v2984 = vpop.f32.mrb[0].mxu0
      %v2985 = vadd.f32 %v2929, %v2984
      %v2986 = vpop.f32.mrb[0].mxu0
      %v2987 = vpop.f32.mrb[0].mxu0
      %v2988 = vadd.f32 %v2932, %v2987
      %v2989 = vpop.f32.mrb[0].mxu0
      %2990 = vmatprep.mubr.bf16.mxu0 0
      %2991 = vmatmul.mubr.bf16.gmra.mrb[0].mxu0 %v2762
      %v2992 = vpop.f32.mrb[0].mxu0
      %v2993 = vadd.f32 %v2937, %v2992
      %v2994 = vpop.f32.mrb[0].mxu0
      %v2995 = vpop.f32.mrb[0].mxu0
      %v2996 = vpop.f32.mrb[0].mxu0
      %2997 = vdwg.mxu0
      %v2998 = vadd.f32 %v2224, %v2860
      %v2999 = vadd.f32 %v2226, %v2862
      %v3000 = vadd.f32 %v2341, %v2977
      %v3001 = vadd.f32 %v2228, %v2864
      %v3002 = vadd.f32 %v2230, %v2866
      %v3003 = vadd.f32 %v2344, %v2980
      %v3004 = vadd.f32 %v2234, %v2870
      %v3005 = vadd.f32 %v2236, %v2872
      %v3006 = vadd.f32 %v2349, %v2985
      %v3007 = vadd.f32 %v2238, %v2874
      %v3008 = vadd.f32 %v2240, %v2876
      %v3009 = vadd.f32 %v2352, %v2988
      %v3010 = vadd.f32 %v2244, %v2880
      %v3011 = vadd.f32 %v2246, %v2882
      %v3012 = vadd.f32 %v2357, %v2993
      %v3013 = vld [vmem:[#allocation2 + $0x30] sm:$0xff]
      %v3014 = vld [vmem:[#allocation2 + $0x38] sm:$0xf]
      %s3015 = scalar_lea.vmem %s2, 1296
      %v3016 = vld [vmem:[%s3015] sm:$0xff]
      %v3017 = vld [vmem:[%s3015 + $0x8] sm:$0xf]
      %v3018 = vld [vmem:[%s3015 + $0xc] sm:$0xff]
      %v3019 = vld [vmem:[%s3015 + $0x14] sm:$0xf]
      %v3020 = vld [vmem:[%s3015 + $0x18] sm:$0xff]
      %v3021 = vld [vmem:[%s3015 + $0x20] sm:$0xf]
      %v3022 = vld [vmem:[%s3015 + $0x24] sm:$0xff]
      %v3023 = vld [vmem:[%s3015 + $0x2c] sm:$0xf]
      %v3024 = vld [vmem:[%s3015 + $0x30] sm:$0xff]
      %v3025 = vld [vmem:[%s3015 + $0x38] sm:$0xf]
      %v3026 = vld [vmem:[%s3015 + $0x3c] sm:$0xff]
      %v3027 = vld [vmem:[%s3015 + $0x44] sm:$0xf]
      %v3028 = vld [vmem:[%s3015 + $0x48] sm:$0xff]
      %v3029 = vld [vmem:[%s3015 + $0x50] sm:$0xf]
      %v3030 = vld [vmem:[%s3015 + $0x54] sm:$0xff]
      %v3031 = vld [vmem:[%s3015 + $0x5c] sm:$0xf]
      %v3032 = vld [vmem:[%s3015 + $0x60] sm:$0xff]
      %v3033 = vld [vmem:[%s3015 + $0x68] sm:$0xf]
      %v3034 = vld [vmem:[%s3015 + $0x6c] sm:$0xff]
      %v3035 = vld [vmem:[%s3015 + $0x74] sm:$0xf]
      %v3036 = vld [vmem:[%s3015 + $0x78] sm:$0xff]
      %v3037 = vld [vmem:[%s3015 + $0x80] sm:$0xf]
      %v3038 = vld [vmem:[%s3015 + $0x84] sm:$0xff]
      %v3039 = vld [vmem:[%s3015 + $0x8c] sm:$0xf]
      %v3040 = vld [vmem:[%s3015 + $0x90] sm:$0xff]
      %v3041 = vld [vmem:[%s3015 + $0x98] sm:$0xf]
      %v3042 = vld [vmem:[%s3015 + $0x9c] sm:$0xff]
      %v3043 = vld [vmem:[%s3015 + $0xa4] sm:$0xf]
      %v3044 = vld [vmem:[%s3015 + $0xa8] sm:$0xff]
      %v3045 = vld [vmem:[%s3015 + $0xb0] sm:$0xf]
      %v3046 = vld [vmem:[%s3015 + $0xb4] sm:$0xff]
      %v3047 = vld [vmem:[%s3015 + $0xbc] sm:$0xf]
      %v3048 = vld [vmem:[%s3015 + $0xc0] sm:$0xff]
      %v3049 = vld [vmem:[%s3015 + $0xc8] sm:$0xf]
      %v3050 = vld [vmem:[%s3015 + $0xcc] sm:$0xff]
      %v3051 = vld [vmem:[%s3015 + $0xd4] sm:$0xf]
      %v3052 = vld [vmem:[%s3015 + $0xd8] sm:$0xff]
      %v3053 = vld [vmem:[%s3015 + $0xe0] sm:$0xf]
      %v3054 = vld [vmem:[%s3015 + $0xe4] sm:$0xff]
      %v3055 = vld [vmem:[%s3015 + $0xec] sm:$0xf]
      %v3056 = vld [vmem:[%s3015 + $0xf0] sm:$0xff]
      %v3057 = vld [vmem:[%s3015 + $0xf8] sm:$0xf]
      %v3058 = vld [vmem:[%s3015 + $0xfc] sm:$0xff]
      %v3059 = vld [vmem:[%s3015 + $0x104] sm:$0xf]
      %v3060 = vld [vmem:[%s3015 + $0x108] sm:$0xff]
      %v3061 = vld [vmem:[%s3015 + $0x110] sm:$0xf]
      %v3062 = vld [vmem:[%s3015 + $0x114] sm:$0xff]
      %v3063 = vld [vmem:[%s3015 + $0x11c] sm:$0xf]
      %v3064 = vld [vmem:[%s3015 + $0x120] sm:$0xff]
      %v3065 = vld [vmem:[%s3015 + $0x128] sm:$0xf]
      %v3066 = vld [vmem:[%s3015 + $0x12c] sm:$0xff]
      %v3067 = vld [vmem:[%s3015 + $0x134] sm:$0xf]
      %v3068 = vld [vmem:[%s3015 + $0x138] sm:$0xff]
      %v3069 = vld [vmem:[%s3015 + $0x140] sm:$0xf]
      %v3070 = vld [vmem:[%s3015 + $0x144] sm:$0xff]
      %v3071 = vld [vmem:[%s3015 + $0x14c] sm:$0xf]
      %v3072 = vld [vmem:[%s3015 + $0x150] sm:$0xff]
      %v3073 = vld [vmem:[%s3015 + $0x158] sm:$0xf]
      %v3074 = vld [vmem:[%s3015 + $0x15c] sm:$0xff]
      %v3075 = vld [vmem:[%s3015 + $0x164] sm:$0xf]
      %v3076 = vld [vmem:[%s3015 + $0x168] sm:$0xff]
      %v3077 = vld [vmem:[%s3015 + $0x170] sm:$0xf]
      %v3078 = vld [vmem:[%s3015 + $0x174] sm:$0xff]
      %v3079 = vld [vmem:[%s3015 + $0x17c] sm:$0xf]
      %v3080 = vld [vmem:[%s3015 + $0x180] sm:$0xff]
      %v3081 = vld [vmem:[%s3015 + $0x188] sm:$0xf]
      %v3082 = vld [vmem:[%s3015 + $0x18c] sm:$0xff]
      %v3083 = vld [vmem:[%s3015 + $0x194] sm:$0xf]
      %v3084 = vld [vmem:[%s3015 + $0x198] sm:$0xff]
      %v3085 = vld [vmem:[%s3015 + $0x1a0] sm:$0xf]
      %v3086 = vld [vmem:[%s3015 + $0x1a4] sm:$0xff]
      %v3087 = vld [vmem:[%s3015 + $0x1ac] sm:$0xf]
      %v3090 = vunpack.c.l.b16 %v3013
      %v3091 = vunpack.c.h.b16 %v3013
      %v3092 = vunpack.c.l.b16 %v3014
      %v3093 = vpack.c.b16 %v3090, %v3090
      %v3094 = vpack.c.b16 %v3091, %v3091
      %v3095 = vpack.c.b16 %v3092, %v3092
      %vm3096 = vsmask.f32 6400
      %v3098 = vshrl.u32 %v2442, 16
      %v3100 = vrot.slane %v3098, 1
      %v3101 = vshll.u32 %v2442, 16
      %v3103 = vrot.slane %v3101, 2
      %v3104 = vor.u32 %v3100, %v3103
      %v3105 = vrot.slane %v1248, 1
      %v3106 = vrot.slane %v1220, 2
      %v3107 = vor.u32 %v3105, %v3106
      %v3108 = vsel %vm3096, %v3104, %v3107
      %v3110 = vshrl.u32 %v2443, 16
      %v3112 = vrot.slane %v3110, 1
      %v3113 = vshll.u32 %v2443, 16
      %v3115 = vrot.slane %v3113, 2
      %v3116 = vor.u32 %v3112, %v3115
      %v3117 = vrot.slane %v1256, 1
      %v3118 = vrot.slane %v1232, 2
      %v3119 = vor.u32 %v3117, %v3118
      %v3120 = vsel %vm3096, %v3116, %v3119
      %v3122 = vshrl.u32 %v2444, 16
      %v3124 = vrot.slane %v3122, 1
      %v3125 = vshll.u32 %v2444, 16
      %v3127 = vrot.slane %v3125, 2
      %v3128 = vor.u32 %v3124, %v3127
      %v3129 = vrot.slane %v1264, 1
      %v3130 = vrot.slane %v1244, 2
      %v3131 = vor.u32 %v3129, %v3130
      %v3132 = vsel %vm3096, %v3128, %v3131
      %v3134 = vshrl.u32 %v3093, 16
      %v3136 = vrot.slane %v3134, 1
      %v3137 = vshll.u32 %v3093, 16
      %v3139 = vrot.slane %v3137, 2
      %v3140 = vor.u32 %v3136, %v3139
      %v3141 = vsel %vm3096, %v3107, %v3140
      %v3143 = vshrl.u32 %v3094, 16
      %v3145 = vrot.slane %v3143, 1
      %v3146 = vshll.u32 %v3094, 16
      %v3148 = vrot.slane %v3146, 2
      %v3149 = vor.u32 %v3145, %v3148
      %v3150 = vsel %vm3096, %v3119, %v3149
      %v3152 = vshrl.u32 %v3095, 16
      %v3154 = vrot.slane %v3152, 1
      %v3155 = vshll.u32 %v3095, 16
      %v3157 = vrot.slane %v3155, 2
      %v3158 = vor.u32 %v3154, %v3157
      %v3159 = vsel %vm3096, %v3131, %v3158
      %v3238 = vunpack.c.l.b16 %v3016
      %v3239 = vunpack.c.h.b16 %v3016
      %v3240 = vunpack.c.l.b16 %v3017
      %v3241 = vunpack.c.l.b16 %v3018
      %v3242 = vunpack.c.h.b16 %v3018
      %v3243 = vunpack.c.l.b16 %v3019
      %v3244 = vunpack.c.l.b16 %v3020
      %v3245 = vunpack.c.h.b16 %v3020
      %v3246 = vunpack.c.l.b16 %v3021
      %v3247 = vunpack.c.l.b16 %v3022
      %v3248 = vunpack.c.h.b16 %v3022
      %v3249 = vunpack.c.l.b16 %v3023
      %v3250 = vunpack.c.l.b16 %v3024
      %v3251 = vunpack.c.h.b16 %v3024
      %v3252 = vunpack.c.l.b16 %v3025
      %v3253 = vunpack.c.l.b16 %v3026
      %v3254 = vunpack.c.h.b16 %v3026
      %v3255 = vunpack.c.l.b16 %v3027
      %v3256 = vunpack.c.l.b16 %v3028
      %v3257 = vunpack.c.h.b16 %v3028
      %v3258 = vunpack.c.l.b16 %v3029
      %v3259 = vunpack.c.l.b16 %v3030
      %v3260 = vunpack.c.h.b16 %v3030
      %v3261 = vunpack.c.l.b16 %v3031
      %v3262 = vunpack.c.l.b16 %v3032
      %v3263 = vunpack.c.h.b16 %v3032
      %v3264 = vunpack.c.l.b16 %v3033
      %v3265 = vunpack.c.l.b16 %v3034
      %v3266 = vunpack.c.h.b16 %v3034
      %v3267 = vunpack.c.l.b16 %v3035
      %v3268 = vunpack.c.l.b16 %v3036
      %v3269 = vunpack.c.h.b16 %v3036
      %v3270 = vunpack.c.l.b16 %v3037
      %v3271 = vunpack.c.l.b16 %v3038
      %v3272 = vunpack.c.h.b16 %v3038
      %v3273 = vunpack.c.l.b16 %v3039
      %v3274 = vunpack.c.l.b16 %v3040
      %v3275 = vunpack.c.h.b16 %v3040
      %v3276 = vunpack.c.l.b16 %v3041
      %v3277 = vunpack.c.l.b16 %v3042
      %v3278 = vunpack.c.h.b16 %v3042
      %v3279 = vunpack.c.l.b16 %v3043
      %v3280 = vunpack.c.l.b16 %v3044
      %v3281 = vunpack.c.h.b16 %v3044
      %v3282 = vunpack.c.l.b16 %v3045
      %v3283 = vunpack.c.l.b16 %v3046
      %v3284 = vunpack.c.h.b16 %v3046
      %v3285 = vunpack.c.l.b16 %v3047
      %v3286 = vunpack.c.l.b16 %v3048
      %v3287 = vunpack.c.h.b16 %v3048
      %v3288 = vunpack.c.l.b16 %v3049
      %v3289 = vunpack.c.l.b16 %v3050
      %v3290 = vunpack.c.h.b16 %v3050
      %v3291 = vunpack.c.l.b16 %v3051
      %v3292 = vunpack.c.l.b16 %v3052
      %v3293 = vunpack.c.h.b16 %v3052
      %v3294 = vunpack.c.l.b16 %v3053
      %v3295 = vunpack.c.l.b16 %v3054
      %v3296 = vunpack.c.h.b16 %v3054
      %v3297 = vunpack.c.l.b16 %v3055
      %v3298 = vunpack.c.l.b16 %v3056
      %v3299 = vunpack.c.h.b16 %v3056
      %v3300 = vunpack.c.l.b16 %v3057
      %v3301 = vunpack.c.l.b16 %v3058
      %v3302 = vunpack.c.h.b16 %v3058
      %v3303 = vunpack.c.l.b16 %v3059
      %v3304 = vunpack.c.l.b16 %v3060
      %v3305 = vunpack.c.h.b16 %v3060
      %v3306 = vunpack.c.l.b16 %v3061
      %v3307 = vunpack.c.l.b16 %v3062
      %v3308 = vunpack.c.h.b16 %v3062
      %v3309 = vunpack.c.l.b16 %v3063
      %v3310 = vunpack.c.l.b16 %v3064
      %v3311 = vunpack.c.h.b16 %v3064
      %v3312 = vunpack.c.l.b16 %v3065
      %v3313 = vunpack.c.l.b16 %v3066
      %v3314 = vunpack.c.h.b16 %v3066
      %v3315 = vunpack.c.l.b16 %v3067
      %v3316 = vunpack.c.l.b16 %v3068
      %v3317 = vunpack.c.h.b16 %v3068
      %v3318 = vunpack.c.l.b16 %v3069
      %v3319 = vunpack.c.l.b16 %v3070
      %v3320 = vunpack.c.h.b16 %v3070
      %v3321 = vunpack.c.l.b16 %v3071
      %v3322 = vunpack.c.l.b16 %v3072
      %v3323 = vunpack.c.h.b16 %v3072
      %v3324 = vunpack.c.l.b16 %v3073
      %v3325 = vunpack.c.l.b16 %v3074
      %v3326 = vunpack.c.h.b16 %v3074
      %v3327 = vunpack.c.l.b16 %v3075
      %v3328 = vunpack.c.l.b16 %v3076
      %v3329 = vunpack.c.h.b16 %v3076
      %v3330 = vunpack.c.l.b16 %v3077
      %v3331 = vunpack.c.l.b16 %v3078
      %v3332 = vunpack.c.h.b16 %v3078
      %v3333 = vunpack.c.l.b16 %v3079
      %v3334 = vunpack.c.l.b16 %v3080
      %v3335 = vunpack.c.h.b16 %v3080
      %v3336 = vunpack.c.l.b16 %v3081
      %v3337 = vunpack.c.l.b16 %v3082
      %v3338 = vunpack.c.h.b16 %v3082
      %v3339 = vunpack.c.l.b16 %v3083
      %v3340 = vunpack.c.l.b16 %v3084
      %v3341 = vunpack.c.h.b16 %v3084
      %v3342 = vunpack.c.l.b16 %v3085
      %v3343 = vunpack.c.l.b16 %v3086
      %v3344 = vunpack.c.h.b16 %v3086
      %v3345 = vunpack.c.l.b16 %v3087
      %v3346 = vpack.c.b16 %v3241, %v3238
      %v3347 = vpack.c.b16 %v3242, %v3239
      %v3348 = vpack.c.b16 %v3243, %v3240
      %v3349 = vpack.c.b16 %v3247, %v3244
      %v3350 = vpack.c.b16 %v3248, %v3245
      %v3351 = vpack.c.b16 %v3249, %v3246
      %v3352 = vpack.c.b16 %v3253, %v3250
      %v3353 = vpack.c.b16 %v3254, %v3251
      %v3354 = vpack.c.b16 %v3255, %v3252
      %v3355 = vpack.c.b16 %v3259, %v3256
      %v3356 = vpack.c.b16 %v3260, %v3257
      %v3357 = vpack.c.b16 %v3261, %v3258
      %v3358 = vpack.c.b16 %v3265, %v3262
      %v3359 = vpack.c.b16 %v3266, %v3263
      %v3360 = vpack.c.b16 %v3267, %v3264
      %v3361 = vpack.c.b16 %v3271, %v3268
      %v3362 = vpack.c.b16 %v3272, %v3269
      %v3363 = vpack.c.b16 %v3273, %v3270
      %v3364 = vpack.c.b16 %v3277, %v3274
      %v3365 = vpack.c.b16 %v3278, %v3275
      %v3366 = vpack.c.b16 %v3279, %v3276
      %v3367 = vpack.c.b16 %v3283, %v3280
      %v3368 = vpack.c.b16 %v3284, %v3281
      %v3369 = vpack.c.b16 %v3285, %v3282
      %v3370 = vpack.c.b16 %v3289, %v3286
      %v3371 = vpack.c.b16 %v3290, %v3287
      %v3372 = vpack.c.b16 %v3291, %v3288
      %v3373 = vpack.c.b16 %v3295, %v3292
      %v3374 = vpack.c.b16 %v3296, %v3293
      %v3375 = vpack.c.b16 %v3297, %v3294
      %v3376 = vpack.c.b16 %v3301, %v3298
      %v3377 = vpack.c.b16 %v3302, %v3299
      %v3378 = vpack.c.b16 %v3303, %v3300
      %v3379 = vpack.c.b16 %v3307, %v3304
      %v3380 = vpack.c.b16 %v3308, %v3305
      %v3381 = vpack.c.b16 %v3309, %v3306
      %v3382 = vpack.c.b16 %v3313, %v3310
      %v3383 = vpack.c.b16 %v3314, %v3311
      %v3384 = vpack.c.b16 %v3315, %v3312
      %v3385 = vpack.c.b16 %v3319, %v3316
      %v3386 = vpack.c.b16 %v3320, %v3317
      %v3387 = vpack.c.b16 %v3321, %v3318
      %v3388 = vpack.c.b16 %v3325, %v3322
      %v3389 = vpack.c.b16 %v3326, %v3323
      %v3390 = vpack.c.b16 %v3327, %v3324
      %v3391 = vpack.c.b16 %v3331, %v3328
      %v3392 = vpack.c.b16 %v3332, %v3329
      %v3393 = vpack.c.b16 %v3333, %v3330
      %v3394 = vpack.c.b16 %v3337, %v3334
      %v3395 = vpack.c.b16 %v3338, %v3335
      %v3396 = vpack.c.b16 %v3339, %v3336
      %v3397 = vpack.c.b16 %v3343, %v3340
      %v3398 = vpack.c.b16 %v3344, %v3341
      %v3399 = vpack.c.b16 %v3345, %v3342
      %v3455 = vsel %vm1575, %v3132, 0
      %v3458 = vsel %vm1575, %v3159, 0
      %v3461 = vsel %vm1575, %v3158, 0
      %3463 = vmatprep.subr.bf16.mxu0 %v3347
      %3464 = vmatpush1.bf16.msra.mxu0 %v3346
      %3465 = vmatprep.subr.bf16.mxu0 %v3350
      %3466 = vmatpush1.bf16.msra.mxu0 %v3349
      %3467 = vmatprep.subr.bf16.mxu0 %v3353
      %3468 = vmatpush1.bf16.msra.mxu0 %v3352
      %3469 = vmatprep.subr.bf16.mxu0 %v3356
      %3470 = vmatpush1.bf16.msra.mxu0 %v3355
      %3471 = vmatprep.subr.bf16.mxu0 %v3359
      %3472 = vmatpush1.bf16.msra.mxu0 %v3358
      %3473 = vmatprep.subr.bf16.mxu0 %v3362
      %3474 = vmatpush1.bf16.msra.mxu0 %v3361
      %3475 = vmatprep.subr.bf16.mxu0 %v3365
      %3476 = vmatpush1.bf16.msra.mxu0 %v3364
      %3477 = vmatprep.subr.bf16.mxu0 %v3368
      %3478 = vmatpush1.bf16.msra.mxu0 %v3367
      %3479 = vmatprep.subr.bf16.mxu0 %v3371
      %3480 = vmatpush1.bf16.msra.mxu0 %v3370
      %3481 = vmatprep.subr.bf16.mxu0 %v3374
      %3482 = vmatpush1.bf16.msra.mxu0 %v3373
      %3483 = vmatprep.subr.bf16.mxu0 %v3377
      %3484 = vmatpush1.bf16.msra.mxu0 %v3376
      %3485 = vmatprep.subr.bf16.mxu0 %v3380
      %3486 = vmatpush1.bf16.msra.mxu0 %v3379
      %3487 = vmatprep.subr.bf16.mxu0 %v3383
      %3488 = vmatpush1.bf16.msra.mxu0 %v3382
      %3489 = vmatprep.subr.bf16.mxu0 %v3386
      %3490 = vmatpush1.bf16.msra.mxu0 %v3385
      %3491 = vmatprep.subr.bf16.mxu0 %v3389
      %3492 = vmatpush1.bf16.msra.mxu0 %v3388
      %3493 = vmatprep.subr.bf16.mxu0 %v3392
      %3494 = vmatpush1.bf16.msra.mxu0 %v3391
      %3495 = vmatprep.mubr.bf16.mxu0 %v3120
      %3496 = vmatmul.mubr.bf16.gmra.mrb[0].mxu0 %v3108
      %v3497 = vpop.f32.mrb[0].mxu0
      %v3498 = vadd.f32 0.0, %v3497
      %v3499 = vpop.f32.mrb[0].mxu0
      %v3500 = vadd.f32 0.0, %v3499
      %v3501 = vpop.f32.mrb[0].mxu0
      %v3502 = vadd.f32 0.0, %v3501
      %v3503 = vpop.f32.mrb[0].mxu0
      %v3504 = vadd.f32 0.0, %v3503
      %3505 = vmatprep.mubr.bf16.mxu0 %v3150
      %3506 = vmatmul.mubr.bf16.gmra.mrb[0].mxu0 %v3141
      %v3507 = vpop.f32.mrb[0].mxu0
      %v3508 = vadd.f32 0.0, %v3507
      %v3509 = vpop.f32.mrb[0].mxu0
      %v3510 = vadd.f32 0.0, %v3509
      %v3511 = vpop.f32.mrb[0].mxu0
      %v3512 = vadd.f32 0.0, %v3511
      %v3513 = vpop.f32.mrb[0].mxu0
      %v3514 = vadd.f32 0.0, %v3513
      %3515 = vmatprep.mubr.bf16.mxu0 %v3149
      %3516 = vmatmul.mubr.bf16.gmra.mrb[0].mxu0 %v3140
      %v3517 = vpop.f32.mrb[0].mxu0
      %v3518 = vadd.f32 0.0, %v3517
      %v3519 = vpop.f32.mrb[0].mxu0
      %v3520 = vadd.f32 0.0, %v3519
      %v3521 = vpop.f32.mrb[0].mxu0
      %v3522 = vpop.f32.mrb[0].mxu0
      %3523 = vdwg.mxu0
      %3524 = vmatprep.subr.bf16.mxu0 %v3395
      %3525 = vmatpush1.bf16.msra.mxu0 %v3394
      %3526 = vmatprep.subr.bf16.mxu0 %v3398
      %3527 = vmatpush1.bf16.msra.mxu0 %v3397
      %3528 = vmatprep.subr.bf16.mxu0 0
      %3529 = vmatpush1.bf16.msra.mxu0 0
      %3530 = vmatprep.subr.bf16.mxu0 0
      %3531 = vmatpush1.bf16.msra.mxu0 0
      %3532 = vmatprep.subr.bf16.mxu0 0
      %3533 = vmatpush1.bf16.msra.mxu0 0
      %3534 = vmatprep.subr.bf16.mxu0 0
      %3535 = vmatpush1.bf16.msra.mxu0 0
      %3536 = vmatprep.subr.bf16.mxu0 0
      %3537 = vmatpush1.bf16.msra.mxu0 0
      %3538 = vmatprep.subr.bf16.mxu0 0
      %3539 = vmatpush1.bf16.msra.mxu0 0
      %3540 = vmatprep.subr.bf16.mxu0 0
      %3541 = vmatpush1.bf16.msra.mxu0 0
      %3542 = vmatprep.subr.bf16.mxu0 0
      %3543 = vmatpush1.bf16.msra.mxu0 0
      %3544 = vmatprep.subr.bf16.mxu0 0
      %3545 = vmatpush1.bf16.msra.mxu0 0
      %3546 = vmatprep.subr.bf16.mxu0 0
      %3547 = vmatpush1.bf16.msra.mxu0 0
      %3548 = vmatprep.subr.bf16.mxu0 0
      %3549 = vmatpush1.bf16.msra.mxu0 0
      %3550 = vmatprep.subr.bf16.mxu0 0
      %3551 = vmatpush1.bf16.msra.mxu0 0
      %3552 = vmatprep.subr.bf16.mxu0 0
      %3553 = vmatpush1.bf16.msra.mxu0 0
      %3554 = vmatprep.subr.bf16.mxu0 0
      %3555 = vmatpush1.bf16.msra.mxu0 0
      %3556 = vmatprep.mubr.bf16.mxu0 0
      %3557 = vmatmul.mubr.bf16.gmra.mrb[0].mxu0 %v3455
      %v3558 = vpop.f32.mrb[0].mxu0
      %v3559 = vadd.f32 %v3498, %v3558
      %v3560 = vpop.f32.mrb[0].mxu0
      %v3561 = vadd.f32 %v3500, %v3560
      %v3562 = vpop.f32.mrb[0].mxu0
      %v3563 = vadd.f32 %v3502, %v3562
      %v3564 = vpop.f32.mrb[0].mxu0
      %v3565 = vadd.f32 %v3504, %v3564
      %3566 = vmatprep.mubr.bf16.mxu0 0
      %3567 = vmatmul.mubr.bf16.gmra.mrb[0].mxu0 %v3458
      %v3568 = vpop.f32.mrb[0].mxu0
      %v3569 = vadd.f32 %v3508, %v3568
      %v3570 = vpop.f32.mrb[0].mxu0
      %v3571 = vadd.f32 %v3510, %v3570
      %v3572 = vpop.f32.mrb[0].mxu0
      %v3573 = vadd.f32 %v3512, %v3572
      %v3574 = vpop.f32.mrb[0].mxu0
      %v3575 = vadd.f32 %v3514, %v3574
      %3576 = vmatprep.mubr.bf16.mxu0 0
      %3577 = vmatmul.mubr.bf16.gmra.mrb[0].mxu0 %v3461
      %v3578 = vpop.f32.mrb[0].mxu0
      %v3579 = vadd.f32 %v3518, %v3578
      %v3580 = vpop.f32.mrb[0].mxu0
      %v3581 = vadd.f32 %v3520, %v3580
      %v3582 = vpop.f32.mrb[0].mxu0
      %v3583 = vpop.f32.mrb[0].mxu0
      %3584 = vdwg.mxu0
      %3585 = vmatprep.subr.bf16.mxu0 0
      %3586 = vmatpush1.bf16.msra.mxu0 %v3348
      %3587 = vmatprep.subr.bf16.mxu0 0
      %3588 = vmatpush1.bf16.msra.mxu0 %v3351
      %3589 = vmatprep.subr.bf16.mxu0 0
      %3590 = vmatpush1.bf16.msra.mxu0 %v3354
      %3591 = vmatprep.subr.bf16.mxu0 0
      %3592 = vmatpush1.bf16.msra.mxu0 %v3357
      %3593 = vmatprep.subr.bf16.mxu0 0
      %3594 = vmatpush1.bf16.msra.mxu0 %v3360
      %3595 = vmatprep.subr.bf16.mxu0 0
      %3596 = vmatpush1.bf16.msra.mxu0 %v3363
      %3597 = vmatprep.subr.bf16.mxu0 0
      %3598 = vmatpush1.bf16.msra.mxu0 %v3366
      %3599 = vmatprep.subr.bf16.mxu0 0
      %3600 = vmatpush1.bf16.msra.mxu0 %v3369
      %3601 = vmatprep.subr.bf16.mxu0 0
      %3602 = vmatpush1.bf16.msra.mxu0 %v3372
      %3603 = vmatprep.subr.bf16.mxu0 0
      %3604 = vmatpush1.bf16.msra.mxu0 %v3375
      %3605 = vmatprep.subr.bf16.mxu0 0
      %3606 = vmatpush1.bf16.msra.mxu0 %v3378
      %3607 = vmatprep.subr.bf16.mxu0 0
      %3608 = vmatpush1.bf16.msra.mxu0 %v3381
      %3609 = vmatprep.subr.bf16.mxu0 0
      %3610 = vmatpush1.bf16.msra.mxu0 %v3384
      %3611 = vmatprep.subr.bf16.mxu0 0
      %3612 = vmatpush1.bf16.msra.mxu0 %v3387
      %3613 = vmatprep.subr.bf16.mxu0 0
      %3614 = vmatpush1.bf16.msra.mxu0 %v3390
      %3615 = vmatprep.subr.bf16.mxu0 0
      %3616 = vmatpush1.bf16.msra.mxu0 %v3393
      %3617 = vmatprep.mubr.bf16.mxu0 %v3120
      %3618 = vmatmul.mubr.bf16.gmra.mrb[0].mxu0 %v3108
      %v3619 = vpop.f32.mrb[0].mxu0
      %v3620 = vadd.f32 0.0, %v3619
      %v3621 = vpop.f32.mrb[0].mxu0
      %v3622 = vpop.f32.mrb[0].mxu0
      %v3623 = vadd.f32 0.0, %v3622
      %v3624 = vpop.f32.mrb[0].mxu0
      %3625 = vmatprep.mubr.bf16.mxu0 %v3150
      %3626 = vmatmul.mubr.bf16.gmra.mrb[0].mxu0 %v3141
      %v3627 = vpop.f32.mrb[0].mxu0
      %v3628 = vadd.f32 0.0, %v3627
      %v3629 = vpop.f32.mrb[0].mxu0
      %v3630 = vpop.f32.mrb[0].mxu0
      %v3631 = vadd.f32 0.0, %v3630
      %v3632 = vpop.f32.mrb[0].mxu0
      %3633 = vmatprep.mubr.bf16.mxu0 %v3149
      %3634 = vmatmul.mubr.bf16.gmra.mrb[0].mxu0 %v3140
      %v3635 = vpop.f32.mrb[0].mxu0
      %v3636 = vadd.f32 0.0, %v3635
      %v3637 = vpop.f32.mrb[0].mxu0
      %v3638 = vpop.f32.mrb[0].mxu0
      %v3639 = vpop.f32.mrb[0].mxu0
      %3640 = vdwg.mxu0
      %3641 = vmatprep.subr.bf16.mxu0 0
      %3642 = vmatpush1.bf16.msra.mxu0 %v3396
      %3643 = vmatprep.subr.bf16.mxu0 0
      %3644 = vmatpush1.bf16.msra.mxu0 %v3399
      %3645 = vmatprep.subr.bf16.mxu0 0
      %3646 = vmatpush1.bf16.msra.mxu0 0
      %3647 = vmatprep.subr.bf16.mxu0 0
      %3648 = vmatpush1.bf16.msra.mxu0 0
      %3649 = vmatprep.subr.bf16.mxu0 0
      %3650 = vmatpush1.bf16.msra.mxu0 0
      %3651 = vmatprep.subr.bf16.mxu0 0
      %3652 = vmatpush1.bf16.msra.mxu0 0
      %3653 = vmatprep.subr.bf16.mxu0 0
      %3654 = vmatpush1.bf16.msra.mxu0 0
      %3655 = vmatprep.subr.bf16.mxu0 0
      %3656 = vmatpush1.bf16.msra.mxu0 0
      %3657 = vmatprep.subr.bf16.mxu0 0
      %3658 = vmatpush1.bf16.msra.mxu0 0
      %3659 = vmatprep.subr.bf16.mxu0 0
      %3660 = vmatpush1.bf16.msra.mxu0 0
      %3661 = vmatprep.subr.bf16.mxu0 0
      %3662 = vmatpush1.bf16.msra.mxu0 0
      %3663 = vmatprep.subr.bf16.mxu0 0
      %3664 = vmatpush1.bf16.msra.mxu0 0
      %3665 = vmatprep.subr.bf16.mxu0 0
      %3666 = vmatpush1.bf16.msra.mxu0 0
      %3667 = vmatprep.subr.bf16.mxu0 0
      %3668 = vmatpush1.bf16.msra.mxu0 0
      %3669 = vmatprep.subr.bf16.mxu0 0
      %3670 = vmatpush1.bf16.msra.mxu0 0
      %3671 = vmatprep.subr.bf16.mxu0 0
      %3672 = vmatpush1.bf16.msra.mxu0 0
      %3673 = vmatprep.mubr.bf16.mxu0 0
      %3674 = vmatmul.mubr.bf16.gmra.mrb[0].mxu0 %v3455
      %v3675 = vpop.f32.mrb[0].mxu0
      %v3676 = vadd.f32 %v3620, %v3675
      %v3677 = vpop.f32.mrb[0].mxu0
      %v3678 = vpop.f32.mrb[0].mxu0
      %v3679 = vadd.f32 %v3623, %v3678
      %v3680 = vpop.f32.mrb[0].mxu0
      %3681 = vmatprep.mubr.bf16.mxu0 0
      %3682 = vmatmul.mubr.bf16.gmra.mrb[0].mxu0 %v3458
      %v3683 = vpop.f32.mrb[0].mxu0
      %v3684 = vadd.f32 %v3628, %v3683
      %v3685 = vpop.f32.mrb[0].mxu0
      %v3686 = vpop.f32.mrb[0].mxu0
      %v3687 = vadd.f32 %v3631, %v3686
      %v3688 = vpop.f32.mrb[0].mxu0
      %3689 = vmatprep.mubr.bf16.mxu0 0
      %3690 = vmatmul.mubr.bf16.gmra.mrb[0].mxu0 %v3461
      %v3691 = vpop.f32.mrb[0].mxu0
      %v3692 = vadd.f32 %v3636, %v3691
      %v3693 = vpop.f32.mrb[0].mxu0
      %v3694 = vpop.f32.mrb[0].mxu0
      %v3695 = vpop.f32.mrb[0].mxu0
      %3696 = vdwg.mxu0
      %v3697 = vadd.f32 %v2998, %v3559
      %v3698 = vadd.f32 %v2999, %v3561
      %v3699 = vadd.f32 %v3000, %v3676
      %v3700 = vadd.f32 %v3001, %v3563
      %v3701 = vadd.f32 %v3002, %v3565
      %v3702 = vadd.f32 %v3003, %v3679
      %v3703 = vadd.f32 %v3004, %v3569
      %v3704 = vadd.f32 %v3005, %v3571
      %v3705 = vadd.f32 %v3006, %v3684
      %v3706 = vadd.f32 %v3007, %v3573
      %v3707 = vadd.f32 %v3008, %v3575
      %v3708 = vadd.f32 %v3009, %v3687
      %v3709 = vadd.f32 %v3010, %v3579
      %v3710 = vadd.f32 %v3011, %v3581
      %v3711 = vadd.f32 %v3012, %v3692
      %v3712 = vld [vmem:[#allocation2] sm:$0xcc]
      %v3713 = vld [vmem:[#allocation2 + $0x8] sm:$0xc]
      %s3714 = scalar_lea.vmem %s2, 1728
      %v3715 = vld [vmem:[%s3714] sm:$0xff]
      %v3716 = vld [vmem:[%s3714 + $0x8] sm:$0xf]
      %v3717 = vld [vmem:[%s3714 + $0xc] sm:$0xff]
      %v3718 = vld [vmem:[%s3714 + $0x14] sm:$0xf]
      %v3719 = vld [vmem:[%s3714 + $0x18] sm:$0xff]
      %v3720 = vld [vmem:[%s3714 + $0x20] sm:$0xf]
      %v3721 = vld [vmem:[%s3714 + $0x24] sm:$0xff]
      %v3722 = vld [vmem:[%s3714 + $0x2c] sm:$0xf]
      %v3723 = vld [vmem:[%s3714 + $0x30] sm:$0xff]
      %v3724 = vld [vmem:[%s3714 + $0x38] sm:$0xf]
      %v3725 = vld [vmem:[%s3714 + $0x3c] sm:$0xff]
      %v3726 = vld [vmem:[%s3714 + $0x44] sm:$0xf]
      %v3727 = vld [vmem:[%s3714 + $0x48] sm:$0xff]
      %v3728 = vld [vmem:[%s3714 + $0x50] sm:$0xf]
      %v3729 = vld [vmem:[%s3714 + $0x54] sm:$0xff]
      %v3730 = vld [vmem:[%s3714 + $0x5c] sm:$0xf]
      %v3731 = vld [vmem:[%s3714 + $0x60] sm:$0xff]
      %v3732 = vld [vmem:[%s3714 + $0x68] sm:$0xf]
      %v3733 = vld [vmem:[%s3714 + $0x6c] sm:$0xff]
      %v3734 = vld [vmem:[%s3714 + $0x74] sm:$0xf]
      %v3735 = vld [vmem:[%s3714 + $0x78] sm:$0xff]
      %v3736 = vld [vmem:[%s3714 + $0x80] sm:$0xf]
      %v3737 = vld [vmem:[%s3714 + $0x84] sm:$0xff]
      %v3738 = vld [vmem:[%s3714 + $0x8c] sm:$0xf]
      %v3739 = vld [vmem:[%s3714 + $0x90] sm:$0xff]
      %v3740 = vld [vmem:[%s3714 + $0x98] sm:$0xf]
      %v3741 = vld [vmem:[%s3714 + $0x9c] sm:$0xff]
      %v3742 = vld [vmem:[%s3714 + $0xa4] sm:$0xf]
      %v3743 = vld [vmem:[%s3714 + $0xa8] sm:$0xff]
      %v3744 = vld [vmem:[%s3714 + $0xb0] sm:$0xf]
      %v3745 = vld [vmem:[%s3714 + $0xb4] sm:$0xff]
      %v3746 = vld [vmem:[%s3714 + $0xbc] sm:$0xf]
      %v3747 = vld [vmem:[%s3714 + $0xc0] sm:$0xff]
      %v3748 = vld [vmem:[%s3714 + $0xc8] sm:$0xf]
      %v3749 = vld [vmem:[%s3714 + $0xcc] sm:$0xff]
      %v3750 = vld [vmem:[%s3714 + $0xd4] sm:$0xf]
      %v3751 = vld [vmem:[%s3714 + $0xd8] sm:$0xff]
      %v3752 = vld [vmem:[%s3714 + $0xe0] sm:$0xf]
      %v3753 = vld [vmem:[%s3714 + $0xe4] sm:$0xff]
      %v3754 = vld [vmem:[%s3714 + $0xec] sm:$0xf]
      %v3755 = vld [vmem:[%s3714 + $0xf0] sm:$0xff]
      %v3756 = vld [vmem:[%s3714 + $0xf8] sm:$0xf]
      %v3757 = vld [vmem:[%s3714 + $0xfc] sm:$0xff]
      %v3758 = vld [vmem:[%s3714 + $0x104] sm:$0xf]
      %v3759 = vld [vmem:[%s3714 + $0x108] sm:$0xff]
      %v3760 = vld [vmem:[%s3714 + $0x110] sm:$0xf]
      %v3761 = vld [vmem:[%s3714 + $0x114] sm:$0xff]
      %v3762 = vld [vmem:[%s3714 + $0x11c] sm:$0xf]
      %v3763 = vld [vmem:[%s3714 + $0x120] sm:$0xff]
      %v3764 = vld [vmem:[%s3714 + $0x128] sm:$0xf]
      %v3765 = vld [vmem:[%s3714 + $0x12c] sm:$0xff]
      %v3766 = vld [vmem:[%s3714 + $0x134] sm:$0xf]
      %v3767 = vld [vmem:[%s3714 + $0x138] sm:$0xff]
      %v3768 = vld [vmem:[%s3714 + $0x140] sm:$0xf]
      %v3769 = vld [vmem:[%s3714 + $0x144] sm:$0xff]
      %v3770 = vld [vmem:[%s3714 + $0x14c] sm:$0xf]
      %v3771 = vld [vmem:[%s3714 + $0x150] sm:$0xff]
      %v3772 = vld [vmem:[%s3714 + $0x158] sm:$0xf]
      %v3773 = vld [vmem:[%s3714 + $0x15c] sm:$0xff]
      %v3774 = vld [vmem:[%s3714 + $0x164] sm:$0xf]
      %v3775 = vld [vmem:[%s3714 + $0x168] sm:$0xff]
      %v3776 = vld [vmem:[%s3714 + $0x170] sm:$0xf]
      %v3777 = vld [vmem:[%s3714 + $0x174] sm:$0xff]
      %v3778 = vld [vmem:[%s3714 + $0x17c] sm:$0xf]
      %v3779 = vld [vmem:[%s3714 + $0x180] sm:$0xff]
      %v3780 = vld [vmem:[%s3714 + $0x188] sm:$0xf]
      %v3781 = vld [vmem:[%s3714 + $0x18c] sm:$0xff]
      %v3782 = vld [vmem:[%s3714 + $0x194] sm:$0xf]
      %v3783 = vld [vmem:[%s3714 + $0x198] sm:$0xff]
      %v3784 = vld [vmem:[%s3714 + $0x1a0] sm:$0xf]
      %v3785 = vld [vmem:[%s3714 + $0x1a4] sm:$0xff]
      %v3786 = vld [vmem:[%s3714 + $0x1ac] sm:$0xf]
      %v3789 = vunpack.c.l.b16 %v3712
      %v3790 = vunpack.c.h.b16 %v3712
      %v3791 = vunpack.c.l.b16 %v3713
      %v3792 = vpack.c.b16 %v1190, %v3789
      %v3793 = vpack.c.b16 %v1191, %v3790
      %v3794 = vpack.c.b16 %v1192, %v3791
      %vm3795 = vcmask 1045504
      %v3796 = vrot.slane %v3792, 2
      %v3797 = vrot.slane %v1205, 2
      %v3798 = vsel %vm3795, %v3796, %v3797
      %v3799 = vrot.slane %v3793, 2
      %v3800 = vrot.slane %v1206, 2
      %v3801 = vsel %vm3795, %v3799, %v3800
      %v3802 = vrot.slane %v3794, 2
      %v3803 = vrot.slane %v1207, 2
      %v3804 = vsel %vm3795, %v3802, %v3803
      %v3805 = vrot.slane %v3093, 2
      %v3806 = vsel %vm3795, %v3797, %v3805
      %v3807 = vrot.slane %v3094, 2
      %v3808 = vsel %vm3795, %v3800, %v3807
      %v3809 = vrot.slane %v3095, 2
      %v3810 = vsel %vm3795, %v3803, %v3809
      %v3889 = vunpack.c.l.b16 %v3715
      %v3890 = vunpack.c.h.b16 %v3715
      %v3891 = vunpack.c.l.b16 %v3716
      %v3892 = vunpack.c.l.b16 %v3717
      %v3893 = vunpack.c.h.b16 %v3717
      %v3894 = vunpack.c.l.b16 %v3718
      %v3895 = vunpack.c.l.b16 %v3719
      %v3896 = vunpack.c.h.b16 %v3719
      %v3897 = vunpack.c.l.b16 %v3720
      %v3898 = vunpack.c.l.b16 %v3721
      %v3899 = vunpack.c.h.b16 %v3721
      %v3900 = vunpack.c.l.b16 %v3722
      %v3901 = vunpack.c.l.b16 %v3723
      %v3902 = vunpack.c.h.b16 %v3723
      %v3903 = vunpack.c.l.b16 %v3724
      %v3904 = vunpack.c.l.b16 %v3725
      %v3905 = vunpack.c.h.b16 %v3725
      %v3906 = vunpack.c.l.b16 %v3726
      %v3907 = vunpack.c.l.b16 %v3727
      %v3908 = vunpack.c.h.b16 %v3727
      %v3909 = vunpack.c.l.b16 %v3728
      %v3910 = vunpack.c.l.b16 %v3729
      %v3911 = vunpack.c.h.b16 %v3729
      %v3912 = vunpack.c.l.b16 %v3730
      %v3913 = vunpack.c.l.b16 %v3731
      %v3914 = vunpack.c.h.b16 %v3731
      %v3915 = vunpack.c.l.b16 %v3732
      %v3916 = vunpack.c.l.b16 %v3733
      %v3917 = vunpack.c.h.b16 %v3733
      %v3918 = vunpack.c.l.b16 %v3734
      %v3919 = vunpack.c.l.b16 %v3735
      %v3920 = vunpack.c.h.b16 %v3735
      %v3921 = vunpack.c.l.b16 %v3736
      %v3922 = vunpack.c.l.b16 %v3737
      %v3923 = vunpack.c.h.b16 %v3737
      %v3924 = vunpack.c.l.b16 %v3738
      %v3925 = vunpack.c.l.b16 %v3739
      %v3926 = vunpack.c.h.b16 %v3739
      %v3927 = vunpack.c.l.b16 %v3740
      %v3928 = vunpack.c.l.b16 %v3741
      %v3929 = vunpack.c.h.b16 %v3741
      %v3930 = vunpack.c.l.b16 %v3742
      %v3931 = vunpack.c.l.b16 %v3743
      %v3932 = vunpack.c.h.b16 %v3743
      %v3933 = vunpack.c.l.b16 %v3744
      %v3934 = vunpack.c.l.b16 %v3745
      %v3935 = vunpack.c.h.b16 %v3745
      %v3936 = vunpack.c.l.b16 %v3746
      %v3937 = vunpack.c.l.b16 %v3747
      %v3938 = vunpack.c.h.b16 %v3747
      %v3939 = vunpack.c.l.b16 %v3748
      %v3940 = vunpack.c.l.b16 %v3749
      %v3941 = vunpack.c.h.b16 %v3749
      %v3942 = vunpack.c.l.b16 %v3750
      %v3943 = vunpack.c.l.b16 %v3751
      %v3944 = vunpack.c.h.b16 %v3751
      %v3945 = vunpack.c.l.b16 %v3752
      %v3946 = vunpack.c.l.b16 %v3753
      %v3947 = vunpack.c.h.b16 %v3753
      %v3948 = vunpack.c.l.b16 %v3754
      %v3949 = vunpack.c.l.b16 %v3755
      %v3950 = vunpack.c.h.b16 %v3755
      %v3951 = vunpack.c.l.b16 %v3756
      %v3952 = vunpack.c.l.b16 %v3757
      %v3953 = vunpack.c.h.b16 %v3757
      %v3954 = vunpack.c.l.b16 %v3758
      %v3955 = vunpack.c.l.b16 %v3759
      %v3956 = vunpack.c.h.b16 %v3759
      %v3957 = vunpack.c.l.b16 %v3760
      %v3958 = vunpack.c.l.b16 %v3761
      %v3959 = vunpack.c.h.b16 %v3761
      %v3960 = vunpack.c.l.b16 %v3762
      %v3961 = vunpack.c.l.b16 %v3763
      %v3962 = vunpack.c.h.b16 %v3763
      %v3963 = vunpack.c.l.b16 %v3764
      %v3964 = vunpack.c.l.b16 %v3765
      %v3965 = vunpack.c.h.b16 %v3765
      %v3966 = vunpack.c.l.b16 %v3766
      %v3967 = vunpack.c.l.b16 %v3767
      %v3968 = vunpack.c.h.b16 %v3767
      %v3969 = vunpack.c.l.b16 %v3768
      %v3970 = vunpack.c.l.b16 %v3769
      %v3971 = vunpack.c.h.b16 %v3769
      %v3972 = vunpack.c.l.b16 %v3770
      %v3973 = vunpack.c.l.b16 %v3771
      %v3974 = vunpack.c.h.b16 %v3771
      %v3975 = vunpack.c.l.b16 %v3772
      %v3976 = vunpack.c.l.b16 %v3773
      %v3977 = vunpack.c.h.b16 %v3773
      %v3978 = vunpack.c.l.b16 %v3774
      %v3979 = vunpack.c.l.b16 %v3775
      %v3980 = vunpack.c.h.b16 %v3775
      %v3981 = vunpack.c.l.b16 %v3776
      %v3982 = vunpack.c.l.b16 %v3777
      %v3983 = vunpack.c.h.b16 %v3777
      %v3984 = vunpack.c.l.b16 %v3778
      %v3985 = vunpack.c.l.b16 %v3779
      %v3986 = vunpack.c.h.b16 %v3779
      %v3987 = vunpack.c.l.b16 %v3780
      %v3988 = vunpack.c.l.b16 %v3781
      %v3989 = vunpack.c.h.b16 %v3781
      %v3990 = vunpack.c.l.b16 %v3782
      %v3991 = vunpack.c.l.b16 %v3783
      %v3992 = vunpack.c.h.b16 %v3783
      %v3993 = vunpack.c.l.b16 %v3784
      %v3994 = vunpack.c.l.b16 %v3785
      %v3995 = vunpack.c.h.b16 %v3785
      %v3996 = vunpack.c.l.b16 %v3786
      %v3997 = vpack.c.b16 %v3892, %v3889
      %v3998 = vpack.c.b16 %v3893, %v3890
      %v3999 = vpack.c.b16 %v3894, %v3891
      %v4000 = vpack.c.b16 %v3898, %v3895
      %v4001 = vpack.c.b16 %v3899, %v3896
      %v4002 = vpack.c.b16 %v3900, %v3897
      %v4003 = vpack.c.b16 %v3904, %v3901
      %v4004 = vpack.c.b16 %v3905, %v3902
      %v4005 = vpack.c.b16 %v3906, %v3903
      %v4006 = vpack.c.b16 %v3910, %v3907
      %v4007 = vpack.c.b16 %v3911, %v3908
      %v4008 = vpack.c.b16 %v3912, %v3909
      %v4009 = vpack.c.b16 %v3916, %v3913
      %v4010 = vpack.c.b16 %v3917, %v3914
      %v4011 = vpack.c.b16 %v3918, %v3915
      %v4012 = vpack.c.b16 %v3922, %v3919
      %v4013 = vpack.c.b16 %v3923, %v3920
      %v4014 = vpack.c.b16 %v3924, %v3921
      %v4015 = vpack.c.b16 %v3928, %v3925
      %v4016 = vpack.c.b16 %v3929, %v3926
      %v4017 = vpack.c.b16 %v3930, %v3927
      %v4018 = vpack.c.b16 %v3934, %v3931
      %v4019 = vpack.c.b16 %v3935, %v3932
      %v4020 = vpack.c.b16 %v3936, %v3933
      %v4021 = vpack.c.b16 %v3940, %v3937
      %v4022 = vpack.c.b16 %v3941, %v3938
      %v4023 = vpack.c.b16 %v3942, %v3939
      %v4024 = vpack.c.b16 %v3946, %v3943
      %v4025 = vpack.c.b16 %v3947, %v3944
      %v4026 = vpack.c.b16 %v3948, %v3945
      %v4027 = vpack.c.b16 %v3952, %v3949
      %v4028 = vpack.c.b16 %v3953, %v3950
      %v4029 = vpack.c.b16 %v3954, %v3951
      %v4030 = vpack.c.b16 %v3958, %v3955
      %v4031 = vpack.c.b16 %v3959, %v3956
      %v4032 = vpack.c.b16 %v3960, %v3957
      %v4033 = vpack.c.b16 %v3964, %v3961
      %v4034 = vpack.c.b16 %v3965, %v3962
      %v4035 = vpack.c.b16 %v3966, %v3963
      %v4036 = vpack.c.b16 %v3970, %v3967
      %v4037 = vpack.c.b16 %v3971, %v3968
      %v4038 = vpack.c.b16 %v3972, %v3969
      %v4039 = vpack.c.b16 %v3976, %v3973
      %v4040 = vpack.c.b16 %v3977, %v3974
      %v4041 = vpack.c.b16 %v3978, %v3975
      %v4042 = vpack.c.b16 %v3982, %v3979
      %v4043 = vpack.c.b16 %v3983, %v3980
      %v4044 = vpack.c.b16 %v3984, %v3981
      %v4045 = vpack.c.b16 %v3988, %v3985
      %v4046 = vpack.c.b16 %v3989, %v3986
      %v4047 = vpack.c.b16 %v3990, %v3987
      %v4048 = vpack.c.b16 %v3994, %v3991
      %v4049 = vpack.c.b16 %v3995, %v3992
      %v4050 = vpack.c.b16 %v3996, %v3993
      %v4106 = vsel %vm1575, %v3804, 0
      %v4109 = vsel %vm1575, %v3810, 0
      %v4112 = vsel %vm1575, %v3809, 0
      %4114 = vmatprep.subr.bf16.mxu0 %v3998
      %4115 = vmatpush1.bf16.msra.mxu0 %v3997
      %4116 = vmatprep.subr.bf16.mxu0 %v4001
      %4117 = vmatpush1.bf16.msra.mxu0 %v4000
      %4118 = vmatprep.subr.bf16.mxu0 %v4004
      %4119 = vmatpush1.bf16.msra.mxu0 %v4003
      %4120 = vmatprep.subr.bf16.mxu0 %v4007
      %4121 = vmatpush1.bf16.msra.mxu0 %v4006
      %4122 = vmatprep.subr.bf16.mxu0 %v4010
      %4123 = vmatpush1.bf16.msra.mxu0 %v4009
      %4124 = vmatprep.subr.bf16.mxu0 %v4013
      %4125 = vmatpush1.bf16.msra.mxu0 %v4012
      %4126 = vmatprep.subr.bf16.mxu0 %v4016
      %4127 = vmatpush1.bf16.msra.mxu0 %v4015
      %4128 = vmatprep.subr.bf16.mxu0 %v4019
      %4129 = vmatpush1.bf16.msra.mxu0 %v4018
      %4130 = vmatprep.subr.bf16.mxu0 %v4022
      %4131 = vmatpush1.bf16.msra.mxu0 %v4021
      %4132 = vmatprep.subr.bf16.mxu0 %v4025
      %4133 = vmatpush1.bf16.msra.mxu0 %v4024
      %4134 = vmatprep.subr.bf16.mxu0 %v4028
      %4135 = vmatpush1.bf16.msra.mxu0 %v4027
      %4136 = vmatprep.subr.bf16.mxu0 %v4031
      %4137 = vmatpush1.bf16.msra.mxu0 %v4030
      %4138 = vmatprep.subr.bf16.mxu0 %v4034
      %4139 = vmatpush1.bf16.msra.mxu0 %v4033
      %4140 = vmatprep.subr.bf16.mxu0 %v4037
      %4141 = vmatpush1.bf16.msra.mxu0 %v4036
      %4142 = vmatprep.subr.bf16.mxu0 %v4040
      %4143 = vmatpush1.bf16.msra.mxu0 %v4039
      %4144 = vmatprep.subr.bf16.mxu0 %v4043
      %4145 = vmatpush1.bf16.msra.mxu0 %v4042
      %4146 = vmatprep.mubr.bf16.mxu0 %v3801
      %4147 = vmatmul.mubr.bf16.gmra.mrb[0].mxu0 %v3798
      %v4148 = vpop.f32.mrb[0].mxu0
      %v4149 = vadd.f32 0.0, %v4148
      %v4150 = vpop.f32.mrb[0].mxu0
      %v4151 = vadd.f32 0.0, %v4150
      %v4152 = vpop.f32.mrb[0].mxu0
      %v4153 = vadd.f32 0.0, %v4152
      %v4154 = vpop.f32.mrb[0].mxu0
      %v4155 = vadd.f32 0.0, %v4154
      %4156 = vmatprep.mubr.bf16.mxu0 %v3808
      %4157 = vmatmul.mubr.bf16.gmra.mrb[0].mxu0 %v3806
      %v4158 = vpop.f32.mrb[0].mxu0
      %v4159 = vadd.f32 0.0, %v4158
      %v4160 = vpop.f32.mrb[0].mxu0
      %v4161 = vadd.f32 0.0, %v4160
      %v4162 = vpop.f32.mrb[0].mxu0
      %v4163 = vadd.f32 0.0, %v4162
      %v4164 = vpop.f32.mrb[0].mxu0
      %v4165 = vadd.f32 0.0, %v4164
      %4166 = vmatprep.mubr.bf16.mxu0 %v3807
      %4167 = vmatmul.mubr.bf16.gmra.mrb[0].mxu0 %v3805
      %v4168 = vpop.f32.mrb[0].mxu0
      %v4169 = vadd.f32 0.0, %v4168
      %v4170 = vpop.f32.mrb[0].mxu0
      %v4171 = vadd.f32 0.0, %v4170
      %v4172 = vpop.f32.mrb[0].mxu0
      %v4173 = vpop.f32.mrb[0].mxu0
      %4174 = vdwg.mxu0
      %4175 = vmatprep.subr.bf16.mxu0 %v4046
      %4176 = vmatpush1.bf16.msra.mxu0 %v4045
      %4177 = vmatprep.subr.bf16.mxu0 %v4049
      %4178 = vmatpush1.bf16.msra.mxu0 %v4048
      %4179 = vmatprep.subr.bf16.mxu0 0
      %4180 = vmatpush1.bf16.msra.mxu0 0
      %4181 = vmatprep.subr.bf16.mxu0 0
      %4182 = vmatpush1.bf16.msra.mxu0 0
      %4183 = vmatprep.subr.bf16.mxu0 0
      %4184 = vmatpush1.bf16.msra.mxu0 0
      %4185 = vmatprep.subr.bf16.mxu0 0
      %4186 = vmatpush1.bf16.msra.mxu0 0
      %4187 = vmatprep.subr.bf16.mxu0 0
      %4188 = vmatpush1.bf16.msra.mxu0 0
      %4189 = vmatprep.subr.bf16.mxu0 0
      %4190 = vmatpush1.bf16.msra.mxu0 0
      %4191 = vmatprep.subr.bf16.mxu0 0
      %4192 = vmatpush1.bf16.msra.mxu0 0
      %4193 = vmatprep.subr.bf16.mxu0 0
      %4194 = vmatpush1.bf16.msra.mxu0 0
      %4195 = vmatprep.subr.bf16.mxu0 0
      %4196 = vmatpush1.bf16.msra.mxu0 0
      %4197 = vmatprep.subr.bf16.mxu0 0
      %4198 = vmatpush1.bf16.msra.mxu0 0
      %4199 = vmatprep.subr.bf16.mxu0 0
      %4200 = vmatpush1.bf16.msra.mxu0 0
      %4201 = vmatprep.subr.bf16.mxu0 0
      %4202 = vmatpush1.bf16.msra.mxu0 0
      %4203 = vmatprep.subr.bf16.mxu0 0
      %4204 = vmatpush1.bf16.msra.mxu0 0
      %4205 = vmatprep.subr.bf16.mxu0 0
      %4206 = vmatpush1.bf16.msra.mxu0 0
      %4207 = vmatprep.mubr.bf16.mxu0 0
      %4208 = vmatmul.mubr.bf16.gmra.mrb[0].mxu0 %v4106
      %v4209 = vpop.f32.mrb[0].mxu0
      %v4210 = vadd.f32 %v4149, %v4209
      %v4211 = vpop.f32.mrb[0].mxu0
      %v4212 = vadd.f32 %v4151, %v4211
      %v4213 = vpop.f32.mrb[0].mxu0
      %v4214 = vadd.f32 %v4153, %v4213
      %v4215 = vpop.f32.mrb[0].mxu0
      %v4216 = vadd.f32 %v4155, %v4215
      %4217 = vmatprep.mubr.bf16.mxu0 0
      %4218 = vmatmul.mubr.bf16.gmra.mrb[0].mxu0 %v4109
      %v4219 = vpop.f32.mrb[0].mxu0
      %v4220 = vadd.f32 %v4159, %v4219
      %v4221 = vpop.f32.mrb[0].mxu0
      %v4222 = vadd.f32 %v4161, %v4221
      %v4223 = vpop.f32.mrb[0].mxu0
      %v4224 = vadd.f32 %v4163, %v4223
      %v4225 = vpop.f32.mrb[0].mxu0
      %v4226 = vadd.f32 %v4165, %v4225
      %4227 = vmatprep.mubr.bf16.mxu0 0
      %4228 = vmatmul.mubr.bf16.gmra.mrb[0].mxu0 %v4112
      %v4229 = vpop.f32.mrb[0].mxu0
      %v4230 = vadd.f32 %v4169, %v4229
      %v4231 = vpop.f32.mrb[0].mxu0
      %v4232 = vadd.f32 %v4171, %v4231
      %v4233 = vpop.f32.mrb[0].mxu0
      %v4234 = vpop.f32.mrb[0].mxu0
      %4235 = vdwg.mxu0
      %4236 = vmatprep.subr.bf16.mxu0 0
      %4237 = vmatpush1.bf16.msra.mxu0 %v3999
      %4238 = vmatprep.subr.bf16.mxu0 0
      %4239 = vmatpush1.bf16.msra.mxu0 %v4002
      %4240 = vmatprep.subr.bf16.mxu0 0
      %4241 = vmatpush1.bf16.msra.mxu0 %v4005
      %4242 = vmatprep.subr.bf16.mxu0 0
      %4243 = vmatpush1.bf16.msra.mxu0 %v4008
      %4244 = vmatprep.subr.bf16.mxu0 0
      %4245 = vmatpush1.bf16.msra.mxu0 %v4011
      %4246 = vmatprep.subr.bf16.mxu0 0
      %4247 = vmatpush1.bf16.msra.mxu0 %v4014
      %4248 = vmatprep.subr.bf16.mxu0 0
      %4249 = vmatpush1.bf16.msra.mxu0 %v4017
      %4250 = vmatprep.subr.bf16.mxu0 0
      %4251 = vmatpush1.bf16.msra.mxu0 %v4020
      %4252 = vmatprep.subr.bf16.mxu0 0
      %4253 = vmatpush1.bf16.msra.mxu0 %v4023
      %4254 = vmatprep.subr.bf16.mxu0 0
      %4255 = vmatpush1.bf16.msra.mxu0 %v4026
      %4256 = vmatprep.subr.bf16.mxu0 0
      %4257 = vmatpush1.bf16.msra.mxu0 %v4029
      %4258 = vmatprep.subr.bf16.mxu0 0
      %4259 = vmatpush1.bf16.msra.mxu0 %v4032
      %4260 = vmatprep.subr.bf16.mxu0 0
      %4261 = vmatpush1.bf16.msra.mxu0 %v4035
      %4262 = vmatprep.subr.bf16.mxu0 0
      %4263 = vmatpush1.bf16.msra.mxu0 %v4038
      %4264 = vmatprep.subr.bf16.mxu0 0
      %4265 = vmatpush1.bf16.msra.mxu0 %v4041
      %4266 = vmatprep.subr.bf16.mxu0 0
      %4267 = vmatpush1.bf16.msra.mxu0 %v4044
      %4268 = vmatprep.mubr.bf16.mxu0 %v3801
      %4269 = vmatmul.mubr.bf16.gmra.mrb[0].mxu0 %v3798
      %v4270 = vpop.f32.mrb[0].mxu0
      %v4271 = vadd.f32 0.0, %v4270
      %v4272 = vpop.f32.mrb[0].mxu0
      %v4273 = vpop.f32.mrb[0].mxu0
      %v4274 = vadd.f32 0.0, %v4273
      %v4275 = vpop.f32.mrb[0].mxu0
      %4276 = vmatprep.mubr.bf16.mxu0 %v3808
      %4277 = vmatmul.mubr.bf16.gmra.mrb[0].mxu0 %v3806
      %v4278 = vpop.f32.mrb[0].mxu0
      %v4279 = vadd.f32 0.0, %v4278
      %v4280 = vpop.f32.mrb[0].mxu0
      %v4281 = vpop.f32.mrb[0].mxu0
      %v4282 = vadd.f32 0.0, %v4281
      %v4283 = vpop.f32.mrb[0].mxu0
      %4284 = vmatprep.mubr.bf16.mxu0 %v3807
      %4285 = vmatmul.mubr.bf16.gmra.mrb[0].mxu0 %v3805
      %v4286 = vpop.f32.mrb[0].mxu0
      %v4287 = vadd.f32 0.0, %v4286
      %v4288 = vpop.f32.mrb[0].mxu0
      %v4289 = vpop.f32.mrb[0].mxu0
      %v4290 = vpop.f32.mrb[0].mxu0
      %4291 = vdwg.mxu0
      %4292 = vmatprep.subr.bf16.mxu0 0
      %4293 = vmatpush1.bf16.msra.mxu0 %v4047
      %4294 = vmatprep.subr.bf16.mxu0 0
      %4295 = vmatpush1.bf16.msra.mxu0 %v4050
      %4296 = vmatprep.subr.bf16.mxu0 0
      %4297 = vmatpush1.bf16.msra.mxu0 0
      %4298 = vmatprep.subr.bf16.mxu0 0
      %4299 = vmatpush1.bf16.msra.mxu0 0
      %4300 = vmatprep.subr.bf16.mxu0 0
      %4301 = vmatpush1.bf16.msra.mxu0 0
      %4302 = vmatprep.subr.bf16.mxu0 0
      %4303 = vmatpush1.bf16.msra.mxu0 0
      %4304 = vmatprep.subr.bf16.mxu0 0
      %4305 = vmatpush1.bf16.msra.mxu0 0
      %4306 = vmatprep.subr.bf16.mxu0 0
      %4307 = vmatpush1.bf16.msra.mxu0 0
      %4308 = vmatprep.subr.bf16.mxu0 0
      %4309 = vmatpush1.bf16.msra.mxu0 0
      %4310 = vmatprep.subr.bf16.mxu0 0
      %4311 = vmatpush1.bf16.msra.mxu0 0
      %4312 = vmatprep.subr.bf16.mxu0 0
      %4313 = vmatpush1.bf16.msra.mxu0 0
      %4314 = vmatprep.subr.bf16.mxu0 0
      %4315 = vmatpush1.bf16.msra.mxu0 0
      %4316 = vmatprep.subr.bf16.mxu0 0
      %4317 = vmatpush1.bf16.msra.mxu0 0
      %4318 = vmatprep.subr.bf16.mxu0 0
      %4319 = vmatpush1.bf16.msra.mxu0 0
      %4320 = vmatprep.subr.bf16.mxu0 0
      %4321 = vmatpush1.bf16.msra.mxu0 0
      %4322 = vmatprep.subr.bf16.mxu0 0
      %4323 = vmatpush1.bf16.msra.mxu0 0
      %4324 = vmatprep.mubr.bf16.mxu0 0
      %4325 = vmatmul.mubr.bf16.gmra.mrb[0].mxu0 %v4106
      %v4326 = vpop.f32.mrb[0].mxu0
      %v4327 = vadd.f32 %v4271, %v4326
      %v4328 = vpop.f32.mrb[0].mxu0
      %v4329 = vpop.f32.mrb[0].mxu0
      %v4330 = vadd.f32 %v4274, %v4329
      %v4331 = vpop.f32.mrb[0].mxu0
      %4332 = vmatprep.mubr.bf16.mxu0 0
      %4333 = vmatmul.mubr.bf16.gmra.mrb[0].mxu0 %v4109
      %v4334 = vpop.f32.mrb[0].mxu0
      %v4335 = vadd.f32 %v4279, %v4334
      %v4336 = vpop.f32.mrb[0].mxu0
      %v4337 = vpop.f32.mrb[0].mxu0
      %v4338 = vadd.f32 %v4282, %v4337
      %v4339 = vpop.f32.mrb[0].mxu0
      %4340 = vmatprep.mubr.bf16.mxu0 0
      %4341 = vmatmul.mubr.bf16.gmra.mrb[0].mxu0 %v4112
      %v4342 = vpop.f32.mrb[0].mxu0
      %v4343 = vadd.f32 %v4287, %v4342
      %v4344 = vpop.f32.mrb[0].mxu0
      %v4345 = vpop.f32.mrb[0].mxu0
      %v4346 = vpop.f32.mrb[0].mxu0
      %4347 = vdwg.mxu0
      %v4348 = vadd.f32 %v3697, %v4210
      %v4349 = vadd.f32 %v3698, %v4212
      %v4350 = vadd.f32 %v3699, %v4327
      %v4351 = vadd.f32 %v3700, %v4214
      %v4352 = vadd.f32 %v3701, %v4216
      %v4353 = vadd.f32 %v3702, %v4330
      %v4354 = vadd.f32 %v3703, %v4220
      %v4355 = vadd.f32 %v3704, %v4222
      %v4356 = vadd.f32 %v3705, %v4335
      %v4357 = vadd.f32 %v3706, %v4224
      %v4358 = vadd.f32 %v3707, %v4226
      %v4359 = vadd.f32 %v3708, %v4338
      %v4360 = vadd.f32 %v3709, %v4230
      %v4361 = vadd.f32 %v3710, %v4232
      %v4362 = vadd.f32 %v3711, %v4343
      %v4363 = vmax.f32 %v4348, 0.0
      %v4364 = vmax.f32 %v4349, 0.0
      %v4365 = vmax.f32 %v4350, 0.0
      %v4366 = vmax.f32 %v4351, 0.0
      %v4367 = vmax.f32 %v4352, 0.0
      %v4368 = vmax.f32 %v4353, 0.0
      %v4369 = vmax.f32 %v4354, 0.0
      %v4370 = vmax.f32 %v4355, 0.0
      %v4371 = vmax.f32 %v4356, 0.0
      %v4372 = vmax.f32 %v4357, 0.0
      %v4373 = vmax.f32 %v4358, 0.0
      %v4374 = vmax.f32 %v4359, 0.0
      %v4375 = vmax.f32 %v4360, 0.0
      %v4376 = vmax.f32 %v4361, 0.0
      %v4377 = vmax.f32 %v4362, 0.0
      %4378 = vst [vmem:[#allocation3] sm:$0xff] %v4363
      %4379 = vst [vmem:[#allocation3 + $0x8] sm:$0xff] %v4364
      %vm4380 = vcmask 523264
      %4381 = vst.msk [vmem:[#allocation3 + $0x10] sm:$0xff] %vm4380, %v4365
      %4382 = vst [vmem:[#allocation3 + $0x18] sm:$0xff] %v4366
      %4383 = vst [vmem:[#allocation3 + $0x20] sm:$0xff] %v4367
      %4384 = vst.msk [vmem:[#allocation3 + $0x28] sm:$0xff] %vm4380, %v4368
      %4385 = vst [vmem:[#allocation3 + $0x30] sm:$0xff] %v4369
      %4386 = vst [vmem:[#allocation3 + $0x38] sm:$0xff] %v4370
      %4387 = vst.msk [vmem:[#allocation3 + $0x40] sm:$0xff] %vm4380, %v4371
      %4388 = vst [vmem:[#allocation3 + $0x48] sm:$0xff] %v4372
      %4389 = vst [vmem:[#allocation3 + $0x50] sm:$0xff] %v4373
      %4390 = vst.msk [vmem:[#allocation3 + $0x58] sm:$0xff] %vm4380, %v4374
      %4391 = vst [vmem:[#allocation3 + $0x60] sm:$0xf] %v4375
      %4392 = vst [vmem:[#allocation3 + $0x68] sm:$0xf] %v4376
      %vm4393 = vcmask 519168
      %4394 = vst.msk [vmem:[#allocation3 + $0x70] sm:$0xf] %vm4393, %v4377
      %v4395 = vld [vmem:[#allocation3] sm:$0x1f]
      %v4396 = vld [vmem:[#allocation3 + $0x8] sm:$0x1f]
      %v4397 = vld [vmem:[#allocation3 + $0x10] sm:$0x1f]
      %vm4398 = vcmask 1044480
      %v4399 = vsel %vm4398, %v4395, -inf
      %v4400 = vrot.slane %v4399, 4
      %v4401 = vmax.f32 %v4399, %v4400
      %v4402 = vrot.slane %v4401, 2
      %v4403 = vmax.f32 %v4401, %v4402
      %v4404 = vrot.slane %v4403, 1
      %v4405 = vmax.f32 %v4403, %v4404
      %v4406 = vsel %vm4398, %v4396, -inf
      %v4407 = vrot.slane %v4406, 4
      %v4408 = vmax.f32 %v4406, %v4407
      %v4409 = vrot.slane %v4408, 2
      %v4410 = vmax.f32 %v4408, %v4409
      %v4411 = vrot.slane %v4410, 1
      %v4412 = vmax.f32 %v4410, %v4411
      %vm4413 = vcmask 520192
      %v4414 = vsel %vm4413, %v4397, -inf
      %v4415 = vrot.slane %v4414, 4
      %v4416 = vmax.f32 %v4414, %v4415
      %v4417 = vrot.slane %v4416, 2
      %v4418 = vmax.f32 %v4416, %v4417
      %v4419 = vrot.slane %v4418, 1
      %v4420 = vmax.f32 %v4418, %v4419
      %4422 = vrot.lane.b32.xlu0 %v4405, 64
      %v4423 = vpop.permute.xlu0 %4422
      %v4425 = vmax.f32 %v4405, %v4423
      %v4426 = vmax.f32 %v4425, %v4412
      %4428 = vrot.lane.b32.xlu0 %v4412, 64
      %v4429 = vpop.permute.xlu0 %4428
      %v4431 = vmax.f32 %v4426, %v4429
      %v4432 = vmax.f32 %v4431, %v4420
      %vm4433 = vcmask 516096
      %4434 = vst.msk [vmem:[%s168] sm:$0x1] %vm4433, %v4432
      %v4435 = vld [vmem:[#allocation3 + $0x18] sm:$0x3e]
      %v4436 = vld [vmem:[#allocation3 + $0x20] sm:$0x3e]
      %v4437 = vld [vmem:[#allocation3 + $0x28] sm:$0x3e]
      %vm4438 = vcmask 1045505
      %v4439 = vsel %vm4438, %v4435, -inf
      %v4440 = vrot.slane %v4439, 4
      %v4441 = vmax.f32 %v4439, %v4440
      %v4442 = vrot.slane %v4441, 2
      %v4443 = vmax.f32 %v4441, %v4442
      %v4444 = vrot.slane %v4443, 1
      %v4445 = vmax.f32 %v4443, %v4444
      %v4446 = vsel %vm4438, %v4436, -inf
      %v4447 = vrot.slane %v4446, 4
      %v4448 = vmax.f32 %v4446, %v4447
      %v4449 = vrot.slane %v4448, 2
      %v4450 = vmax.f32 %v4448, %v4449
      %v4451 = vrot.slane %v4450, 1
      %v4452 = vmax.f32 %v4450, %v4451
      %vm4453 = vcmask 521217
      %v4454 = vsel %vm4453, %v4437, -inf
      %v4455 = vrot.slane %v4454, 4
      %v4456 = vmax.f32 %v4454, %v4455
      %v4457 = vrot.slane %v4456, 2
      %v4458 = vmax.f32 %v4456, %v4457
      %v4459 = vrot.slane %v4458, 1
      %v4460 = vmax.f32 %v4458, %v4459
      %4462 = vrot.lane.b32.xlu0 %v4445, 64
      %v4463 = vpop.permute.xlu0 %4462
      %v4465 = vmax.f32 %v4445, %v4463
      %v4466 = vmax.f32 %v4465, %v4452
      %4468 = vrot.lane.b32.xlu0 %v4452, 64
      %v4469 = vpop.permute.xlu0 %4468
      %v4471 = vmax.f32 %v4466, %v4469
      %v4472 = vmax.f32 %v4471, %v4460
      %4473 = vst.msk [vmem:[%s168 + $0x1] sm:$0x1] %vm4433, %v4472
      %v4474 = vld [vmem:[#allocation3 + $0x30] sm:$0x7c]
      %v4475 = vld [vmem:[#allocation3 + $0x38] sm:$0x7c]
      %v4476 = vld [vmem:[#allocation3 + $0x40] sm:$0x7c]
      %vm4477 = vcmask 1046530
      %v4478 = vsel %vm4477, %v4474, -inf
      %v4479 = vrot.slane %v4478, 4
      %v4480 = vmax.f32 %v4478, %v4479
      %v4481 = vrot.slane %v4480, 2
      %v4482 = vmax.f32 %v4480, %v4481
      %v4483 = vrot.slane %v4482, 1
      %v4484 = vmax.f32 %v4482, %v4483
      %v4485 = vsel %vm4477, %v4475, -inf
      %v4486 = vrot.slane %v4485, 4
      %v4487 = vmax.f32 %v4485, %v4486
      %v4488 = vrot.slane %v4487, 2
      %v4489 = vmax.f32 %v4487, %v4488
      %v4490 = vrot.slane %v4489, 1
      %v4491 = vmax.f32 %v4489, %v4490
      %vm4492 = vcmask 522242
      %v4493 = vsel %vm4492, %v4476, -inf
      %v4494 = vrot.slane %v4493, 4
      %v4495 = vmax.f32 %v4493, %v4494
      %v4496 = vrot.slane %v4495, 2
      %v4497 = vmax.f32 %v4495, %v4496
      %v4498 = vrot.slane %v4497, 1
      %v4499 = vmax.f32 %v4497, %v4498
      %4501 = vrot.lane.b32.xlu0 %v4484, 64
      %v4502 = vpop.permute.xlu0 %4501
      %v4504 = vmax.f32 %v4484, %v4502
      %v4505 = vmax.f32 %v4504, %v4491
      %4507 = vrot.lane.b32.xlu0 %v4491, 64
      %v4508 = vpop.permute.xlu0 %4507
      %v4510 = vmax.f32 %v4505, %v4508
      %v4511 = vmax.f32 %v4510, %v4499
      %4512 = vst.msk [vmem:[%s168 + $0x2] sm:$0x1] %vm4433, %v4511
      %v4513 = vld [vmem:[#allocation3 + $0x48] sm:$0xf8]
      %v4514 = vld [vmem:[#allocation3 + $0x50] sm:$0xf8]
      %v4515 = vld [vmem:[#allocation3 + $0x58] sm:$0xf8]
      %vm4516 = vcmask 1047555
      %v4517 = vsel %vm4516, %v4513, -inf
      %v4518 = vrot.slane %v4517, 4
      %v4519 = vmax.f32 %v4517, %v4518
      %v4520 = vrot.slane %v4519, 2
      %v4521 = vmax.f32 %v4519, %v4520
      %v4522 = vrot.slane %v4521, 1
      %v4523 = vmax.f32 %v4521, %v4522
      %v4524 = vsel %vm4516, %v4514, -inf
      %v4525 = vrot.slane %v4524, 4
      %v4526 = vmax.f32 %v4524, %v4525
      %v4527 = vrot.slane %v4526, 2
      %v4528 = vmax.f32 %v4526, %v4527
      %v4529 = vrot.slane %v4528, 1
      %v4530 = vmax.f32 %v4528, %v4529
      %vm4531 = vcmask 523267
      %v4532 = vsel %vm4531, %v4515, -inf
      %v4533 = vrot.slane %v4532, 4
      %v4534 = vmax.f32 %v4532, %v4533
      %v4535 = vrot.slane %v4534, 2
      %v4536 = vmax.f32 %v4534, %v4535
      %v4537 = vrot.slane %v4536, 1
      %v4538 = vmax.f32 %v4536, %v4537
      %4540 = vrot.lane.b32.xlu0 %v4523, 64
      %v4541 = vpop.permute.xlu0 %4540
      %v4543 = vmax.f32 %v4523, %v4541
      %v4544 = vmax.f32 %v4543, %v4530
      %4546 = vrot.lane.b32.xlu0 %v4530, 64
      %v4547 = vpop.permute.xlu0 %4546
      %v4549 = vmax.f32 %v4544, %v4547
      %v4550 = vmax.f32 %v4549, %v4538
      %4551 = vst.msk [vmem:[%s168 + $0x3] sm:$0x1] %vm4433, %v4550
      %p4552 = scmp.lt.s32.totalorder %s14, 1
      %s4553 = scalar_select %p4552, %s14, 1
      %s4554 = smul.addr %s4553, 4
      %s4555 = scalar_lea.vmem %s3, %s4554
      // Predicated region
      $region33: #{basis_traffic_encoder_forward.1} parent=31 // pred_check
        %p4556 = pneg %p100
      $region34: #{basis_traffic_encoder_forward.1} parent=31 // pred_check_branch
        %4558 = sbr.rel (%p4556) target = $region36
      $region35: #{basis_traffic_encoder_forward.1} parent=31 // pred_region
        _
      $region36: #{basis_traffic_encoder_forward.1} parent=31 // pred_fallthru
        _
    $region32: #{basis_traffic_encoder_forward.1} parent=5 // pred_fallthru
      _
    %p4559 = scmp.le.s32.totalorder 2, %s9
    // Predicated region
    $region37: #{basis_traffic_encoder_forward.1} parent=5 // pred_check
      %p4560 = pneg %p4559
    $region38: #{basis_traffic_encoder_forward.1} parent=5 // pred_check_branch
      %4562 = sbr.rel (%p4560) target = $region40
    $region39: #{basis_traffic_encoder_forward.1} parent=5 // pred_region
      %s4563 = ssub.s32 %s9, 2
      // Predicated region
      $region41: #{basis_traffic_encoder_forward.1} parent=39 // pred_check
        %p4564 = pneg %p106
      $region42: #{basis_traffic_encoder_forward.1} parent=39 // pred_check_branch
        %4566 = sbr.rel (%p4564) target = $region44
      $region43: #{basis_traffic_encoder_forward.1} parent=39 // pred_region
        %p4567 = scmp.lt.s32.totalorder %s15, 1
        %s4568 = scalar_select %p4567, %s15, 1
        %s4569 = smul.addr %s4568, 4
        %s4570 = scalar_lea.vmem %s3, %s4569
      $region44: #{basis_traffic_encoder_forward.1} parent=39 // pred_fallthru
        _
    $region40: #{basis_traffic_encoder_forward.1} parent=5 // pred_fallthru
      _
  $region6: #{basis_traffic_encoder_forward.1} parent=0 // loop_footer
    %s13 = sadd.s32 1, %s9
  $region7: #{basis_traffic_encoder_forward.1} parent=0 // loop_footer_branch
    %8 = sbr.rel target = $region3
  $region8: #{basis_traffic_encoder_forward.1} parent=0 // loop_exit
    _

</llo_original>
